<compile_context>
chip_gen: v5e
topology: v5e:2x2
jax: 0.10.0
libtpu: 0.0.40
codegen_flags: <defaults>
</compile_context>

<pallas_src>
import jax
import jax.numpy as jnp
from jax.experimental import pallas as pl
from jax.experimental.pallas import tpu as pltpu


H_LOGICAL = 50          # gru_hidden_size from the PyTorch module
H_PAD = 64              # lane-friendly padded hidden size (pad lanes are exactly zero)
C_LOGICAL = 100         # context_vec_size
C_PAD = 128             # padded context size
VMEM_LIMIT_BYTES = 32 * 1024 * 1024

_WEIGHT_KEYS = ("wih_f", "wih_b", "bih_f", "bih_b",
                "whh_f", "whh_b", "bhh_f", "bhh_b",
                "wfc", "bfc", "ctx")
_NUM_W = len(_WEIGHT_KEYS)


# ----------------------------------------------------------------------------
# AttentionNet core: bidirectional GRU (1 layer) + attention pooling on one tile.
# ----------------------------------------------------------------------------
def _attention_core(x_ref, w_refs, scratch_refs):
    """Processes one (T, tile_n, D) block; returns pooled (tile_n, 2*H_PAD) f32
    vectors laid out as [h_fwd padded to 64 | h_bwd padded to 64]."""
    (wih_f_ref, wih_b_ref, bih_f_ref, bih_b_ref,
     whh_f_ref, whh_b_ref, bhh_f_ref, bhh_b_ref,
     wfc_ref, bfc_ref, ctx_ref) = w_refs
    gi_f_ref, gi_b_ref, hf_ref, hb_ref = scratch_refs

    T, N, D = x_ref.shape
    HP = hf_ref.shape[-1]

    # ---- packed input projections: one bf16 MXU matmul per direction ----------
    x2 = x_ref[...].reshape(T * N, D).astype(jnp.bfloat16)
    gi_f_ref[...] = (jnp.dot(x2, wih_f_ref[...], preferred_element_type=jnp.float32)
                     + bih_f_ref[...]).reshape(T, N, 3 * HP)
    gi_b_ref[...] = (jnp.dot(x2, wih_b_ref[...], preferred_element_type=jnp.float32)
                     + bih_b_ref[...]).reshape(T, N, 3 * HP)

    whh_f = whh_f_ref[...]   # hoisted out of the recurrence loops
    bhh_f = bhh_f_ref[...]
    whh_b = whh_b_ref[...]
    bhh_b = bhh_b_ref[...]

    def gru_step(h, gi, whh, bhh):
        # PyTorch GRU cell with gates packed [r | z | n] along the lane dim:
        #   r = sig(Wir x + bir + Whr h + bhr),  z = sig(Wiz x + biz + Whz h + bhz)
        #   n = tanh(Win x + bin + r * (Whn h + bhn)),  h' = (1 - z) * n + z * h
        gh = jnp.dot(h, whh, preferred_element_type=jnp.float32) + bhh   # (N, 3*HP)
        rz = jax.nn.sigmoid(gi[:, :2 * HP] + gh[:, :2 * HP])
        r = rz[:, :HP]
        z = rz[:, HP:]
        n = jnp.tanh(gi[:, 2 * HP:] + r * gh[:, 2 * HP:])
        return (1.0 - z) * n + z * h

    # ---- recurrences: fully unrolled (T is a compile-time constant) -----------
    h = jnp.zeros((N, HP), dtype=jnp.float32)
    for t in range(T):
        h = gru_step(h, gi_f_ref[t], whh_f, bhh_f)
        hf_ref[t] = h

    h = jnp.zeros((N, HP), dtype=jnp.float32)
    for t in range(T - 1, -1, -1):
        h = gru_step(h, gi_b_ref[t], whh_b, bhh_b)
        hb_ref[t] = h

    # ---- attention pooling -----------------------------------------------------
    hcat = jnp.concatenate([hf_ref[...], hb_ref[...]], axis=-1)       # (T, N, 2*HP)
    u = jnp.tanh(jnp.dot(hcat.reshape(T * N, 2 * HP), wfc_ref[...],
                         preferred_element_type=jnp.float32) + bfc_ref[...])
    # scores via VPU multiply + lane reduction (no 1-wide MXU result).
    scores = jnp.sum(u * ctx_ref[...], axis=-1, keepdims=True).reshape(T, N, 1)
    m = jnp.max(scores, axis=0, keepdims=True)                        # softmax over T
    e = jnp.exp(scores - m)
    alpha = e / jnp.sum(e, axis=0, keepdims=True)                     # (T, N, 1)
    return jnp.sum(hcat * alpha, axis=0)                              # (N, 2*HP)


def _attention_kernel(x_ref, *refs):
    w_refs = refs[:_NUM_W]
    out_ref = refs[_NUM_W]
    scratch = refs[_NUM_W + 1:]
    out_ref[...] = _attention_core(x_ref, w_refs, scratch)


def _attention_head_kernel(x_ref, *refs):
    # Sentence-level attention with the Linear + LogSoftmax output head fused in.
    w_refs = refs[:_NUM_W]
    w_out_ref, b_out_ref, out_ref = refs[_NUM_W], refs[_NUM_W + 1], refs[_NUM_W + 2]
    scratch = refs[_NUM_W + 3:]
    pooled = _attention_core(x_ref, w_refs, scratch)                  # (N, 2*HP)
    logits = jnp.dot(pooled, w_out_ref[...],
                     preferred_element_type=jnp.float32) + b_out_ref[...]
    m = jnp.max(logits, axis=-1, keepdims=True)
    s = logits - m
    out_ref[...] = s - jnp.log(jnp.sum(jnp.exp(s), axis=-1, keepdims=True))


# ----------------------------------------------------------------------------
# Wrapper: batch-tiled pallas_call over the time-major inputs.
# ----------------------------------------------------------------------------
def attention_net(x_tnd, p, *, tile_n=16, head=None):
    """x_tnd: (T, N, D) time-major.  Returns pooled (N, 2*H_PAD), or — when
    head=(w_out, b_out) is given — LogSoftmax(Linear(pooled)) of shape (N, num_cls)."""
    T, N, D = x_tnd.shape
    HP = p["whh_f"].shape[0]
    if N % tile_n != 0:
        tile_n = N                                   # small / odd batches: one tile
    grid = (N // tile_n,)

    weights = [p[k] for k in _WEIGHT_KEYS]
    vmem = pltpu.MemorySpace.VMEM
    x_spec = pl.BlockSpec((T, tile_n, D), lambda i: (0, i, 0))
    w_specs = [pl.BlockSpec(memory_space=vmem)] * _NUM_W
    scratch = [pltpu.VMEM((T, tile_n, 3 * HP), jnp.float32),   # packed fwd input gates
               pltpu.VMEM((T, tile_n, 3 * HP), jnp.float32),   # packed bwd input gates
               pltpu.VMEM((T, tile_n, HP), jnp.float32),       # h_fwd per step
               pltpu.VMEM((T, tile_n, HP), jnp.float32)]       # h_bwd per step
    cparams = pltpu.CompilerParams(dimension_semantics=("parallel",),
                                   vmem_limit_bytes=VMEM_LIMIT_BYTES)

    if head is None:
        return pl.pallas_call(
            _attention_kernel,
            grid=grid,
            out_shape=jax.ShapeDtypeStruct((N, 2 * HP), jnp.float32),
            in_specs=[x_spec] + w_specs,
            out_specs=pl.BlockSpec((tile_n, 2 * HP), lambda i: (i, 0)),
            scratch_shapes=scratch,
            compiler_params=cparams,
        )(x_tnd, *weights)

    w_out, b_out = head
    num_cls = w_out.shape[-1]
    return pl.pallas_call(
        _attention_head_kernel,
        grid=grid,
        out_shape=jax.ShapeDtypeStruct((N, num_cls), jnp.float32),
        in_specs=[x_spec] + w_specs + [pl.BlockSpec(memory_space=vmem)] * 2,
        out_specs=pl.BlockSpec((tile_n, num_cls), lambda i: (i, 0)),
        scratch_shapes=scratch,
        compiler_params=cparams,
    )(x_tnd, *weights, w_out, b_out)


# ----------------------------------------------------------------------------
# HANCLS forward
# ----------------------------------------------------------------------------
def han_cls_forward(input_sents, params):
    B, num_sents, seq_len = input_sents.shape
    # Time-major embedding gather: transpose the int32 ids (cheap) rather than the
    # f32 embeddings (saves a full HBM round trip of the activations).
    ids = input_sents.reshape(B * num_sents, seq_len).T              # (L, B*S) int32
    words_tnd = jnp.take(params["embed"], ids, axis=0)               # (L, B*S, 300)

    # Word-level attention: all sentences of all docs form the GRU batch.
    sent_mat = attention_net(words_tnd, params["word"], tile_n=16)   # (B*S, 2*HP)

    # pack_sequence: every doc has the same number of sentences here -> reshape.
    # TODO(synk): ragged documents (variable sentence counts) are not handled.
    docs_tnd = jnp.transpose(sent_mat.reshape(B, num_sents, -1), (1, 0, 2))  # (S, B, 2*HP)

    # Sentence-level attention with the Linear + LogSoftmax head fused in.
    out = attention_net(docs_tnd, params["sent"], tile_n=B,
                        head=(params["w_out"], params["b_out"]))     # (B, num_cls)
    return {"output": out}


# ----------------------------------------------------------------------------
# Deterministic parameter init (packed / zero-padded kernel layout)
# ----------------------------------------------------------------------------
def _uniform(key, shape, scale=0.1):
    return jax.random.uniform(key, shape, jnp.float32, -scale, scale)


def _attn_params(key, d_in, H=H_LOGICAL, HP=H_PAD, C=C_LOGICAL, CP=C_PAD):
    it = iter(jax.random.split(key, 32))

    def u(shape, scale=0.1):
        return _uniform(next(it), shape, scale)

    def gates_in():    # input-to-hidden, gates packed [r|z|n], H zero-padded to HP
        return jnp.concatenate(
            [jnp.pad(u((d_in, H)), ((0, 0), (0, HP - H))) for _ in range(3)], axis=1)

    def gates_hh():    # hidden-to-hidden, (HP, 3*HP), rows and cols zero-padded
        return jnp.concatenate(
            [jnp.pad(u((H, H)), ((0, HP - H), (0, HP - H))) for _ in range(3)], axis=1)

    def gate_bias():   # (1, 3*HP)
        return jnp.concatenate(
            [jnp.pad(u((H,)), (0, HP - H)) for _ in range(3)], axis=0)[None, :]

    # fc: logical (2H, C) split fwd/bwd row blocks, zero-padded to (2*HP, CP).
    wfc = jnp.concatenate(
        [jnp.pad(u((H, C)), ((0, HP - H), (0, CP - C))) for _ in range(2)], axis=0)
    bfc = jnp.pad(u((C,)), (0, CP - C))[None, :]
    ctx = jnp.pad(u((C,)), (0, CP - C))[None, :]     # context vector as a row (for VPU dot)

    return {
        "wih_f": gates_in().astype(jnp.bfloat16),    # bf16 input projections (f32 accumulate)
        "wih_b": gates_in().astype(jnp.bfloat16),
        "bih_f": gate_bias(), "bih_b": gate_bias(),
        "whh_f": gates_hh(), "whh_b": gates_hh(),
        "bhh_f": gate_bias(), "bhh_b": gate_bias(),
        "wfc": wfc, "bfc": bfc, "ctx": ctx,
    }


def init_params(key, vocab, embed_dim=300, num_cls=5):
    k_embed, k_word, k_sent, k_of, k_ob, k_bias = jax.random.split(key, 6)
    H, HP = H_LOGICAL, H_PAD
    # Output head rows follow the padded [fwd | bwd] layout of the pooled doc vector.
    w_out = jnp.concatenate(
        [jnp.pad(_uniform(k_of, (H, num_cls)), ((0, HP - H), (0, 0))),
         jnp.pad(_uniform(k_ob, (H, num_cls)), ((0, HP - H), (0, 0)))], axis=0)  # (2*HP, ncls)
    return {
        "embed": _uniform(k_embed, (vocab, embed_dim), scale=0.5),
        "word": _attn_params(k_word, embed_dim),       # word-level: D_in = 300
        "sent": _attn_params(k_sent, 2 * HP),          # sentence-level: D_in = 2*HP = 128
        "w_out": w_out,
        "b_out": _uniform(k_bias, (1, num_cls)),
    }


if __name__ == "__main__":
    key = jax.random.PRNGKey(0)
    pkey, dkey = jax.random.split(key)

    # Small demo shapes (batch dims are sublane-friendly multiples of 8 / 4).
    B, num_sents, seq_len = 8, 4, 8
    vocab, embed_dim, num_cls = 50, 300, 5

    params = init_params(pkey, vocab, embed_dim=embed_dim, num_cls=num_cls)
    input_sents = jax.random.randint(dkey, (B, num_sents, seq_len), 0, vocab,
                                     dtype=jnp.int32)

    out = han_cls_forward(input_sents, params)["output"]
    out = jax.block_until_ready(out)

    assert out.shape == (B, num_cls), out.shape
    # log-softmax rows must exponentiate-sum to 1
    probs_sum = jnp.sum(jnp.exp(out), axis=1)
    assert bool(jnp.all(jnp.abs(probs_sum - 1.0) < 1e-3)), probs_sum
    print("KERNEL_OK")
</pallas_src>

<mosaic_0001>
module attributes {stable_mosaic.version = 11 : i64} {
  func.func @_attention_kernel(%arg0: i32, %arg1: memref<8x16x300xf32, #tpu.memory_space<vmem>>, %arg2: memref<300x192xbf16, #tpu.memory_space<vmem>>, %arg3: memref<300x192xbf16, #tpu.memory_space<vmem>>, %arg4: memref<1x192xf32, #tpu.memory_space<vmem>>, %arg5: memref<1x192xf32, #tpu.memory_space<vmem>>, %arg6: memref<64x192xf32, #tpu.memory_space<vmem>>, %arg7: memref<64x192xf32, #tpu.memory_space<vmem>>, %arg8: memref<1x192xf32, #tpu.memory_space<vmem>>, %arg9: memref<1x192xf32, #tpu.memory_space<vmem>>, %arg10: memref<128x128xf32, #tpu.memory_space<vmem>>, %arg11: memref<1x128xf32, #tpu.memory_space<vmem>>, %arg12: memref<1x128xf32, #tpu.memory_space<vmem>>, %arg13: memref<16x128xf32, #tpu.memory_space<vmem>>, %arg14: memref<8x16x192xf32, #tpu.memory_space<vmem>>, %arg15: memref<8x16x192xf32, #tpu.memory_space<vmem>>, %arg16: memref<8x16x64xf32, #tpu.memory_space<vmem>>, %arg17: memref<8x16x64xf32, #tpu.memory_space<vmem>>) attributes {dimension_semantics = [#tpu.dimension_semantics<parallel>], iteration_bounds = array<i64: 2>, scalar_prefetch = 0 : i64, scratch_operands = 4 : i64, tpu.core_type = #tpu.core_type<tc>, window_params = [{transform_indices = @transform_0, window_bounds = array<i64: 8, 16, 300>}, {pipeline_mode = #tpu.pipeline_mode<synchronous>, transform_indices = @transform_1, window_bounds = array<i64: 300, 192>}, {pipeline_mode = #tpu.pipeline_mode<synchronous>, transform_indices = @transform_2, window_bounds = array<i64: 300, 192>}, {pipeline_mode = #tpu.pipeline_mode<synchronous>, transform_indices = @transform_3, window_bounds = array<i64: 1, 192>}, {pipeline_mode = #tpu.pipeline_mode<synchronous>, transform_indices = @transform_4, window_bounds = array<i64: 1, 192>}, {pipeline_mode = #tpu.pipeline_mode<synchronous>, transform_indices = @transform_5, window_bounds = array<i64: 64, 192>}, {pipeline_mode = #tpu.pipeline_mode<synchronous>, transform_indices = @transform_6, window_bounds = array<i64: 64, 192>}, {pipeline_mode = #tpu.pipeline_mode<synchronous>, transform_indices = @transform_7, window_bounds = array<i64: 1, 192>}, {pipeline_mode = #tpu.pipeline_mode<synchronous>, transform_indices = @transform_8, window_bounds = array<i64: 1, 192>}, {pipeline_mode = #tpu.pipeline_mode<synchronous>, transform_indices = @transform_9, window_bounds = array<i64: 128, 128>}, {pipeline_mode = #tpu.pipeline_mode<synchronous>, transform_indices = @transform_10, window_bounds = array<i64: 1, 128>}, {pipeline_mode = #tpu.pipeline_mode<synchronous>, transform_indices = @transform_11, window_bounds = array<i64: 1, 128>}, {transform_indices = @transform_12, window_bounds = array<i64: 16, 128>}]} {
    %c0 = arith.constant 0 : index
    %c0_0 = arith.constant 0 : index
    %c0_1 = arith.constant 0 : index
    %0 = vector.load %arg1[%c0, %c0_0, %c0_1] : memref<8x16x300xf32, #tpu.memory_space<vmem>>, vector<8x16x300xf32>
    %1 = vector.shape_cast %0 : vector<8x16x300xf32> to vector<128x300xf32>
    %2 = arith.truncf %1 : vector<128x300xf32> to vector<128x300xbf16>
    %c0_2 = arith.constant 0 : index
    %c0_3 = arith.constant 0 : index
    %3 = vector.load %arg2[%c0_2, %c0_3] : memref<300x192xbf16, #tpu.memory_space<vmem>>, vector<300x192xbf16>
    %cst = arith.constant dense<0.000000e+00> : vector<128x192xf32>
    %4 = tpu.matmul %2, %3, %cst {dimension_numbers = #tpu.dot_dimension_numbers<[1], [0], [0], [1], [0, 0, 1, 1], [], []>} : vector<128x300xbf16>, vector<300x192xbf16>, vector<128x192xf32> -> vector<128x192xf32>
    %c0_4 = arith.constant 0 : index
    %c0_5 = arith.constant 0 : index
    %5 = vector.load %arg4[%c0_4, %c0_5] : memref<1x192xf32, #tpu.memory_space<vmem>>, vector<1x192xf32>
    %6 = vector.broadcast %5 : vector<1x192xf32> to vector<128x192xf32>
    %7 = arith.addf %4, %6 : vector<128x192xf32>
    %8 = vector.shape_cast %7 : vector<128x192xf32> to vector<8x16x192xf32>
    %c0_6 = arith.constant 0 : index
    %c0_7 = arith.constant 0 : index
    %c0_8 = arith.constant 0 : index
    %9 = vector.load %arg14[%c0_6, %c0_7, %c0_8] : memref<8x16x192xf32, #tpu.memory_space<vmem>>, vector<8x16x192xf32>
    tpu.vector_store %arg14[%c0_6, %c0_7, %c0_8], %8 {strides = array<i32>} : memref<8x16x192xf32, #tpu.memory_space<vmem>>, vector<8x16x192xf32>,
    %c0_9 = arith.constant 0 : index
    %c0_10 = arith.constant 0 : index
    %10 = vector.load %arg3[%c0_9, %c0_10] : memref<300x192xbf16, #tpu.memory_space<vmem>>, vector<300x192xbf16>
    %cst_11 = arith.constant dense<0.000000e+00> : vector<128x192xf32>
    %11 = tpu.matmul %2, %10, %cst_11 {dimension_numbers = #tpu.dot_dimension_numbers<[1], [0], [0], [1], [0, 0, 1, 1], [], []>} : vector<128x300xbf16>, vector<300x192xbf16>, vector<128x192xf32> -> vector<128x192xf32>
    %c0_12 = arith.constant 0 : index
    %c0_13 = arith.constant 0 : index
    %12 = vector.load %arg5[%c0_12, %c0_13] : memref<1x192xf32, #tpu.memory_space<vmem>>, vector<1x192xf32>
    %13 = vector.broadcast %12 : vector<1x192xf32> to vector<128x192xf32>
    %14 = arith.addf %11, %13 : vector<128x192xf32>
    %15 = vector.shape_cast %14 : vector<128x192xf32> to vector<8x16x192xf32>
    %c0_14 = arith.constant 0 : index
    %c0_15 = arith.constant 0 : index
    %c0_16 = arith.constant 0 : index
    %16 = vector.load %arg15[%c0_14, %c0_15, %c0_16] : memref<8x16x192xf32, #tpu.memory_space<vmem>>, vector<8x16x192xf32>
    tpu.vector_store %arg15[%c0_14, %c0_15, %c0_16], %15 {strides = array<i32>} : memref<8x16x192xf32, #tpu.memory_space<vmem>>, vector<8x16x192xf32>,
    %c0_17 = arith.constant 0 : index
    %c0_18 = arith.constant 0 : index
    %17 = vector.load %arg6[%c0_17, %c0_18] : memref<64x192xf32, #tpu.memory_space<vmem>>, vector<64x192xf32>
    %c0_19 = arith.constant 0 : index
    %c0_20 = arith.constant 0 : index
    %18 = vector.load %arg8[%c0_19, %c0_20] : memref<1x192xf32, #tpu.memory_space<vmem>>, vector<1x192xf32>
    %c0_21 = arith.constant 0 : index
    %c0_22 = arith.constant 0 : index
    %19 = vector.load %arg7[%c0_21, %c0_22] : memref<64x192xf32, #tpu.memory_space<vmem>>, vector<64x192xf32>
    %c0_23 = arith.constant 0 : index
    %c0_24 = arith.constant 0 : index
    %20 = vector.load %arg9[%c0_23, %c0_24] : memref<1x192xf32, #tpu.memory_space<vmem>>, vector<1x192xf32>
    %cst_25 = arith.constant 0.000000e+00 : f32
    %21 = vector.broadcast %cst_25 : f32 to vector<16x64xf32>
    %c0_26 = arith.constant 0 : index
    %c0_27 = arith.constant 0 : index
    %c0_28 = arith.constant 0 : index
    %22 = vector.load %arg14[%c0_26, %c0_27, %c0_28] : memref<8x16x192xf32, #tpu.memory_space<vmem>>, vector<1x16x192xf32>
    %23 = vector.shape_cast %22 : vector<1x16x192xf32> to vector<16x192xf32>
    %cst_29 = arith.constant dense<0.000000e+00> : vector<16x192xf32>
    %24 = tpu.matmul %21, %17, %cst_29 {dimension_numbers = #tpu.dot_dimension_numbers<[1], [0], [0], [1], [0, 0, 1, 1], [], []>} : vector<16x64xf32>, vector<64x192xf32>, vector<16x192xf32> -> vector<16x192xf32>
    %25 = vector.broadcast %18 : vector<1x192xf32> to vector<16x192xf32>
    %26 = arith.addf %24, %25 : vector<16x192xf32>
    %27 = vector.extract_strided_slice %23 {offsets = [0, 0], sizes = [16, 128], strides = [1, 1]} : vector<16x192xf32> to vector<16x128xf32>
    %28 = vector.extract_strided_slice %26 {offsets = [0, 0], sizes = [16, 128], strides = [1, 1]} : vector<16x192xf32> to vector<16x128xf32>
    %29 = arith.addf %27, %28 : vector<16x128xf32>
    %30 = arith.negf %29 : vector<16x128xf32>
    %31 = math.exp %30 : vector<16x128xf32>
    %cst_30 = arith.constant 1.000000e+00 : f32
    %32 = vector.broadcast %cst_30 : f32 to vector<16x128xf32>
    %33 = arith.addf %32, %31 : vector<16x128xf32>
    %34 = arith.divf %32, %33 : vector<16x128xf32>
    %35 = vector.extract_strided_slice %34 {offsets = [0, 0], sizes = [16, 64], strides = [1, 1]} : vector<16x128xf32> to vector<16x64xf32>
    %36 = vector.extract_strided_slice %34 {offsets = [0, 64], sizes = [16, 64], strides = [1, 1]} : vector<16x128xf32> to vector<16x64xf32>
    %37 = vector.extract_strided_slice %23 {offsets = [0, 128], sizes = [16, 64], strides = [1, 1]} : vector<16x192xf32> to vector<16x64xf32>
    %38 = vector.extract_strided_slice %26 {offsets = [0, 128], sizes = [16, 64], strides = [1, 1]} : vector<16x192xf32> to vector<16x64xf32>
    %39 = arith.mulf %35, %38 : vector<16x64xf32>
    %40 = arith.addf %37, %39 : vector<16x64xf32>
    %41 = math.tanh %40 : vector<16x64xf32>
    %cst_31 = arith.constant 1.000000e+00 : f32
    %42 = vector.broadcast %cst_31 : f32 to vector<16x64xf32>
    %43 = arith.subf %42, %36 : vector<16x64xf32>
    %44 = arith.mulf %43, %41 : vector<16x64xf32>
    %45 = arith.mulf %36, %21 : vector<16x64xf32>
    %46 = arith.addf %44, %45 : vector<16x64xf32>
    %c0_32 = arith.constant 0 : index
    %c0_33 = arith.constant 0 : index
    %c0_34 = arith.constant 0 : index
    %47 = vector.load %arg16[%c0_32, %c0_33, %c0_34] : memref<8x16x64xf32, #tpu.memory_space<vmem>>, vector<1x16x64xf32>
    %48 = vector.shape_cast %47 : vector<1x16x64xf32> to vector<16x64xf32>
    %49 = vector.shape_cast %46 : vector<16x64xf32> to vector<1x16x64xf32>
    tpu.vector_store %arg16[%c0_32, %c0_33, %c0_34], %49 {strides = array<i32>} : memref<8x16x64xf32, #tpu.memory_space<vmem>>, vector<1x16x64xf32>,
    %c1 = arith.constant 1 : index
    %c0_35 = arith.constant 0 : index
    %c0_36 = arith.constant 0 : index
    %50 = vector.load %arg14[%c1, %c0_35, %c0_36] : memref<8x16x192xf32, #tpu.memory_space<vmem>>, vector<1x16x192xf32>
    %51 = vector.shape_cast %50 : vector<1x16x192xf32> to vector<16x192xf32>
    %cst_37 = arith.constant dense<0.000000e+00> : vector<16x192xf32>
    %52 = tpu.matmul %46, %17, %cst_37 {dimension_numbers = #tpu.dot_dimension_numbers<[1], [0], [0], [1], [0, 0, 1, 1], [], []>} : vector<16x64xf32>, vector<64x192xf32>, vector<16x192xf32> -> vector<16x192xf32>
    %53 = vector.broadcast %18 : vector<1x192xf32> to vector<16x192xf32>
    %54 = arith.addf %52, %53 : vector<16x192xf32>
    %55 = vector.extract_strided_slice %51 {offsets = [0, 0], sizes = [16, 128], strides = [1, 1]} : vector<16x192xf32> to vector<16x128xf32>
    %56 = vector.extract_strided_slice %54 {offsets = [0, 0], sizes = [16, 128], strides = [1, 1]} : vector<16x192xf32> to vector<16x128xf32>
    %57 = arith.addf %55, %56 : vector<16x128xf32>
    %58 = arith.negf %57 : vector<16x128xf32>
    %59 = math.exp %58 : vector<16x128xf32>
    %cst_38 = arith.constant 1.000000e+00 : f32
    %60 = vector.broadcast %cst_38 : f32 to vector<16x128xf32>
    %61 = arith.addf %60, %59 : vector<16x128xf32>
    %62 = arith.divf %60, %61 : vector<16x128xf32>
    %63 = vector.extract_strided_slice %62 {offsets = [0, 0], sizes = [16, 64], strides = [1, 1]} : vector<16x128xf32> to vector<16x64xf32>
    %64 = vector.extract_strided_slice %62 {offsets = [0, 64], sizes = [16, 64], strides = [1, 1]} : vector<16x128xf32> to vector<16x64xf32>
    %65 = vector.extract_strided_slice %51 {offsets = [0, 128], sizes = [16, 64], strides = [1, 1]} : vector<16x192xf32> to vector<16x64xf32>
    %66 = vector.extract_strided_slice %54 {offsets = [0, 128], sizes = [16, 64], strides = [1, 1]} : vector<16x192xf32> to vector<16x64xf32>
    %67 = arith.mulf %63, %66 : vector<16x64xf32>
    %68 = arith.addf %65, %67 : vector<16x64xf32>
    %69 = math.tanh %68 : vector<16x64xf32>
    %cst_39 = arith.constant 1.000000e+00 : f32
    %70 = vector.broadcast %cst_39 : f32 to vector<16x64xf32>
    %71 = arith.subf %70, %64 : vector<16x64xf32>
    %72 = arith.mulf %71, %69 : vector<16x64xf32>
    %73 = arith.mulf %64, %46 : vector<16x64xf32>
    %74 = arith.addf %72, %73 : vector<16x64xf32>
    %c1_40 = arith.constant 1 : index
    %c0_41 = arith.constant 0 : index
    %c0_42 = arith.constant 0 : index
    %75 = vector.load %arg16[%c1_40, %c0_41, %c0_42] : memref<8x16x64xf32, #tpu.memory_space<vmem>>, vector<1x16x64xf32>
    %76 = vector.shape_cast %75 : vector<1x16x64xf32> to vector<16x64xf32>
    %77 = vector.shape_cast %74 : vector<16x64xf32> to vector<1x16x64xf32>
    tpu.vector_store %arg16[%c1_40, %c0_41, %c0_42], %77 {strides = array<i32>} : memref<8x16x64xf32, #tpu.memory_space<vmem>>, vector<1x16x64xf32>,
    %c2 = arith.constant 2 : index
    %c0_43 = arith.constant 0 : index
    %c0_44 = arith.constant 0 : index
    %78 = vector.load %arg14[%c2, %c0_43, %c0_44] : memref<8x16x192xf32, #tpu.memory_space<vmem>>, vector<1x16x192xf32>
    %79 = vector.shape_cast %78 : vector<1x16x192xf32> to vector<16x192xf32>
    %cst_45 = arith.constant dense<0.000000e+00> : vector<16x192xf32>
    %80 = tpu.matmul %74, %17, %cst_45 {dimension_numbers = #tpu.dot_dimension_numbers<[1], [0], [0], [1], [0, 0, 1, 1], [], []>} : vector<16x64xf32>, vector<64x192xf32>, vector<16x192xf32> -> vector<16x192xf32>
    %81 = vector.broadcast %18 : vector<1x192xf32> to vector<16x192xf32>
    %82 = arith.addf %80, %81 : vector<16x192xf32>
    %83 = vector.extract_strided_slice %79 {offsets = [0, 0], sizes = [16, 128], strides = [1, 1]} : vector<16x192xf32> to vector<16x128xf32>
    %84 = vector.extract_strided_slice %82 {offsets = [0, 0], sizes = [16, 128], strides = [1, 1]} : vector<16x192xf32> to vector<16x128xf32>
    %85 = arith.addf %83, %84 : vector<16x128xf32>
    %86 = arith.negf %85 : vector<16x128xf32>
    %87 = math.exp %86 : vector<16x128xf32>
    %cst_46 = arith.constant 1.000000e+00 : f32
    %88 = vector.broadcast %cst_46 : f32 to vector<16x128xf32>
    %89 = arith.addf %88, %87 : vector<16x128xf32>
    %90 = arith.divf %88, %89 : vector<16x128xf32>
    %91 = vector.extract_strided_slice %90 {offsets = [0, 0], sizes = [16, 64], strides = [1, 1]} : vector<16x128xf32> to vector<16x64xf32>
    %92 = vector.extract_strided_slice %90 {offsets = [0, 64], sizes = [16, 64], strides = [1, 1]} : vector<16x128xf32> to vector<16x64xf32>
    %93 = vector.extract_strided_slice %79 {offsets = [0, 128], sizes = [16, 64], strides = [1, 1]} : vector<16x192xf32> to vector<16x64xf32>
    %94 = vector.extract_strided_slice %82 {offsets = [0, 128], sizes = [16, 64], strides = [1, 1]} : vector<16x192xf32> to vector<16x64xf32>
    %95 = arith.mulf %91, %94 : vector<16x64xf32>
    %96 = arith.addf %93, %95 : vector<16x64xf32>
    %97 = math.tanh %96 : vector<16x64xf32>
    %cst_47 = arith.constant 1.000000e+00 : f32
    %98 = vector.broadcast %cst_47 : f32 to vector<16x64xf32>
    %99 = arith.subf %98, %92 : vector<16x64xf32>
    %100 = arith.mulf %99, %97 : vector<16x64xf32>
    %101 = arith.mulf %92, %74 : vector<16x64xf32>
    %102 = arith.addf %100, %101 : vector<16x64xf32>
    %c2_48 = arith.constant 2 : index
    %c0_49 = arith.constant 0 : index
    %c0_50 = arith.constant 0 : index
    %103 = vector.load %arg16[%c2_48, %c0_49, %c0_50] : memref<8x16x64xf32, #tpu.memory_space<vmem>>, vector<1x16x64xf32>
    %104 = vector.shape_cast %103 : vector<1x16x64xf32> to vector<16x64xf32>
    %105 = vector.shape_cast %102 : vector<16x64xf32> to vector<1x16x64xf32>
    tpu.vector_store %arg16[%c2_48, %c0_49, %c0_50], %105 {strides = array<i32>} : memref<8x16x64xf32, #tpu.memory_space<vmem>>, vector<1x16x64xf32>,
    %c3 = arith.constant 3 : index
    %c0_51 = arith.constant 0 : index
    %c0_52 = arith.constant 0 : index
    %106 = vector.load %arg14[%c3, %c0_51, %c0_52] : memref<8x16x192xf32, #tpu.memory_space<vmem>>, vector<1x16x192xf32>
    %107 = vector.shape_cast %106 : vector<1x16x192xf32> to vector<16x192xf32>
    %cst_53 = arith.constant dense<0.000000e+00> : vector<16x192xf32>
    %108 = tpu.matmul %102, %17, %cst_53 {dimension_numbers = #tpu.dot_dimension_numbers<[1], [0], [0], [1], [0, 0, 1, 1], [], []>} : vector<16x64xf32>, vector<64x192xf32>, vector<16x192xf32> -> vector<16x192xf32>
    %109 = vector.broadcast %18 : vector<1x192xf32> to vector<16x192xf32>
    %110 = arith.addf %108, %109 : vector<16x192xf32>
    %111 = vector.extract_strided_slice %107 {offsets = [0, 0], sizes = [16, 128], strides = [1, 1]} : vector<16x192xf32> to vector<16x128xf32>
    %112 = vector.extract_strided_slice %110 {offsets = [0, 0], sizes = [16, 128], strides = [1, 1]} : vector<16x192xf32> to vector<16x128xf32>
    %113 = arith.addf %111, %112 : vector<16x128xf32>
    %114 = arith.negf %113 : vector<16x128xf32>
    %115 = math.exp %114 : vector<16x128xf32>
    %cst_54 = arith.constant 1.000000e+00 : f32
    %116 = vector.broadcast %cst_54 : f32 to vector<16x128xf32>
    %117 = arith.addf %116, %115 : vector<16x128xf32>
    %118 = arith.divf %116, %117 : vector<16x128xf32>
    %119 = vector.extract_strided_slice %118 {offsets = [0, 0], sizes = [16, 64], strides = [1, 1]} : vector<16x128xf32> to vector<16x64xf32>
    %120 = vector.extract_strided_slice %118 {offsets = [0, 64], sizes = [16, 64], strides = [1, 1]} : vector<16x128xf32> to vector<16x64xf32>
    %121 = vector.extract_strided_slice %107 {offsets = [0, 128], sizes = [16, 64], strides = [1, 1]} : vector<16x192xf32> to vector<16x64xf32>
    %122 = vector.extract_strided_slice %110 {offsets = [0, 128], sizes = [16, 64], strides = [1, 1]} : vector<16x192xf32> to vector<16x64xf32>
    %123 = arith.mulf %119, %122 : vector<16x64xf32>
    %124 = arith.addf %121, %123 : vector<16x64xf32>
    %125 = math.tanh %124 : vector<16x64xf32>
    %cst_55 = arith.constant 1.000000e+00 : f32
    %126 = vector.broadcast %cst_55 : f32 to vector<16x64xf32>
    %127 = arith.subf %126, %120 : vector<16x64xf32>
    %128 = arith.mulf %127, %125 : vector<16x64xf32>
    %129 = arith.mulf %120, %102 : vector<16x64xf32>
    %130 = arith.addf %128, %129 : vector<16x64xf32>
    %c3_56 = arith.constant 3 : index
    %c0_57 = arith.constant 0 : index
    %c0_58 = arith.constant 0 : index
    %131 = vector.load %arg16[%c3_56, %c0_57, %c0_58] : memref<8x16x64xf32, #tpu.memory_space<vmem>>, vector<1x16x64xf32>
    %132 = vector.shape_cast %131 : vector<1x16x64xf32> to vector<16x64xf32>
    %133 = vector.shape_cast %130 : vector<16x64xf32> to vector<1x16x64xf32>
    tpu.vector_store %arg16[%c3_56, %c0_57, %c0_58], %133 {strides = array<i32>} : memref<8x16x64xf32, #tpu.memory_space<vmem>>, vector<1x16x64xf32>,
    %c4 = arith.constant 4 : index
    %c0_59 = arith.constant 0 : index
    %c0_60 = arith.constant 0 : index
    %134 = vector.load %arg14[%c4, %c0_59, %c0_60] : memref<8x16x192xf32, #tpu.memory_space<vmem>>, vector<1x16x192xf32>
    %135 = vector.shape_cast %134 : vector<1x16x192xf32> to vector<16x192xf32>
    %cst_61 = arith.constant dense<0.000000e+00> : vector<16x192xf32>
    %136 = tpu.matmul %130, %17, %cst_61 {dimension_numbers = #tpu.dot_dimension_numbers<[1], [0], [0], [1], [0, 0, 1, 1], [], []>} : vector<16x64xf32>, vector<64x192xf32>, vector<16x192xf32> -> vector<16x192xf32>
    %137 = vector.broadcast %18 : vector<1x192xf32> to vector<16x192xf32>
    %138 = arith.addf %136, %137 : vector<16x192xf32>
    %139 = vector.extract_strided_slice %135 {offsets = [0, 0], sizes = [16, 128], strides = [1, 1]} : vector<16x192xf32> to vector<16x128xf32>
    %140 = vector.extract_strided_slice %138 {offsets = [0, 0], sizes = [16, 128], strides = [1, 1]} : vector<16x192xf32> to vector<16x128xf32>
    %141 = arith.addf %139, %140 : vector<16x128xf32>
    %142 = arith.negf %141 : vector<16x128xf32>
    %143 = math.exp %142 : vector<16x128xf32>
    %cst_62 = arith.constant 1.000000e+00 : f32
    %144 = vector.broadcast %cst_62 : f32 to vector<16x128xf32>
    %145 = arith.addf %144, %143 : vector<16x128xf32>
    %146 = arith.divf %144, %145 : vector<16x128xf32>
    %147 = vector.extract_strided_slice %146 {offsets = [0, 0], sizes = [16, 64], strides = [1, 1]} : vector<16x128xf32> to vector<16x64xf32>
    %148 = vector.extract_strided_slice %146 {offsets = [0, 64], sizes = [16, 64], strides = [1, 1]} : vector<16x128xf32> to vector<16x64xf32>
    %149 = vector.extract_strided_slice %135 {offsets = [0, 128], sizes = [16, 64], strides = [1, 1]} : vector<16x192xf32> to vector<16x64xf32>
    %150 = vector.extract_strided_slice %138 {offsets = [0, 128], sizes = [16, 64], strides = [1, 1]} : vector<16x192xf32> to vector<16x64xf32>
    %151 = arith.mulf %147, %150 : vector<16x64xf32>
    %152 = arith.addf %149, %151 : vector<16x64xf32>
    %153 = math.tanh %152 : vector<16x64xf32>
    %cst_63 = arith.constant 1.000000e+00 : f32
    %154 = vector.broadcast %cst_63 : f32 to vector<16x64xf32>
    %155 = arith.subf %154, %148 : vector<16x64xf32>
    %156 = arith.mulf %155, %153 : vector<16x64xf32>
    %157 = arith.mulf %148, %130 : vector<16x64xf32>
    %158 = arith.addf %156, %157 : vector<16x64xf32>
    %c4_64 = arith.constant 4 : index
    %c0_65 = arith.constant 0 : index
    %c0_66 = arith.constant 0 : index
    %159 = vector.load %arg16[%c4_64, %c0_65, %c0_66] : memref<8x16x64xf32, #tpu.memory_space<vmem>>, vector<1x16x64xf32>
    %160 = vector.shape_cast %159 : vector<1x16x64xf32> to vector<16x64xf32>
    %161 = vector.shape_cast %158 : vector<16x64xf32> to vector<1x16x64xf32>
    tpu.vector_store %arg16[%c4_64, %c0_65, %c0_66], %161 {strides = array<i32>} : memref<8x16x64xf32, #tpu.memory_space<vmem>>, vector<1x16x64xf32>,
    %c5 = arith.constant 5 : index
    %c0_67 = arith.constant 0 : index
    %c0_68 = arith.constant 0 : index
    %162 = vector.load %arg14[%c5, %c0_67, %c0_68] : memref<8x16x192xf32, #tpu.memory_space<vmem>>, vector<1x16x192xf32>
    %163 = vector.shape_cast %162 : vector<1x16x192xf32> to vector<16x192xf32>
    %cst_69 = arith.constant dense<0.000000e+00> : vector<16x192xf32>
    %164 = tpu.matmul %158, %17, %cst_69 {dimension_numbers = #tpu.dot_dimension_numbers<[1], [0], [0], [1], [0, 0, 1, 1], [], []>} : vector<16x64xf32>, vector<64x192xf32>, vector<16x192xf32> -> vector<16x192xf32>
    %165 = vector.broadcast %18 : vector<1x192xf32> to vector<16x192xf32>
    %166 = arith.addf %164, %165 : vector<16x192xf32>
    %167 = vector.extract_strided_slice %163 {offsets = [0, 0], sizes = [16, 128], strides = [1, 1]} : vector<16x192xf32> to vector<16x128xf32>
    %168 = vector.extract_strided_slice %166 {offsets = [0, 0], sizes = [16, 128], strides = [1, 1]} : vector<16x192xf32> to vector<16x128xf32>
    %169 = arith.addf %167, %168 : vector<16x128xf32>
    %170 = arith.negf %169 : vector<16x128xf32>
    %171 = math.exp %170 : vector<16x128xf32>
    %cst_70 = arith.constant 1.000000e+00 : f32
    %172 = vector.broadcast %cst_70 : f32 to vector<16x128xf32>
    %173 = arith.addf %172, %171 : vector<16x128xf32>
    %174 = arith.divf %172, %173 : vector<16x128xf32>
    %175 = vector.extract_strided_slice %174 {offsets = [0, 0], sizes = [16, 64], strides = [1, 1]} : vector<16x128xf32> to vector<16x64xf32>
    %176 = vector.extract_strided_slice %174 {offsets = [0, 64], sizes = [16, 64], strides = [1, 1]} : vector<16x128xf32> to vector<16x64xf32>
    %177 = vector.extract_strided_slice %163 {offsets = [0, 128], sizes = [16, 64], strides = [1, 1]} : vector<16x192xf32> to vector<16x64xf32>
    %178 = vector.extract_strided_slice %166 {offsets = [0, 128], sizes = [16, 64], strides = [1, 1]} : vector<16x192xf32> to vector<16x64xf32>
    %179 = arith.mulf %175, %178 : vector<16x64xf32>
    %180 = arith.addf %177, %179 : vector<16x64xf32>
    %181 = math.tanh %180 : vector<16x64xf32>
    %cst_71 = arith.constant 1.000000e+00 : f32
    %182 = vector.broadcast %cst_71 : f32 to vector<16x64xf32>
    %183 = arith.subf %182, %176 : vector<16x64xf32>
    %184 = arith.mulf %183, %181 : vector<16x64xf32>
    %185 = arith.mulf %176, %158 : vector<16x64xf32>
    %186 = arith.addf %184, %185 : vector<16x64xf32>
    %c5_72 = arith.constant 5 : index
    %c0_73 = arith.constant 0 : index
    %c0_74 = arith.constant 0 : index
    %187 = vector.load %arg16[%c5_72, %c0_73, %c0_74] : memref<8x16x64xf32, #tpu.memory_space<vmem>>, vector<1x16x64xf32>
    %188 = vector.shape_cast %187 : vector<1x16x64xf32> to vector<16x64xf32>
    %189 = vector.shape_cast %186 : vector<16x64xf32> to vector<1x16x64xf32>
    tpu.vector_store %arg16[%c5_72, %c0_73, %c0_74], %189 {strides = array<i32>} : memref<8x16x64xf32, #tpu.memory_space<vmem>>, vector<1x16x64xf32>,
    %c6 = arith.constant 6 : index
    %c0_75 = arith.constant 0 : index
    %c0_76 = arith.constant 0 : index
    %190 = vector.load %arg14[%c6, %c0_75, %c0_76] : memref<8x16x192xf32, #tpu.memory_space<vmem>>, vector<1x16x192xf32>
    %191 = vector.shape_cast %190 : vector<1x16x192xf32> to vector<16x192xf32>
    %cst_77 = arith.constant dense<0.000000e+00> : vector<16x192xf32>
    %192 = tpu.matmul %186, %17, %cst_77 {dimension_numbers = #tpu.dot_dimension_numbers<[1], [0], [0], [1], [0, 0, 1, 1], [], []>} : vector<16x64xf32>, vector<64x192xf32>, vector<16x192xf32> -> vector<16x192xf32>
    %193 = vector.broadcast %18 : vector<1x192xf32> to vector<16x192xf32>
    %194 = arith.addf %192, %193 : vector<16x192xf32>
    %195 = vector.extract_strided_slice %191 {offsets = [0, 0], sizes = [16, 128], strides = [1, 1]} : vector<16x192xf32> to vector<16x128xf32>
    %196 = vector.extract_strided_slice %194 {offsets = [0, 0], sizes = [16, 128], strides = [1, 1]} : vector<16x192xf32> to vector<16x128xf32>
    %197 = arith.addf %195, %196 : vector<16x128xf32>
    %198 = arith.negf %197 : vector<16x128xf32>
    %199 = math.exp %198 : vector<16x128xf32>
    %cst_78 = arith.constant 1.000000e+00 : f32
    %200 = vector.broadcast %cst_78 : f32 to vector<16x128xf32>
    %201 = arith.addf %200, %199 : vector<16x128xf32>
    %202 = arith.divf %200, %201 : vector<16x128xf32>
    %203 = vector.extract_strided_slice %202 {offsets = [0, 0], sizes = [16, 64], strides = [1, 1]} : vector<16x128xf32> to vector<16x64xf32>
    %204 = vector.extract_strided_slice %202 {offsets = [0, 64], sizes = [16, 64], strides = [1, 1]} : vector<16x128xf32> to vector<16x64xf32>
    %205 = vector.extract_strided_slice %191 {offsets = [0, 128], sizes = [16, 64], strides = [1, 1]} : vector<16x192xf32> to vector<16x64xf32>
    %206 = vector.extract_strided_slice %194 {offsets = [0, 128], sizes = [16, 64], strides = [1, 1]} : vector<16x192xf32> to vector<16x64xf32>
    %207 = arith.mulf %203, %206 : vector<16x64xf32>
    %208 = arith.addf %205, %207 : vector<16x64xf32>
    %209 = math.tanh %208 : vector<16x64xf32>
    %cst_79 = arith.constant 1.000000e+00 : f32
    %210 = vector.broadcast %cst_79 : f32 to vector<16x64xf32>
    %211 = arith.subf %210, %204 : vector<16x64xf32>
    %212 = arith.mulf %211, %209 : vector<16x64xf32>
    %213 = arith.mulf %204, %186 : vector<16x64xf32>
    %214 = arith.addf %212, %213 : vector<16x64xf32>
    %c6_80 = arith.constant 6 : index
    %c0_81 = arith.constant 0 : index
    %c0_82 = arith.constant 0 : index
    %215 = vector.load %arg16[%c6_80, %c0_81, %c0_82] : memref<8x16x64xf32, #tpu.memory_space<vmem>>, vector<1x16x64xf32>
    %216 = vector.shape_cast %215 : vector<1x16x64xf32> to vector<16x64xf32>
    %217 = vector.shape_cast %214 : vector<16x64xf32> to vector<1x16x64xf32>
    tpu.vector_store %arg16[%c6_80, %c0_81, %c0_82], %217 {strides = array<i32>} : memref<8x16x64xf32, #tpu.memory_space<vmem>>, vector<1x16x64xf32>,
    %c7 = arith.constant 7 : index
    %c0_83 = arith.constant 0 : index
    %c0_84 = arith.constant 0 : index
    %218 = vector.load %arg14[%c7, %c0_83, %c0_84] : memref<8x16x192xf32, #tpu.memory_space<vmem>>, vector<1x16x192xf32>
    %219 = vector.shape_cast %218 : vector<1x16x192xf32> to vector<16x192xf32>
    %cst_85 = arith.constant dense<0.000000e+00> : vector<16x192xf32>
    %220 = tpu.matmul %214, %17, %cst_85 {dimension_numbers = #tpu.dot_dimension_numbers<[1], [0], [0], [1], [0, 0, 1, 1], [], []>} : vector<16x64xf32>, vector<64x192xf32>, vector<16x192xf32> -> vector<16x192xf32>
    %221 = vector.broadcast %18 : vector<1x192xf32> to vector<16x192xf32>
    %222 = arith.addf %220, %221 : vector<16x192xf32>
    %223 = vector.extract_strided_slice %219 {offsets = [0, 0], sizes = [16, 128], strides = [1, 1]} : vector<16x192xf32> to vector<16x128xf32>
    %224 = vector.extract_strided_slice %222 {offsets = [0, 0], sizes = [16, 128], strides = [1, 1]} : vector<16x192xf32> to vector<16x128xf32>
    %225 = arith.addf %223, %224 : vector<16x128xf32>
    %226 = arith.negf %225 : vector<16x128xf32>
    %227 = math.exp %226 : vector<16x128xf32>
    %cst_86 = arith.constant 1.000000e+00 : f32
    %228 = vector.broadcast %cst_86 : f32 to vector<16x128xf32>
    %229 = arith.addf %228, %227 : vector<16x128xf32>
    %230 = arith.divf %228, %229 : vector<16x128xf32>
    %231 = vector.extract_strided_slice %230 {offsets = [0, 0], sizes = [16, 64], strides = [1, 1]} : vector<16x128xf32> to vector<16x64xf32>
    %232 = vector.extract_strided_slice %230 {offsets = [0, 64], sizes = [16, 64], strides = [1, 1]} : vector<16x128xf32> to vector<16x64xf32>
    %233 = vector.extract_strided_slice %219 {offsets = [0, 128], sizes = [16, 64], strides = [1, 1]} : vector<16x192xf32> to vector<16x64xf32>
    %234 = vector.extract_strided_slice %222 {offsets = [0, 128], sizes = [16, 64], strides = [1, 1]} : vector<16x192xf32> to vector<16x64xf32>
    %235 = arith.mulf %231, %234 : vector<16x64xf32>
    %236 = arith.addf %233, %235 : vector<16x64xf32>
    %237 = math.tanh %236 : vector<16x64xf32>
    %cst_87 = arith.constant 1.000000e+00 : f32
    %238 = vector.broadcast %cst_87 : f32 to vector<16x64xf32>
    %239 = arith.subf %238, %232 : vector<16x64xf32>
    %240 = arith.mulf %239, %237 : vector<16x64xf32>
    %241 = arith.mulf %232, %214 : vector<16x64xf32>
    %242 = arith.addf %240, %241 : vector<16x64xf32>
    %c7_88 = arith.constant 7 : index
    %c0_89 = arith.constant 0 : index
    %c0_90 = arith.constant 0 : index
    %243 = vector.load %arg16[%c7_88, %c0_89, %c0_90] : memref<8x16x64xf32, #tpu.memory_space<vmem>>, vector<1x16x64xf32>
    %244 = vector.shape_cast %243 : vector<1x16x64xf32> to vector<16x64xf32>
    %245 = vector.shape_cast %242 : vector<16x64xf32> to vector<1x16x64xf32>
    tpu.vector_store %arg16[%c7_88, %c0_89, %c0_90], %245 {strides = array<i32>} : memref<8x16x64xf32, #tpu.memory_space<vmem>>, vector<1x16x64xf32>,
    %cst_91 = arith.constant 0.000000e+00 : f32
    %246 = vector.broadcast %cst_91 : f32 to vector<16x64xf32>
    %c7_92 = arith.constant 7 : index
    %c0_93 = arith.constant 0 : index
    %c0_94 = arith.constant 0 : index
    %247 = vector.load %arg15[%c7_92, %c0_93, %c0_94] : memref<8x16x192xf32, #tpu.memory_space<vmem>>, vector<1x16x192xf32>
    %248 = vector.shape_cast %247 : vector<1x16x192xf32> to vector<16x192xf32>
    %cst_95 = arith.constant dense<0.000000e+00> : vector<16x192xf32>
    %249 = tpu.matmul %246, %19, %cst_95 {dimension_numbers = #tpu.dot_dimension_numbers<[1], [0], [0], [1], [0, 0, 1, 1], [], []>} : vector<16x64xf32>, vector<64x192xf32>, vector<16x192xf32> -> vector<16x192xf32>
    %250 = vector.broadcast %20 : vector<1x192xf32> to vector<16x192xf32>
    %251 = arith.addf %249, %250 : vector<16x192xf32>
    %252 = vector.extract_strided_slice %248 {offsets = [0, 0], sizes = [16, 128], strides = [1, 1]} : vector<16x192xf32> to vector<16x128xf32>
    %253 = vector.extract_strided_slice %251 {offsets = [0, 0], sizes = [16, 128], strides = [1, 1]} : vector<16x192xf32> to vector<16x128xf32>
    %254 = arith.addf %252, %253 : vector<16x128xf32>
    %255 = arith.negf %254 : vector<16x128xf32>
    %256 = math.exp %255 : vector<16x128xf32>
    %cst_96 = arith.constant 1.000000e+00 : f32
    %257 = vector.broadcast %cst_96 : f32 to vector<16x128xf32>
    %258 = arith.addf %257, %256 : vector<16x128xf32>
    %259 = arith.divf %257, %258 : vector<16x128xf32>
    %260 = vector.extract_strided_slice %259 {offsets = [0, 0], sizes = [16, 64], strides = [1, 1]} : vector<16x128xf32> to vector<16x64xf32>
    %261 = vector.extract_strided_slice %259 {offsets = [0, 64], sizes = [16, 64], strides = [1, 1]} : vector<16x128xf32> to vector<16x64xf32>
    %262 = vector.extract_strided_slice %248 {offsets = [0, 128], sizes = [16, 64], strides = [1, 1]} : vector<16x192xf32> to vector<16x64xf32>
    %263 = vector.extract_strided_slice %251 {offsets = [0, 128], sizes = [16, 64], strides = [1, 1]} : vector<16x192xf32> to vector<16x64xf32>
    %264 = arith.mulf %260, %263 : vector<16x64xf32>
    %265 = arith.addf %262, %264 : vector<16x64xf32>
    %266 = math.tanh %265 : vector<16x64xf32>
    %cst_97 = arith.constant 1.000000e+00 : f32
    %267 = vector.broadcast %cst_97 : f32 to vector<16x64xf32>
    %268 = arith.subf %267, %261 : vector<16x64xf32>
    %269 = arith.mulf %268, %266 : vector<16x64xf32>
    %270 = arith.mulf %261, %246 : vector<16x64xf32>
    %271 = arith.addf %269, %270 : vector<16x64xf32>
    %c7_98 = arith.constant 7 : index
    %c0_99 = arith.constant 0 : index
    %c0_100 = arith.constant 0 : index
    %272 = vector.load %arg17[%c7_98, %c0_99, %c0_100] : memref<8x16x64xf32, #tpu.memory_space<vmem>>, vector<1x16x64xf32>
    %273 = vector.shape_cast %272 : vector<1x16x64xf32> to vector<16x64xf32>
    %274 = vector.shape_cast %271 : vector<16x64xf32> to vector<1x16x64xf32>
    tpu.vector_store %arg17[%c7_98, %c0_99, %c0_100], %274 {strides = array<i32>} : memref<8x16x64xf32, #tpu.memory_space<vmem>>, vector<1x16x64xf32>,
    %c6_101 = arith.constant 6 : index
    %c0_102 = arith.constant 0 : index
    %c0_103 = arith.constant 0 : index
    %275 = vector.load %arg15[%c6_101, %c0_102, %c0_103] : memref<8x16x192xf32, #tpu.memory_space<vmem>>, vector<1x16x192xf32>
    %276 = vector.shape_cast %275 : vector<1x16x192xf32> to vector<16x192xf32>
    %cst_104 = arith.constant dense<0.000000e+00> : vector<16x192xf32>
    %277 = tpu.matmul %271, %19, %cst_104 {dimension_numbers = #tpu.dot_dimension_numbers<[1], [0], [0], [1], [0, 0, 1, 1], [], []>} : vector<16x64xf32>, vector<64x192xf32>, vector<16x192xf32> -> vector<16x192xf32>
    %278 = vector.broadcast %20 : vector<1x192xf32> to vector<16x192xf32>
    %279 = arith.addf %277, %278 : vector<16x192xf32>
    %280 = vector.extract_strided_slice %276 {offsets = [0, 0], sizes = [16, 128], strides = [1, 1]} : vector<16x192xf32> to vector<16x128xf32>
    %281 = vector.extract_strided_slice %279 {offsets = [0, 0], sizes = [16, 128], strides = [1, 1]} : vector<16x192xf32> to vector<16x128xf32>
    %282 = arith.addf %280, %281 : vector<16x128xf32>
    %283 = arith.negf %282 : vector<16x128xf32>
    %284 = math.exp %283 : vector<16x128xf32>
    %cst_105 = arith.constant 1.000000e+00 : f32
    %285 = vector.broadcast %cst_105 : f32 to vector<16x128xf32>
    %286 = arith.addf %285, %284 : vector<16x128xf32>
    %287 = arith.divf %285, %286 : vector<16x128xf32>
    %288 = vector.extract_strided_slice %287 {offsets = [0, 0], sizes = [16, 64], strides = [1, 1]} : vector<16x128xf32> to vector<16x64xf32>
    %289 = vector.extract_strided_slice %287 {offsets = [0, 64], sizes = [16, 64], strides = [1, 1]} : vector<16x128xf32> to vector<16x64xf32>
    %290 = vector.extract_strided_slice %276 {offsets = [0, 128], sizes = [16, 64], strides = [1, 1]} : vector<16x192xf32> to vector<16x64xf32>
    %291 = vector.extract_strided_slice %279 {offsets = [0, 128], sizes = [16, 64], strides = [1, 1]} : vector<16x192xf32> to vector<16x64xf32>
    %292 = arith.mulf %288, %291 : vector<16x64xf32>
    %293 = arith.addf %290, %292 : vector<16x64xf32>
    %294 = math.tanh %293 : vector<16x64xf32>
    %cst_106 = arith.constant 1.000000e+00 : f32
    %295 = vector.broadcast %cst_106 : f32 to vector<16x64xf32>
    %296 = arith.subf %295, %289 : vector<16x64xf32>
    %297 = arith.mulf %296, %294 : vector<16x64xf32>
    %298 = arith.mulf %289, %271 : vector<16x64xf32>
    %299 = arith.addf %297, %298 : vector<16x64xf32>
    %c6_107 = arith.constant 6 : index
    %c0_108 = arith.constant 0 : index
    %c0_109 = arith.constant 0 : index
    %300 = vector.load %arg17[%c6_107, %c0_108, %c0_109] : memref<8x16x64xf32, #tpu.memory_space<vmem>>, vector<1x16x64xf32>
    %301 = vector.shape_cast %300 : vector<1x16x64xf32> to vector<16x64xf32>
    %302 = vector.shape_cast %299 : vector<16x64xf32> to vector<1x16x64xf32>
    tpu.vector_store %arg17[%c6_107, %c0_108, %c0_109], %302 {strides = array<i32>} : memref<8x16x64xf32, #tpu.memory_space<vmem>>, vector<1x16x64xf32>,
    %c5_110 = arith.constant 5 : index
    %c0_111 = arith.constant 0 : index
    %c0_112 = arith.constant 0 : index
    %303 = vector.load %arg15[%c5_110, %c0_111, %c0_112] : memref<8x16x192xf32, #tpu.memory_space<vmem>>, vector<1x16x192xf32>
    %304 = vector.shape_cast %303 : vector<1x16x192xf32> to vector<16x192xf32>
    %cst_113 = arith.constant dense<0.000000e+00> : vector<16x192xf32>
    %305 = tpu.matmul %299, %19, %cst_113 {dimension_numbers = #tpu.dot_dimension_numbers<[1], [0], [0], [1], [0, 0, 1, 1], [], []>} : vector<16x64xf32>, vector<64x192xf32>, vector<16x192xf32> -> vector<16x192xf32>
    %306 = vector.broadcast %20 : vector<1x192xf32> to vector<16x192xf32>
    %307 = arith.addf %305, %306 : vector<16x192xf32>
    %308 = vector.extract_strided_slice %304 {offsets = [0, 0], sizes = [16, 128], strides = [1, 1]} : vector<16x192xf32> to vector<16x128xf32>
    %309 = vector.extract_strided_slice %307 {offsets = [0, 0], sizes = [16, 128], strides = [1, 1]} : vector<16x192xf32> to vector<16x128xf32>
    %310 = arith.addf %308, %309 : vector<16x128xf32>
    %311 = arith.negf %310 : vector<16x128xf32>
    %312 = math.exp %311 : vector<16x128xf32>
    %cst_114 = arith.constant 1.000000e+00 : f32
    %313 = vector.broadcast %cst_114 : f32 to vector<16x128xf32>
    %314 = arith.addf %313, %312 : vector<16x128xf32>
    %315 = arith.divf %313, %314 : vector<16x128xf32>
    %316 = vector.extract_strided_slice %315 {offsets = [0, 0], sizes = [16, 64], strides = [1, 1]} : vector<16x128xf32> to vector<16x64xf32>
    %317 = vector.extract_strided_slice %315 {offsets = [0, 64], sizes = [16, 64], strides = [1, 1]} : vector<16x128xf32> to vector<16x64xf32>
    %318 = vector.extract_strided_slice %304 {offsets = [0, 128], sizes = [16, 64], strides = [1, 1]} : vector<16x192xf32> to vector<16x64xf32>
    %319 = vector.extract_strided_slice %307 {offsets = [0, 128], sizes = [16, 64], strides = [1, 1]} : vector<16x192xf32> to vector<16x64xf32>
    %320 = arith.mulf %316, %319 : vector<16x64xf32>
    %321 = arith.addf %318, %320 : vector<16x64xf32>
    %322 = math.tanh %321 : vector<16x64xf32>
    %cst_115 = arith.constant 1.000000e+00 : f32
    %323 = vector.broadcast %cst_115 : f32 to vector<16x64xf32>
    %324 = arith.subf %323, %317 : vector<16x64xf32>
    %325 = arith.mulf %324, %322 : vector<16x64xf32>
    %326 = arith.mulf %317, %299 : vector<16x64xf32>
    %327 = arith.addf %325, %326 : vector<16x64xf32>
    %c5_116 = arith.constant 5 : index
    %c0_117 = arith.constant 0 : index
    %c0_118 = arith.constant 0 : index
    %328 = vector.load %arg17[%c5_116, %c0_117, %c0_118] : memref<8x16x64xf32, #tpu.memory_space<vmem>>, vector<1x16x64xf32>
    %329 = vector.shape_cast %328 : vector<1x16x64xf32> to vector<16x64xf32>
    %330 = vector.shape_cast %327 : vector<16x64xf32> to vector<1x16x64xf32>
    tpu.vector_store %arg17[%c5_116, %c0_117, %c0_118], %330 {strides = array<i32>} : memref<8x16x64xf32, #tpu.memory_space<vmem>>, vector<1x16x64xf32>,
    %c4_119 = arith.constant 4 : index
    %c0_120 = arith.constant 0 : index
    %c0_121 = arith.constant 0 : index
    %331 = vector.load %arg15[%c4_119, %c0_120, %c0_121] : memref<8x16x192xf32, #tpu.memory_space<vmem>>, vector<1x16x192xf32>
    %332 = vector.shape_cast %331 : vector<1x16x192xf32> to vector<16x192xf32>
    %cst_122 = arith.constant dense<0.000000e+00> : vector<16x192xf32>
    %333 = tpu.matmul %327, %19, %cst_122 {dimension_numbers = #tpu.dot_dimension_numbers<[1], [0], [0], [1], [0, 0, 1, 1], [], []>} : vector<16x64xf32>, vector<64x192xf32>, vector<16x192xf32> -> vector<16x192xf32>
    %334 = vector.broadcast %20 : vector<1x192xf32> to vector<16x192xf32>
    %335 = arith.addf %333, %334 : vector<16x192xf32>
    %336 = vector.extract_strided_slice %332 {offsets = [0, 0], sizes = [16, 128], strides = [1, 1]} : vector<16x192xf32> to vector<16x128xf32>
    %337 = vector.extract_strided_slice %335 {offsets = [0, 0], sizes = [16, 128], strides = [1, 1]} : vector<16x192xf32> to vector<16x128xf32>
    %338 = arith.addf %336, %337 : vector<16x128xf32>
    %339 = arith.negf %338 : vector<16x128xf32>
    %340 = math.exp %339 : vector<16x128xf32>
    %cst_123 = arith.constant 1.000000e+00 : f32
    %341 = vector.broadcast %cst_123 : f32 to vector<16x128xf32>
    %342 = arith.addf %341, %340 : vector<16x128xf32>
    %343 = arith.divf %341, %342 : vector<16x128xf32>
    %344 = vector.extract_strided_slice %343 {offsets = [0, 0], sizes = [16, 64], strides = [1, 1]} : vector<16x128xf32> to vector<16x64xf32>
    %345 = vector.extract_strided_slice %343 {offsets = [0, 64], sizes = [16, 64], strides = [1, 1]} : vector<16x128xf32> to vector<16x64xf32>
    %346 = vector.extract_strided_slice %332 {offsets = [0, 128], sizes = [16, 64], strides = [1, 1]} : vector<16x192xf32> to vector<16x64xf32>
    %347 = vector.extract_strided_slice %335 {offsets = [0, 128], sizes = [16, 64], strides = [1, 1]} : vector<16x192xf32> to vector<16x64xf32>
    %348 = arith.mulf %344, %347 : vector<16x64xf32>
    %349 = arith.addf %346, %348 : vector<16x64xf32>
    %350 = math.tanh %349 : vector<16x64xf32>
    %cst_124 = arith.constant 1.000000e+00 : f32
    %351 = vector.broadcast %cst_124 : f32 to vector<16x64xf32>
    %352 = arith.subf %351, %345 : vector<16x64xf32>
    %353 = arith.mulf %352, %350 : vector<16x64xf32>
    %354 = arith.mulf %345, %327 : vector<16x64xf32>
    %355 = arith.addf %353, %354 : vector<16x64xf32>
    %c4_125 = arith.constant 4 : index
    %c0_126 = arith.constant 0 : index
    %c0_127 = arith.constant 0 : index
    %356 = vector.load %arg17[%c4_125, %c0_126, %c0_127] : memref<8x16x64xf32, #tpu.memory_space<vmem>>, vector<1x16x64xf32>
    %357 = vector.shape_cast %356 : vector<1x16x64xf32> to vector<16x64xf32>
    %358 = vector.shape_cast %355 : vector<16x64xf32> to vector<1x16x64xf32>
    tpu.vector_store %arg17[%c4_125, %c0_126, %c0_127], %358 {strides = array<i32>} : memref<8x16x64xf32, #tpu.memory_space<vmem>>, vector<1x16x64xf32>,
    %c3_128 = arith.constant 3 : index
    %c0_129 = arith.constant 0 : index
    %c0_130 = arith.constant 0 : index
    %359 = vector.load %arg15[%c3_128, %c0_129, %c0_130] : memref<8x16x192xf32, #tpu.memory_space<vmem>>, vector<1x16x192xf32>
    %360 = vector.shape_cast %359 : vector<1x16x192xf32> to vector<16x192xf32>
    %cst_131 = arith.constant dense<0.000000e+00> : vector<16x192xf32>
    %361 = tpu.matmul %355, %19, %cst_131 {dimension_numbers = #tpu.dot_dimension_numbers<[1], [0], [0], [1], [0, 0, 1, 1], [], []>} : vector<16x64xf32>, vector<64x192xf32>, vector<16x192xf32> -> vector<16x192xf32>
    %362 = vector.broadcast %20 : vector<1x192xf32> to vector<16x192xf32>
    %363 = arith.addf %361, %362 : vector<16x192xf32>
    %364 = vector.extract_strided_slice %360 {offsets = [0, 0], sizes = [16, 128], strides = [1, 1]} : vector<16x192xf32> to vector<16x128xf32>
    %365 = vector.extract_strided_slice %363 {offsets = [0, 0], sizes = [16, 128], strides = [1, 1]} : vector<16x192xf32> to vector<16x128xf32>
    %366 = arith.addf %364, %365 : vector<16x128xf32>
    %367 = arith.negf %366 : vector<16x128xf32>
    %368 = math.exp %367 : vector<16x128xf32>
    %cst_132 = arith.constant 1.000000e+00 : f32
    %369 = vector.broadcast %cst_132 : f32 to vector<16x128xf32>
    %370 = arith.addf %369, %368 : vector<16x128xf32>
    %371 = arith.divf %369, %370 : vector<16x128xf32>
    %372 = vector.extract_strided_slice %371 {offsets = [0, 0], sizes = [16, 64], strides = [1, 1]} : vector<16x128xf32> to vector<16x64xf32>
    %373 = vector.extract_strided_slice %371 {offsets = [0, 64], sizes = [16, 64], strides = [1, 1]} : vector<16x128xf32> to vector<16x64xf32>
    %374 = vector.extract_strided_slice %360 {offsets = [0, 128], sizes = [16, 64], strides = [1, 1]} : vector<16x192xf32> to vector<16x64xf32>
    %375 = vector.extract_strided_slice %363 {offsets = [0, 128], sizes = [16, 64], strides = [1, 1]} : vector<16x192xf32> to vector<16x64xf32>
    %376 = arith.mulf %372, %375 : vector<16x64xf32>
    %377 = arith.addf %374, %376 : vector<16x64xf32>
    %378 = math.tanh %377 : vector<16x64xf32>
    %cst_133 = arith.constant 1.000000e+00 : f32
    %379 = vector.broadcast %cst_133 : f32 to vector<16x64xf32>
    %380 = arith.subf %379, %373 : vector<16x64xf32>
    %381 = arith.mulf %380, %378 : vector<16x64xf32>
    %382 = arith.mulf %373, %355 : vector<16x64xf32>
    %383 = arith.addf %381, %382 : vector<16x64xf32>
    %c3_134 = arith.constant 3 : index
    %c0_135 = arith.constant 0 : index
    %c0_136 = arith.constant 0 : index
    %384 = vector.load %arg17[%c3_134, %c0_135, %c0_136] : memref<8x16x64xf32, #tpu.memory_space<vmem>>, vector<1x16x64xf32>
    %385 = vector.shape_cast %384 : vector<1x16x64xf32> to vector<16x64xf32>
    %386 = vector.shape_cast %383 : vector<16x64xf32> to vector<1x16x64xf32>
    tpu.vector_store %arg17[%c3_134, %c0_135, %c0_136], %386 {strides = array<i32>} : memref<8x16x64xf32, #tpu.memory_space<vmem>>, vector<1x16x64xf32>,
    %c2_137 = arith.constant 2 : index
    %c0_138 = arith.constant 0 : index
    %c0_139 = arith.constant 0 : index
    %387 = vector.load %arg15[%c2_137, %c0_138, %c0_139] : memref<8x16x192xf32, #tpu.memory_space<vmem>>, vector<1x16x192xf32>
    %388 = vector.shape_cast %387 : vector<1x16x192xf32> to vector<16x192xf32>
    %cst_140 = arith.constant dense<0.000000e+00> : vector<16x192xf32>
    %389 = tpu.matmul %383, %19, %cst_140 {dimension_numbers = #tpu.dot_dimension_numbers<[1], [0], [0], [1], [0, 0, 1, 1], [], []>} : vector<16x64xf32>, vector<64x192xf32>, vector<16x192xf32> -> vector<16x192xf32>
    %390 = vector.broadcast %20 : vector<1x192xf32> to vector<16x192xf32>
    %391 = arith.addf %389, %390 : vector<16x192xf32>
    %392 = vector.extract_strided_slice %388 {offsets = [0, 0], sizes = [16, 128], strides = [1, 1]} : vector<16x192xf32> to vector<16x128xf32>
    %393 = vector.extract_strided_slice %391 {offsets = [0, 0], sizes = [16, 128], strides = [1, 1]} : vector<16x192xf32> to vector<16x128xf32>
    %394 = arith.addf %392, %393 : vector<16x128xf32>
    %395 = arith.negf %394 : vector<16x128xf32>
    %396 = math.exp %395 : vector<16x128xf32>
    %cst_141 = arith.constant 1.000000e+00 : f32
    %397 = vector.broadcast %cst_141 : f32 to vector<16x128xf32>
    %398 = arith.addf %397, %396 : vector<16x128xf32>
    %399 = arith.divf %397, %398 : vector<16x128xf32>
    %400 = vector.extract_strided_slice %399 {offsets = [0, 0], sizes = [16, 64], strides = [1, 1]} : vector<16x128xf32> to vector<16x64xf32>
    %401 = vector.extract_strided_slice %399 {offsets = [0, 64], sizes = [16, 64], strides = [1, 1]} : vector<16x128xf32> to vector<16x64xf32>
    %402 = vector.extract_strided_slice %388 {offsets = [0, 128], sizes = [16, 64], strides = [1, 1]} : vector<16x192xf32> to vector<16x64xf32>
    %403 = vector.extract_strided_slice %391 {offsets = [0, 128], sizes = [16, 64], strides = [1, 1]} : vector<16x192xf32> to vector<16x64xf32>
    %404 = arith.mulf %400, %403 : vector<16x64xf32>
    %405 = arith.addf %402, %404 : vector<16x64xf32>
    %406 = math.tanh %405 : vector<16x64xf32>
    %cst_142 = arith.constant 1.000000e+00 : f32
    %407 = vector.broadcast %cst_142 : f32 to vector<16x64xf32>
    %408 = arith.subf %407, %401 : vector<16x64xf32>
    %409 = arith.mulf %408, %406 : vector<16x64xf32>
    %410 = arith.mulf %401, %383 : vector<16x64xf32>
    %411 = arith.addf %409, %410 : vector<16x64xf32>
    %c2_143 = arith.constant 2 : index
    %c0_144 = arith.constant 0 : index
    %c0_145 = arith.constant 0 : index
    %412 = vector.load %arg17[%c2_143, %c0_144, %c0_145] : memref<8x16x64xf32, #tpu.memory_space<vmem>>, vector<1x16x64xf32>
    %413 = vector.shape_cast %412 : vector<1x16x64xf32> to vector<16x64xf32>
    %414 = vector.shape_cast %411 : vector<16x64xf32> to vector<1x16x64xf32>
    tpu.vector_store %arg17[%c2_143, %c0_144, %c0_145], %414 {strides = array<i32>} : memref<8x16x64xf32, #tpu.memory_space<vmem>>, vector<1x16x64xf32>,
    %c1_146 = arith.constant 1 : index
    %c0_147 = arith.constant 0 : index
    %c0_148 = arith.constant 0 : index
    %415 = vector.load %arg15[%c1_146, %c0_147, %c0_148] : memref<8x16x192xf32, #tpu.memory_space<vmem>>, vector<1x16x192xf32>
    %416 = vector.shape_cast %415 : vector<1x16x192xf32> to vector<16x192xf32>
    %cst_149 = arith.constant dense<0.000000e+00> : vector<16x192xf32>
    %417 = tpu.matmul %411, %19, %cst_149 {dimension_numbers = #tpu.dot_dimension_numbers<[1], [0], [0], [1], [0, 0, 1, 1], [], []>} : vector<16x64xf32>, vector<64x192xf32>, vector<16x192xf32> -> vector<16x192xf32>
    %418 = vector.broadcast %20 : vector<1x192xf32> to vector<16x192xf32>
    %419 = arith.addf %417, %418 : vector<16x192xf32>
    %420 = vector.extract_strided_slice %416 {offsets = [0, 0], sizes = [16, 128], strides = [1, 1]} : vector<16x192xf32> to vector<16x128xf32>
    %421 = vector.extract_strided_slice %419 {offsets = [0, 0], sizes = [16, 128], strides = [1, 1]} : vector<16x192xf32> to vector<16x128xf32>
    %422 = arith.addf %420, %421 : vector<16x128xf32>
    %423 = arith.negf %422 : vector<16x128xf32>
    %424 = math.exp %423 : vector<16x128xf32>
    %cst_150 = arith.constant 1.000000e+00 : f32
    %425 = vector.broadcast %cst_150 : f32 to vector<16x128xf32>
    %426 = arith.addf %425, %424 : vector<16x128xf32>
    %427 = arith.divf %425, %426 : vector<16x128xf32>
    %428 = vector.extract_strided_slice %427 {offsets = [0, 0], sizes = [16, 64], strides = [1, 1]} : vector<16x128xf32> to vector<16x64xf32>
    %429 = vector.extract_strided_slice %427 {offsets = [0, 64], sizes = [16, 64], strides = [1, 1]} : vector<16x128xf32> to vector<16x64xf32>
    %430 = vector.extract_strided_slice %416 {offsets = [0, 128], sizes = [16, 64], strides = [1, 1]} : vector<16x192xf32> to vector<16x64xf32>
    %431 = vector.extract_strided_slice %419 {offsets = [0, 128], sizes = [16, 64], strides = [1, 1]} : vector<16x192xf32> to vector<16x64xf32>
    %432 = arith.mulf %428, %431 : vector<16x64xf32>
    %433 = arith.addf %430, %432 : vector<16x64xf32>
    %434 = math.tanh %433 : vector<16x64xf32>
    %cst_151 = arith.constant 1.000000e+00 : f32
    %435 = vector.broadcast %cst_151 : f32 to vector<16x64xf32>
    %436 = arith.subf %435, %429 : vector<16x64xf32>
    %437 = arith.mulf %436, %434 : vector<16x64xf32>
    %438 = arith.mulf %429, %411 : vector<16x64xf32>
    %439 = arith.addf %437, %438 : vector<16x64xf32>
    %c1_152 = arith.constant 1 : index
    %c0_153 = arith.constant 0 : index
    %c0_154 = arith.constant 0 : index
    %440 = vector.load %arg17[%c1_152, %c0_153, %c0_154] : memref<8x16x64xf32, #tpu.memory_space<vmem>>, vector<1x16x64xf32>
    %441 = vector.shape_cast %440 : vector<1x16x64xf32> to vector<16x64xf32>
    %442 = vector.shape_cast %439 : vector<16x64xf32> to vector<1x16x64xf32>
    tpu.vector_store %arg17[%c1_152, %c0_153, %c0_154], %442 {strides = array<i32>} : memref<8x16x64xf32, #tpu.memory_space<vmem>>, vector<1x16x64xf32>,
    %c0_155 = arith.constant 0 : index
    %c0_156 = arith.constant 0 : index
    %c0_157 = arith.constant 0 : index
    %443 = vector.load %arg15[%c0_155, %c0_156, %c0_157] : memref<8x16x192xf32, #tpu.memory_space<vmem>>, vector<1x16x192xf32>
    %444 = vector.shape_cast %443 : vector<1x16x192xf32> to vector<16x192xf32>
    %cst_158 = arith.constant dense<0.000000e+00> : vector<16x192xf32>
    %445 = tpu.matmul %439, %19, %cst_158 {dimension_numbers = #tpu.dot_dimension_numbers<[1], [0], [0], [1], [0, 0, 1, 1], [], []>} : vector<16x64xf32>, vector<64x192xf32>, vector<16x192xf32> -> vector<16x192xf32>
    %446 = vector.broadcast %20 : vector<1x192xf32> to vector<16x192xf32>
    %447 = arith.addf %445, %446 : vector<16x192xf32>
    %448 = vector.extract_strided_slice %444 {offsets = [0, 0], sizes = [16, 128], strides = [1, 1]} : vector<16x192xf32> to vector<16x128xf32>
    %449 = vector.extract_strided_slice %447 {offsets = [0, 0], sizes = [16, 128], strides = [1, 1]} : vector<16x192xf32> to vector<16x128xf32>
    %450 = arith.addf %448, %449 : vector<16x128xf32>
    %451 = arith.negf %450 : vector<16x128xf32>
    %452 = math.exp %451 : vector<16x128xf32>
    %cst_159 = arith.constant 1.000000e+00 : f32
    %453 = vector.broadcast %cst_159 : f32 to vector<16x128xf32>
    %454 = arith.addf %453, %452 : vector<16x128xf32>
    %455 = arith.divf %453, %454 : vector<16x128xf32>
    %456 = vector.extract_strided_slice %455 {offsets = [0, 0], sizes = [16, 64], strides = [1, 1]} : vector<16x128xf32> to vector<16x64xf32>
    %457 = vector.extract_strided_slice %455 {offsets = [0, 64], sizes = [16, 64], strides = [1, 1]} : vector<16x128xf32> to vector<16x64xf32>
    %458 = vector.extract_strided_slice %444 {offsets = [0, 128], sizes = [16, 64], strides = [1, 1]} : vector<16x192xf32> to vector<16x64xf32>
    %459 = vector.extract_strided_slice %447 {offsets = [0, 128], sizes = [16, 64], strides = [1, 1]} : vector<16x192xf32> to vector<16x64xf32>
    %460 = arith.mulf %456, %459 : vector<16x64xf32>
    %461 = arith.addf %458, %460 : vector<16x64xf32>
    %462 = math.tanh %461 : vector<16x64xf32>
    %cst_160 = arith.constant 1.000000e+00 : f32
    %463 = vector.broadcast %cst_160 : f32 to vector<16x64xf32>
    %464 = arith.subf %463, %457 : vector<16x64xf32>
    %465 = arith.mulf %464, %462 : vector<16x64xf32>
    %466 = arith.mulf %457, %439 : vector<16x64xf32>
    %467 = arith.addf %465, %466 : vector<16x64xf32>
    %c0_161 = arith.constant 0 : index
    %c0_162 = arith.constant 0 : index
    %c0_163 = arith.constant 0 : index
    %468 = vector.load %arg17[%c0_161, %c0_162, %c0_163] : memref<8x16x64xf32, #tpu.memory_space<vmem>>, vector<1x16x64xf32>
    %469 = vector.shape_cast %468 : vector<1x16x64xf32> to vector<16x64xf32>
    %470 = vector.shape_cast %467 : vector<16x64xf32> to vector<1x16x64xf32>
    tpu.vector_store %arg17[%c0_161, %c0_162, %c0_163], %470 {strides = array<i32>} : memref<8x16x64xf32, #tpu.memory_space<vmem>>, vector<1x16x64xf32>,
    %c0_164 = arith.constant 0 : index
    %c0_165 = arith.constant 0 : index
    %c0_166 = arith.constant 0 : index
    %471 = vector.load %arg16[%c0_164, %c0_165, %c0_166] : memref<8x16x64xf32, #tpu.memory_space<vmem>>, vector<8x16x64xf32>
    %c0_167 = arith.constant 0 : index
    %c0_168 = arith.constant 0 : index
    %c0_169 = arith.constant 0 : index
    %472 = vector.load %arg17[%c0_167, %c0_168, %c0_169] : memref<8x16x64xf32, #tpu.memory_space<vmem>>, vector<8x16x64xf32>
    %473 = tpu.concatenate %471, %472 in 2 : vector<8x16x64xf32>, vector<8x16x64xf32> -> vector<8x16x128xf32>
    %474 = vector.shape_cast %473 : vector<8x16x128xf32> to vector<128x128xf32>
    %c0_170 = arith.constant 0 : index
    %c0_171 = arith.constant 0 : index
    %475 = vector.load %arg10[%c0_170, %c0_171] : memref<128x128xf32, #tpu.memory_space<vmem>>, vector<128x128xf32>
    %cst_172 = arith.constant dense<0.000000e+00> : vector<128x128xf32>
    %476 = tpu.matmul %474, %475, %cst_172 {dimension_numbers = #tpu.dot_dimension_numbers<[1], [0], [0], [1], [0, 0, 1, 1], [], []>} : vector<128x128xf32>, vector<128x128xf32>, vector<128x128xf32> -> vector<128x128xf32>
    %c0_173 = arith.constant 0 : index
    %c0_174 = arith.constant 0 : index
    %477 = vector.load %arg11[%c0_173, %c0_174] : memref<1x128xf32, #tpu.memory_space<vmem>>, vector<1x128xf32>
    %478 = vector.broadcast %477 : vector<1x128xf32> to vector<128x128xf32>
    %479 = arith.addf %476, %478 : vector<128x128xf32>
    %480 = math.tanh %479 : vector<128x128xf32>
    %c0_175 = arith.constant 0 : index
    %c0_176 = arith.constant 0 : index
    %481 = vector.load %arg12[%c0_175, %c0_176] : memref<1x128xf32, #tpu.memory_space<vmem>>, vector<1x128xf32>
    %482 = vector.broadcast %481 : vector<1x128xf32> to vector<128x128xf32>
    %483 = arith.mulf %480, %482 : vector<128x128xf32>
    %cst_177 = arith.constant dense<0.000000e+00> : vector<128xf32>
    %484 = vector.multi_reduction <add>, %483, %cst_177 [1] : vector<128x128xf32> to vector<128xf32>
    %485 = vector.shape_cast %484 : vector<128xf32> to vector<128x1xf32>
    %486 = vector.shape_cast %485 : vector<128x1xf32> to vector<8x16x1xf32>
    %cst_178 = arith.constant dense<0xFF800000> : vector<16x1xf32>
    %487 = vector.multi_reduction <maximumf>, %486, %cst_178 [0] : vector<8x16x1xf32> to vector<16x1xf32>
    %488 = vector.shape_cast %487 : vector<16x1xf32> to vector<1x16x1xf32>
    %489 = vector.broadcast %488 : vector<1x16x1xf32> to vector<8x16x1xf32>
    %490 = arith.subf %486, %489 : vector<8x16x1xf32>
    %491 = math.exp %490 : vector<8x16x1xf32>
    %cst_179 = arith.constant dense<0.000000e+00> : vector<16x1xf32>
    %492 = vector.multi_reduction <add>, %491, %cst_179 [0] : vector<8x16x1xf32> to vector<16x1xf32>
    %493 = vector.shape_cast %492 : vector<16x1xf32> to vector<1x16x1xf32>
    %494 = vector.broadcast %493 : vector<1x16x1xf32> to vector<8x16x1xf32>
    %495 = arith.divf %491, %494 : vector<8x16x1xf32>
    %496 = vector.broadcast %495 : vector<8x16x1xf32> to vector<8x16x128xf32>
    %497 = arith.mulf %473, %496 : vector<8x16x128xf32>
    %cst_180 = arith.constant dense<0.000000e+00> : vector<16x128xf32>
    %498 = vector.multi_reduction <add>, %497, %cst_180 [0] : vector<8x16x128xf32> to vector<16x128xf32>
    %c0_181 = arith.constant 0 : index
    %c0_182 = arith.constant 0 : index
    %499 = vector.load %arg13[%c0_181, %c0_182] : memref<16x128xf32, #tpu.memory_space<vmem>>, vector<16x128xf32>
    tpu.vector_store %arg13[%c0_181, %c0_182], %498 {strides = array<i32>} : memref<16x128xf32, #tpu.memory_space<vmem>>, vector<16x128xf32>,
    return
  }
  func.func @transform_0(%arg0: i32) -> (i32, i32, i32) {
    %c0_i32 = arith.constant 0 : i32
    %c0_i32_0 = arith.constant 0 : i32
    %c0_i32_1 = arith.constant 0 : i32
    return %c0_i32, %arg0, %c0_i32_0 : i32, i32, i32
  }
  func.func @transform_1(%arg0: i32) -> (i32, i32) {
    %c0_i32 = arith.constant 0 : i32
    %c0_i32_0 = arith.constant 0 : i32
    %c0_i32_1 = arith.constant 0 : i32
    return %c0_i32, %c0_i32_0 : i32, i32
  }
  func.func @transform_2(%arg0: i32) -> (i32, i32) {
    %c0_i32 = arith.constant 0 : i32
    %c0_i32_0 = arith.constant 0 : i32
    %c0_i32_1 = arith.constant 0 : i32
    return %c0_i32, %c0_i32_0 : i32, i32
  }
  func.func @transform_3(%arg0: i32) -> (i32, i32) {
    %c0_i32 = arith.constant 0 : i32
    %c0_i32_0 = arith.constant 0 : i32
    %c0_i32_1 = arith.constant 0 : i32
    return %c0_i32, %c0_i32_0 : i32, i32
  }
  func.func @transform_4(%arg0: i32) -> (i32, i32) {
    %c0_i32 = arith.constant 0 : i32
    %c0_i32_0 = arith.constant 0 : i32
    %c0_i32_1 = arith.constant 0 : i32
    return %c0_i32, %c0_i32_0 : i32, i32
  }
  func.func @transform_5(%arg0: i32) -> (i32, i32) {
    %c0_i32 = arith.constant 0 : i32
    %c0_i32_0 = arith.constant 0 : i32
    %c0_i32_1 = arith.constant 0 : i32
    return %c0_i32, %c0_i32_0 : i32, i32
  }
  func.func @transform_6(%arg0: i32) -> (i32, i32) {
    %c0_i32 = arith.constant 0 : i32
    %c0_i32_0 = arith.constant 0 : i32
    %c0_i32_1 = arith.constant 0 : i32
    return %c0_i32, %c0_i32_0 : i32, i32
  }
  func.func @transform_7(%arg0: i32) -> (i32, i32) {
    %c0_i32 = arith.constant 0 : i32
    %c0_i32_0 = arith.constant 0 : i32
    %c0_i32_1 = arith.constant 0 : i32
    return %c0_i32, %c0_i32_0 : i32, i32
  }
  func.func @transform_8(%arg0: i32) -> (i32, i32) {
    %c0_i32 = arith.constant 0 : i32
    %c0_i32_0 = arith.constant 0 : i32
    %c0_i32_1 = arith.constant 0 : i32
    return %c0_i32, %c0_i32_0 : i32, i32
  }
  func.func @transform_9(%arg0: i32) -> (i32, i32) {
    %c0_i32 = arith.constant 0 : i32
    %c0_i32_0 = arith.constant 0 : i32
    %c0_i32_1 = arith.constant 0 : i32
    return %c0_i32, %c0_i32_0 : i32, i32
  }
  func.func @transform_10(%arg0: i32) -> (i32, i32) {
    %c0_i32 = arith.constant 0 : i32
    %c0_i32_0 = arith.constant 0 : i32
    %c0_i32_1 = arith.constant 0 : i32
    return %c0_i32, %c0_i32_0 : i32, i32
  }
  func.func @transform_11(%arg0: i32) -> (i32, i32) {
    %c0_i32 = arith.constant 0 : i32
    %c0_i32_0 = arith.constant 0 : i32
    %c0_i32_1 = arith.constant 0 : i32
    return %c0_i32, %c0_i32_0 : i32, i32
  }
  func.func @transform_12(%arg0: i32) -> (i32, i32) {
    %c0_i32 = arith.constant 0 : i32
    %c0_i32_0 = arith.constant 0 : i32
    return %arg0, %c0_i32 : i32, i32
  }
}

</mosaic_0001>

<llo_original>
// kernel: tpu_custom_call.1
$region0: #{tpu_custom_call.1}
  #allocation0 [shape = 'u32[]', space=smem, size = 0x4, offset = 0x4, fixed_abs, tag = 'smem constant byte address 0x4 - core index']
  #allocation1 [shape = 'u32[72,128]{1,0:T(1,128)}', space=vmem, size = 0x9000, scoped, tag = 'internal scratch']
  #allocation2 [shape = 'f32[8,16,192]{2,1,0:T(8,128)}', space=vmem, size = 0x20000, scoped, tag = 'scratch operand']
  #allocation3 [shape = 'f32[8,16,192]{2,1,0:T(8,128)}', space=vmem, size = 0x20000, scoped, tag = 'scratch operand']
  #allocation4 [shape = 'f32[8,16,64]{2,1,0:T(8,128)}', space=vmem, size = 0x10000, scoped, tag = 'scratch operand']
  #allocation5 [shape = 'f32[8,16,64]{2,1,0:T(8,128)}', space=vmem, size = 0x10000, scoped, tag = 'scratch operand']
  %s0 = inlined_call_operand.vmem [shape: f32[8,32,300], index: 0, kind: input, shape index: {}]
  %s1 = inlined_call_operand.vmem [shape: bf16[300,192], index: 1, kind: input, shape index: {}]
  %s2 = inlined_call_operand.vmem [shape: bf16[300,192], index: 2, kind: input, shape index: {}]
  %s3 = inlined_call_operand.hbm [shape: f32[1,192], index: 3, kind: input, shape index: {}]
  %s4 = inlined_call_operand.hbm [shape: f32[1,192], index: 4, kind: input, shape index: {}]
  %s5 = inlined_call_operand.vmem [shape: f32[64,192], index: 5, kind: input, shape index: {}]
  %s6 = inlined_call_operand.hbm [shape: f32[64,192], index: 6, kind: input, shape index: {}]
  %s7 = inlined_call_operand.hbm [shape: f32[1,192], index: 7, kind: input, shape index: {}]
  %s8 = inlined_call_operand.hbm [shape: f32[1,192], index: 8, kind: input, shape index: {}]
  %s9 = inlined_call_operand.hbm [shape: f32[128,128], index: 9, kind: input, shape index: {}]
  %s10 = inlined_call_operand.hbm [shape: f32[1,128], index: 10, kind: input, shape index: {}]
  %s11 = inlined_call_operand.hbm [shape: f32[1,128], index: 11, kind: input, shape index: {}]
  %s12 = inlined_call_operand.hbm [shape: f32[32,128], index: 12, kind: output, shape index: {}]
  %s13 = sld [smem:[#allocation0]]
  $region136: #{tpu_custom_call.1} parent=0
    _
  %s15 = ssub.s32 1, %s13
  %s16 = scalar_select 0, %s15, %s13
  $region1: #{tpu_custom_call.1} parent=0
    #allocation6 [shape = 'u8[393216]{0}', space=vmem, size = 0x60000, scoped, tag = 'input window, operand 0']
    #allocation7 [shape = 'u8[1024]{0}', space=vmem, size = 0x400, scoped, tag = 'input window, operand 3, single buffered']
    #allocation8 [shape = 's32[2]{0}', space=sflag, size = 0x8, scoped, tag = 'scoped memory for tpu_custom_call.1']
    #allocation9 [shape = 's32[2]{0}', space=sflag, size = 0x8, scoped, tag = 'scoped memory for tpu_custom_call.1']
    #allocation10 [shape = 'u8[1024]{0}', space=vmem, size = 0x400, scoped, tag = 'input window, operand 4, single buffered']
    #allocation11 [shape = 's32[1]{0}', space=sflag, size = 0x4, scoped, tag = 'scoped memory for tpu_custom_call.1']
    #allocation12 [shape = 'u8[65536]{0}', space=vmem, size = 0x10000, scoped, tag = 'input window, operand 6, single buffered']
    #allocation13 [shape = 'u8[1024]{0}', space=vmem, size = 0x400, scoped, tag = 'input window, operand 7, single buffered']
    #allocation14 [shape = 's32[1]{0}', space=sflag, size = 0x4, scoped, tag = 'scoped memory for tpu_custom_call.1']
    #allocation15 [shape = 'u8[1024]{0}', space=vmem, size = 0x400, scoped, tag = 'input window, operand 8, single buffered']
    #allocation16 [shape = 'u8[65536]{0}', space=vmem, size = 0x10000, scoped, tag = 'input window, operand 9, single buffered']
    #allocation17 [shape = 's32[1]{0}', space=sflag, size = 0x4, scoped, tag = 'scoped memory for tpu_custom_call.1']
    #allocation18 [shape = 'u8[512]{0}', space=vmem, size = 0x400, scoped, tag = 'input window, operand 10, single buffered']
    #allocation19 [shape = 'u8[512]{0}', space=vmem, size = 0x400, scoped, tag = 'input window, operand 11, single buffered']
    #allocation20 [shape = 's32[1]{0}', space=sflag, size = 0x4, scoped, tag = 'scoped memory for tpu_custom_call.1']
    #allocation21 [shape = 'u8[16384]{0}', space=vmem, size = 0x4000, scoped, tag = 'output window, operand 0']
    %17 = vsyncpa [#allocation8], 0
    %18 = vsyncpa [#allocation11], 0
    %19 = vsyncpa [#allocation14], 0
    %20 = vsyncpa [#allocation17], 0
    %21 = vsyncpa [#allocation20], 0
    %22 = vsyncpa [#allocation9], 0
    %s23 = scalar_lea.sflag [#allocation9], 1
    %24 = vsyncpa %s23, 0
    loop: start=0, step=1, limit=4
    $region2: #{tpu_custom_call.1} parent=1 // loop_pre_header
      _
    $region3: #{tpu_custom_call.1} parent=1 // loop_header
      %s26 = sphi 0, %s30
      %p27 = scmp.ge.s32.totalorder %s26, 4
      %s36 = sphi 0, %s38
      %s39 = sphi 0, %s36
      %s40 = sphi 0, %s39
      %s56 = sphi 0, %s40
      %s60 = sphi 0, %s60
      %s62 = sphi 0, %s60
      %s63 = sphi 0, %s62
      %s77 = sphi 0, %s63
      %s81 = sphi 0, %s81
      %s83 = sphi 0, %s81
      %s84 = sphi 0, %s83
      %s98 = sphi 0, %s84
      %s102 = sphi 0, %s102
      %s104 = sphi 0, %s102
      %s105 = sphi 0, %s104
      %s119 = sphi 0, %s105
      %s123 = sphi 0, %s123
      %s125 = sphi 0, %s123
      %s126 = sphi 0, %s125
      %s140 = sphi 0, %s126
      %s144 = sphi 0, %s144
      %s146 = sphi 0, %s144
      %s147 = sphi 0, %s146
      %s161 = sphi 0, %s147
      %s165 = sphi 0, %s165
      %s167 = sphi 0, %s165
      %s168 = sphi 0, %s167
      %s182 = sphi 0, %s168
      %s186 = sphi 0, %s186
      %s188 = sphi 0, %s186
      %s189 = sphi 0, %s188
      %s203 = sphi 0, %s189
      %s207 = sphi 0, %s207
      %s209 = sphi 0, %s207
      %s210 = sphi 0, %s209
      %s224 = sphi 0, %s210
      %s228 = sphi 0, %s228
      %s230 = sphi 0, %s228
      %s231 = sphi 0, %s230
      %s245 = sphi 0, %s231
      %s249 = sphi 0, %s249
      %s251 = sphi 0, %s249
      %s252 = sphi 0, %s251
      %s266 = sphi 0, %s252
      %s270 = sphi 0, %s270
      %s272 = sphi 0, %s270
      %s273 = sphi 0, %s272
      %s287 = sphi 0, %s273
      %s293 = sphi 0, %s295
      %s296 = sphi 0, %s293
      %s297 = sphi 0, %s296
      %s313 = sphi 0, %s297
    $region4: #{tpu_custom_call.1} parent=1 // loop_header_branch
      %29 = sbr.rel (%p27) target = $region8
    $region5: #{tpu_custom_call.1} parent=1 // loop_body
      %s31 = ssub.s32 %s26, 1
      %s32 = ssub.s32 %s26, 2
      %s33 = sadd.s32 %s26, 1
      %s34 = ssub.s32 %s26, %s33
      %p35 = scmp.eq.s32.totalorder %s34, 0
      %s37 = sadd.s32 %s36, 1
      %s38 = scalar_select %p35, %s36, %s37
      %p41 = pneg %p35
      %p42 = scmp.eq.s32.totalorder %s26, 1
      %p43 = por %p41, %p42
      %p44 = scmp.ne.s32.totalorder %s36, %s39
      %p45 = scmp.eq.s32.totalorder %s26, 0
      %p46 = por %p44, %p45
      %p47 = scmp.ne.s32.totalorder %s36, %s39
      %p48 = scmp.eq.s32.totalorder %s31, 1
      %p49 = por %p47, %p48
      %p50 = scmp.ne.s32.totalorder %s39, %s40
      %p51 = scmp.eq.s32.totalorder %s31, 0
      %p52 = por %p50, %p51
      %p53 = scmp.ne.s32.totalorder %s39, %s40
      %p54 = scmp.eq.s32.totalorder %s32, 1
      %p55 = por %p53, %p54
      %p57 = scmp.ne.s32.totalorder %s40, %s56
      %p58 = scmp.eq.s32.totalorder %s32, 0
      %p59 = por %p57, %p58
      %s61 = sadd.s32 %s60, 1
      %p64 = scmp.eq.s32.totalorder %s26, 1
      %p65 = scmp.ne.s32.totalorder %s60, %s62
      %p66 = scmp.eq.s32.totalorder %s26, 0
      %p67 = por %p65, %p66
      %p68 = scmp.ne.s32.totalorder %s60, %s62
      %p69 = scmp.eq.s32.totalorder %s31, 1
      %p70 = por %p68, %p69
      %p71 = scmp.ne.s32.totalorder %s62, %s63
      %p72 = scmp.eq.s32.totalorder %s31, 0
      %p73 = por %p71, %p72
      %p74 = scmp.ne.s32.totalorder %s62, %s63
      %p75 = scmp.eq.s32.totalorder %s32, 1
      %p76 = por %p74, %p75
      %p78 = scmp.ne.s32.totalorder %s63, %s77
      %p79 = scmp.eq.s32.totalorder %s32, 0
      %p80 = por %p78, %p79
      %s82 = sadd.s32 %s81, 1
      %p85 = scmp.eq.s32.totalorder %s26, 1
      %p86 = scmp.ne.s32.totalorder %s81, %s83
      %p87 = scmp.eq.s32.totalorder %s26, 0
      %p88 = por %p86, %p87
      %p89 = scmp.ne.s32.totalorder %s81, %s83
      %p90 = scmp.eq.s32.totalorder %s31, 1
      %p91 = por %p89, %p90
      %p92 = scmp.ne.s32.totalorder %s83, %s84
      %p93 = scmp.eq.s32.totalorder %s31, 0
      %p94 = por %p92, %p93
      %p95 = scmp.ne.s32.totalorder %s83, %s84
      %p96 = scmp.eq.s32.totalorder %s32, 1
      %p97 = por %p95, %p96
      %p99 = scmp.ne.s32.totalorder %s84, %s98
      %p100 = scmp.eq.s32.totalorder %s32, 0
      %p101 = por %p99, %p100
      %s103 = sadd.s32 %s102, 1
      %p106 = scmp.eq.s32.totalorder %s26, 1
      %p107 = scmp.ne.s32.totalorder %s102, %s104
      %p108 = scmp.eq.s32.totalorder %s26, 0
      %p109 = por %p107, %p108
      %p110 = scmp.ne.s32.totalorder %s102, %s104
      %p111 = scmp.eq.s32.totalorder %s31, 1
      %p112 = por %p110, %p111
      %p113 = scmp.ne.s32.totalorder %s104, %s105
      %p114 = scmp.eq.s32.totalorder %s31, 0
      %p115 = por %p113, %p114
      %p116 = scmp.ne.s32.totalorder %s104, %s105
      %p117 = scmp.eq.s32.totalorder %s32, 1
      %p118 = por %p116, %p117
      %p120 = scmp.ne.s32.totalorder %s105, %s119
      %p121 = scmp.eq.s32.totalorder %s32, 0
      %p122 = por %p120, %p121
      %s124 = sadd.s32 %s123, 1
      %p127 = scmp.eq.s32.totalorder %s26, 1
      %p128 = scmp.ne.s32.totalorder %s123, %s125
      %p129 = scmp.eq.s32.totalorder %s26, 0
      %p130 = por %p128, %p129
      %p131 = scmp.ne.s32.totalorder %s123, %s125
      %p132 = scmp.eq.s32.totalorder %s31, 1
      %p133 = por %p131, %p132
      %p134 = scmp.ne.s32.totalorder %s125, %s126
      %p135 = scmp.eq.s32.totalorder %s31, 0
      %p136 = por %p134, %p135
      %p137 = scmp.ne.s32.totalorder %s125, %s126
      %p138 = scmp.eq.s32.totalorder %s32, 1
      %p139 = por %p137, %p138
      %p141 = scmp.ne.s32.totalorder %s126, %s140
      %p142 = scmp.eq.s32.totalorder %s32, 0
      %p143 = por %p141, %p142
      %s145 = sadd.s32 %s144, 1
      %p148 = scmp.eq.s32.totalorder %s26, 1
      %p149 = scmp.ne.s32.totalorder %s144, %s146
      %p150 = scmp.eq.s32.totalorder %s26, 0
      %p151 = por %p149, %p150
      %p152 = scmp.ne.s32.totalorder %s144, %s146
      %p153 = scmp.eq.s32.totalorder %s31, 1
      %p154 = por %p152, %p153
      %p155 = scmp.ne.s32.totalorder %s146, %s147
      %p156 = scmp.eq.s32.totalorder %s31, 0
      %p157 = por %p155, %p156
      %p158 = scmp.ne.s32.totalorder %s146, %s147
      %p159 = scmp.eq.s32.totalorder %s32, 1
      %p160 = por %p158, %p159
      %p162 = scmp.ne.s32.totalorder %s147, %s161
      %p163 = scmp.eq.s32.totalorder %s32, 0
      %p164 = por %p162, %p163
      %s166 = sadd.s32 %s165, 1
      %p169 = scmp.eq.s32.totalorder %s26, 1
      %p170 = scmp.ne.s32.totalorder %s165, %s167
      %p171 = scmp.eq.s32.totalorder %s26, 0
      %p172 = por %p170, %p171
      %p173 = scmp.ne.s32.totalorder %s165, %s167
      %p174 = scmp.eq.s32.totalorder %s31, 1
      %p175 = por %p173, %p174
      %p176 = scmp.ne.s32.totalorder %s167, %s168
      %p177 = scmp.eq.s32.totalorder %s31, 0
      %p178 = por %p176, %p177
      %p179 = scmp.ne.s32.totalorder %s167, %s168
      %p180 = scmp.eq.s32.totalorder %s32, 1
      %p181 = por %p179, %p180
      %p183 = scmp.ne.s32.totalorder %s168, %s182
      %p184 = scmp.eq.s32.totalorder %s32, 0
      %p185 = por %p183, %p184
      %s187 = sadd.s32 %s186, 1
      %p190 = scmp.eq.s32.totalorder %s26, 1
      %p191 = scmp.ne.s32.totalorder %s186, %s188
      %p192 = scmp.eq.s32.totalorder %s26, 0
      %p193 = por %p191, %p192
      %p194 = scmp.ne.s32.totalorder %s186, %s188
      %p195 = scmp.eq.s32.totalorder %s31, 1
      %p196 = por %p194, %p195
      %p197 = scmp.ne.s32.totalorder %s188, %s189
      %p198 = scmp.eq.s32.totalorder %s31, 0
      %p199 = por %p197, %p198
      %p200 = scmp.ne.s32.totalorder %s188, %s189
      %p201 = scmp.eq.s32.totalorder %s32, 1
      %p202 = por %p200, %p201
      %p204 = scmp.ne.s32.totalorder %s189, %s203
      %p205 = scmp.eq.s32.totalorder %s32, 0
      %p206 = por %p204, %p205
      %s208 = sadd.s32 %s207, 1
      %p211 = scmp.eq.s32.totalorder %s26, 1
      %p212 = scmp.ne.s32.totalorder %s207, %s209
      %p213 = scmp.eq.s32.totalorder %s26, 0
      %p214 = por %p212, %p213
      %p215 = scmp.ne.s32.totalorder %s207, %s209
      %p216 = scmp.eq.s32.totalorder %s31, 1
      %p217 = por %p215, %p216
      %p218 = scmp.ne.s32.totalorder %s209, %s210
      %p219 = scmp.eq.s32.totalorder %s31, 0
      %p220 = por %p218, %p219
      %p221 = scmp.ne.s32.totalorder %s209, %s210
      %p222 = scmp.eq.s32.totalorder %s32, 1
      %p223 = por %p221, %p222
      %p225 = scmp.ne.s32.totalorder %s210, %s224
      %p226 = scmp.eq.s32.totalorder %s32, 0
      %p227 = por %p225, %p226
      %s229 = sadd.s32 %s228, 1
      %p232 = scmp.eq.s32.totalorder %s26, 1
      %p233 = scmp.ne.s32.totalorder %s228, %s230
      %p234 = scmp.eq.s32.totalorder %s26, 0
      %p235 = por %p233, %p234
      %p236 = scmp.ne.s32.totalorder %s228, %s230
      %p237 = scmp.eq.s32.totalorder %s31, 1
      %p238 = por %p236, %p237
      %p239 = scmp.ne.s32.totalorder %s230, %s231
      %p240 = scmp.eq.s32.totalorder %s31, 0
      %p241 = por %p239, %p240
      %p242 = scmp.ne.s32.totalorder %s230, %s231
      %p243 = scmp.eq.s32.totalorder %s32, 1
      %p244 = por %p242, %p243
      %p246 = scmp.ne.s32.totalorder %s231, %s245
      %p247 = scmp.eq.s32.totalorder %s32, 0
      %p248 = por %p246, %p247
      %s250 = sadd.s32 %s249, 1
      %p253 = scmp.eq.s32.totalorder %s26, 1
      %p254 = scmp.ne.s32.totalorder %s249, %s251
      %p255 = scmp.eq.s32.totalorder %s26, 0
      %p256 = por %p254, %p255
      %p257 = scmp.ne.s32.totalorder %s249, %s251
      %p258 = scmp.eq.s32.totalorder %s31, 1
      %p259 = por %p257, %p258
      %p260 = scmp.ne.s32.totalorder %s251, %s252
      %p261 = scmp.eq.s32.totalorder %s31, 0
      %p262 = por %p260, %p261
      %p263 = scmp.ne.s32.totalorder %s251, %s252
      %p264 = scmp.eq.s32.totalorder %s32, 1
      %p265 = por %p263, %p264
      %p267 = scmp.ne.s32.totalorder %s252, %s266
      %p268 = scmp.eq.s32.totalorder %s32, 0
      %p269 = por %p267, %p268
      %s271 = sadd.s32 %s270, 1
      %p274 = scmp.eq.s32.totalorder %s26, 1
      %p275 = scmp.ne.s32.totalorder %s270, %s272
      %p276 = scmp.eq.s32.totalorder %s26, 0
      %p277 = por %p275, %p276
      %p278 = scmp.ne.s32.totalorder %s270, %s272
      %p279 = scmp.eq.s32.totalorder %s31, 1
      %p280 = por %p278, %p279
      %p281 = scmp.ne.s32.totalorder %s272, %s273
      %p282 = scmp.eq.s32.totalorder %s31, 0
      %p283 = por %p281, %p282
      %p284 = scmp.ne.s32.totalorder %s272, %s273
      %p285 = scmp.eq.s32.totalorder %s32, 1
      %p286 = por %p284, %p285
      %p288 = scmp.ne.s32.totalorder %s273, %s287
      %p289 = scmp.eq.s32.totalorder %s32, 0
      %p290 = por %p288, %p289
      %s291 = ssub.s32 %s26, %s33
      %p292 = scmp.eq.s32.totalorder %s291, 0
      %s294 = sadd.s32 %s293, 1
      %s295 = scalar_select %p292, %s293, %s294
      %p298 = pneg %p292
      %p299 = scmp.eq.s32.totalorder %s26, 1
      %p300 = por %p298, %p299
      %p301 = scmp.ne.s32.totalorder %s293, %s296
      %p302 = scmp.eq.s32.totalorder %s26, 0
      %p303 = por %p301, %p302
      %p304 = scmp.ne.s32.totalorder %s293, %s296
      %p305 = scmp.eq.s32.totalorder %s31, 1
      %p306 = por %p304, %p305
      %p307 = scmp.ne.s32.totalorder %s296, %s297
      %p308 = scmp.eq.s32.totalorder %s31, 0
      %p309 = por %p307, %p308
      %p310 = scmp.ne.s32.totalorder %s296, %s297
      %p311 = scmp.eq.s32.totalorder %s32, 1
      %p312 = por %p310, %p311
      %p314 = scmp.ne.s32.totalorder %s297, %s313
      %p315 = scmp.eq.s32.totalorder %s32, 0
      %p316 = por %p314, %p315
      %p317 = scmp.le.s32.totalorder 1, %s26
      %p318 = scmp.lt.s32.totalorder %s26, 3
      %p319 = pnand %p317, %p318
      %p320 = pneg %p319
      // Predicated region
      $region9: #{tpu_custom_call.1} parent=5 // pred_check
        _
      $region10: #{tpu_custom_call.1} parent=5 // pred_check_branch
        %322 = sbr.rel (%p319) target = $region12
      $region11: #{tpu_custom_call.1} parent=5 // pred_region
        %s323 = ssub.s32 %s26, 1
        // Predicated region
        $region13: #{tpu_custom_call.1} parent=11 // pred_check
          %p324 = pneg %p73
        $region14: #{tpu_custom_call.1} parent=11 // pred_check_branch
          %326 = sbr.rel (%p324) target = $region16
        $region15: #{tpu_custom_call.1} parent=11 // pred_region
          _
        $region16: #{tpu_custom_call.1} parent=11 // pred_fallthru
          _
        // Predicated region
        $region17: #{tpu_custom_call.1} parent=11 // pred_check
          %p327 = pneg %p94
        $region18: #{tpu_custom_call.1} parent=11 // pred_check_branch
          %329 = sbr.rel (%p327) target = $region20
        $region19: #{tpu_custom_call.1} parent=11 // pred_region
          _
        $region20: #{tpu_custom_call.1} parent=11 // pred_fallthru
          _
        // Predicated region
        $region21: #{tpu_custom_call.1} parent=11 // pred_check
          %p330 = pneg %p115
        $region22: #{tpu_custom_call.1} parent=11 // pred_check_branch
          %332 = sbr.rel (%p330) target = $region24
        $region23: #{tpu_custom_call.1} parent=11 // pred_region
          %334 = vsyncadd [#allocation8], 0
          %s336 = sshll.u32 %s3, 4
          %s337 = int_to_ptr.hbm [resolvable:$true] %s336
          %s338 = sshll.u32 [#allocation7], 4
          %s339 = int_to_ptr.vmem [resolvable:$true] %s338
          %341 = dma.hbm_to_vmem [thread:$0]  %s337, 32, %s339, [#allocation8]
        $region24: #{tpu_custom_call.1} parent=11 // pred_fallthru
          _
        // Predicated region
        $region25: #{tpu_custom_call.1} parent=11 // pred_check
          %p342 = pneg %p136
        $region26: #{tpu_custom_call.1} parent=11 // pred_check_branch
          %344 = sbr.rel (%p342) target = $region28
        $region27: #{tpu_custom_call.1} parent=11 // pred_region
          %346 = vsyncadd [#allocation11], 0
          %s348 = sshll.u32 %s4, 4
          %s349 = int_to_ptr.hbm [resolvable:$true] %s348
          %s350 = sshll.u32 [#allocation10], 4
          %s351 = int_to_ptr.vmem [resolvable:$true] %s350
          %353 = dma.hbm_to_vmem [thread:$0]  %s349, 32, %s351, [#allocation11]
        $region28: #{tpu_custom_call.1} parent=11 // pred_fallthru
          _
        // Predicated region
        $region29: #{tpu_custom_call.1} parent=11 // pred_check
          %p354 = pneg %p157
        $region30: #{tpu_custom_call.1} parent=11 // pred_check_branch
          %356 = sbr.rel (%p354) target = $region32
        $region31: #{tpu_custom_call.1} parent=11 // pred_region
          _
        $region32: #{tpu_custom_call.1} parent=11 // pred_fallthru
          _
        // Predicated region
        $region33: #{tpu_custom_call.1} parent=11 // pred_check
          %p357 = pneg %p178
        $region34: #{tpu_custom_call.1} parent=11 // pred_check_branch
          %359 = sbr.rel (%p357) target = $region36
        $region35: #{tpu_custom_call.1} parent=11 // pred_region
          %361 = vsyncadd [#allocation11], 0
          %s362 = sshll.u32 %s6, 4
          %s363 = int_to_ptr.hbm [resolvable:$true] %s362
          %s364 = sshll.u32 [#allocation12], 4
          %s365 = int_to_ptr.vmem [resolvable:$true] %s364
          %370 = dma.hbm_to_vmem [thread:$0]  %s363, 2048, %s365, [#allocation11], 256, 256, 16
        $region36: #{tpu_custom_call.1} parent=11 // pred_fallthru
          _
        // Predicated region
        $region37: #{tpu_custom_call.1} parent=11 // pred_check
          %p371 = pneg %p199
        $region38: #{tpu_custom_call.1} parent=11 // pred_check_branch
          %373 = sbr.rel (%p371) target = $region40
        $region39: #{tpu_custom_call.1} parent=11 // pred_region
          %375 = vsyncadd [#allocation14], 0
          %s377 = sshll.u32 %s7, 4
          %s378 = int_to_ptr.hbm [resolvable:$true] %s377
          %s379 = sshll.u32 [#allocation13], 4
          %s380 = int_to_ptr.vmem [resolvable:$true] %s379
          %382 = dma.hbm_to_vmem [thread:$0]  %s378, 32, %s380, [#allocation14]
        $region40: #{tpu_custom_call.1} parent=11 // pred_fallthru
          _
        // Predicated region
        $region41: #{tpu_custom_call.1} parent=11 // pred_check
          %p383 = pneg %p220
        $region42: #{tpu_custom_call.1} parent=11 // pred_check_branch
          %385 = sbr.rel (%p383) target = $region44
        $region43: #{tpu_custom_call.1} parent=11 // pred_region
          %387 = vsyncadd [#allocation14], 0
          %s389 = sshll.u32 %s8, 4
          %s390 = int_to_ptr.hbm [resolvable:$true] %s389
          %s391 = sshll.u32 [#allocation15], 4
          %s392 = int_to_ptr.vmem [resolvable:$true] %s391
          %394 = dma.hbm_to_vmem [thread:$0]  %s390, 32, %s392, [#allocation14]
        $region44: #{tpu_custom_call.1} parent=11 // pred_fallthru
          _
        // Predicated region
        $region45: #{tpu_custom_call.1} parent=11 // pred_check
          %p395 = pneg %p241
        $region46: #{tpu_custom_call.1} parent=11 // pred_check_branch
          %397 = sbr.rel (%p395) target = $region48
        $region47: #{tpu_custom_call.1} parent=11 // pred_region
          %399 = vsyncadd [#allocation17], 0
          %s400 = sshll.u32 %s9, 4
          %s401 = int_to_ptr.hbm [resolvable:$true] %s400
          %s402 = sshll.u32 [#allocation16], 4
          %s403 = int_to_ptr.vmem [resolvable:$true] %s402
          %408 = dma.hbm_to_vmem [thread:$0]  %s401, 2048, %s403, [#allocation17], 128, 128, 8
        $region48: #{tpu_custom_call.1} parent=11 // pred_fallthru
          _
        // Predicated region
        $region49: #{tpu_custom_call.1} parent=11 // pred_check
          %p409 = pneg %p262
        $region50: #{tpu_custom_call.1} parent=11 // pred_check_branch
          %411 = sbr.rel (%p409) target = $region52
        $region51: #{tpu_custom_call.1} parent=11 // pred_region
          %413 = vsyncadd [#allocation17], 0
          %s415 = sshll.u32 %s10, 4
          %s416 = int_to_ptr.hbm [resolvable:$true] %s415
          %s417 = sshll.u32 [#allocation18], 4
          %s418 = int_to_ptr.vmem [resolvable:$true] %s417
          %420 = dma.hbm_to_vmem [thread:$0]  %s416, 16, %s418, [#allocation17]
        $region52: #{tpu_custom_call.1} parent=11 // pred_fallthru
          _
        // Predicated region
        $region53: #{tpu_custom_call.1} parent=11 // pred_check
          %p421 = pneg %p283
        $region54: #{tpu_custom_call.1} parent=11 // pred_check_branch
          %423 = sbr.rel (%p421) target = $region56
        $region55: #{tpu_custom_call.1} parent=11 // pred_region
          %425 = vsyncadd [#allocation20], 0
          %s427 = sshll.u32 %s11, 4
          %s428 = int_to_ptr.hbm [resolvable:$true] %s427
          %s429 = sshll.u32 [#allocation19], 4
          %s430 = int_to_ptr.vmem [resolvable:$true] %s429
          %432 = dma.hbm_to_vmem [thread:$0]  %s428, 16, %s430, [#allocation20]
        $region56: #{tpu_custom_call.1} parent=11 // pred_fallthru
          _
      $region12: #{tpu_custom_call.1} parent=5 // pred_fallthru
        _
      %p433 = scmp.lt.s32.totalorder %s26, 2
      // Predicated region
      $region57: #{tpu_custom_call.1} parent=5 // pred_check
        %p434 = pneg %p433
      $region58: #{tpu_custom_call.1} parent=5 // pred_check_branch
        %436 = sbr.rel (%p434) target = $region60
      $region59: #{tpu_custom_call.1} parent=5 // pred_region
        // Predicated region
        $region61: #{tpu_custom_call.1} parent=59 // pred_check
          %p437 = pneg %p46
        $region62: #{tpu_custom_call.1} parent=59 // pred_check_branch
          %439 = sbr.rel (%p437) target = $region64
        $region63: #{tpu_custom_call.1} parent=59 // pred_region
          %s440 = sand.u32 %s36, 1
          %s441 = sand.u32 %s36, 1
          %s442 = smul.addr %s441, 384
          %s443 = scalar_lea.vmem [#allocation6], %s442
          %s444 = smul.u32 2, %s26
          %s445 = smul.addr %s444, 3
          %s446 = smul.addr %s445, 8
          %s447 = scalar_lea.vmem %s0, %s446
          // Predicated region
          $region65: #{tpu_custom_call.1} parent=63 // pred_check
            _
          $region66: #{tpu_custom_call.1} parent=63 // pred_check_branch
            %449 = sbr.rel (0) target = $region68
          $region67: #{tpu_custom_call.1} parent=63 // pred_region
            // Predicated region
            $region69: #{tpu_custom_call.1} parent=67 // pred_check
              _
            $region70: #{tpu_custom_call.1} parent=67 // pred_check_branch
              %451 = sbr.rel (0) target = $region72
            $region71: #{tpu_custom_call.1} parent=67 // pred_region
              loop: start=0, step=1, limit=1
              $region73: #{tpu_custom_call.1} parent=71 // loop_pre_header
                _
              $region74: #{tpu_custom_call.1} parent=71 // loop_header
                %s453 = sphi 0, %s457
                %p454 = scmp.ge.s32.totalorder %s453, 1
                %s458 = sphi %s447, %s447
                %s459 = sphi %s443, %s443
              $region75: #{tpu_custom_call.1} parent=71 // loop_header_branch
                %456 = sbr.rel (%p454) target = $region79
              $region76: #{tpu_custom_call.1} parent=71 // loop_body
                %v460 = vld [vmem:[%s458] sm:$0xff]
                %461 = vst [vmem:[%s459] sm:$0xff] %v460
                %v462 = vld [vmem:[%s458 + $0x8] sm:$0xff]
                %463 = vst [vmem:[%s459 + $0x8] sm:$0xff] %v462
                %v464 = vld [vmem:[%s458 + $0x10] sm:$0xff]
                %465 = vst [vmem:[%s459 + $0x10] sm:$0xff] %v464
                %v466 = vld [vmem:[%s458 + $0x18] sm:$0xff]
                %467 = vst [vmem:[%s459 + $0x18] sm:$0xff] %v466
                %v468 = vld [vmem:[%s458 + $0x20] sm:$0xff]
                %469 = vst [vmem:[%s459 + $0x20] sm:$0xff] %v468
                %v470 = vld [vmem:[%s458 + $0x28] sm:$0xff]
                %471 = vst [vmem:[%s459 + $0x28] sm:$0xff] %v470
                %v472 = vld [vmem:[%s458 + $0x60] sm:$0xff]
                %473 = vst [vmem:[%s459 + $0x30] sm:$0xff] %v472
                %v474 = vld [vmem:[%s458 + $0x68] sm:$0xff]
                %475 = vst [vmem:[%s459 + $0x38] sm:$0xff] %v474
                %v476 = vld [vmem:[%s458 + $0x70] sm:$0xff]
                %477 = vst [vmem:[%s459 + $0x40] sm:$0xff] %v476
                %v478 = vld [vmem:[%s458 + $0x78] sm:$0xff]
                %479 = vst [vmem:[%s459 + $0x48] sm:$0xff] %v478
                %v480 = vld [vmem:[%s458 + $0x80] sm:$0xff]
                %481 = vst [vmem:[%s459 + $0x50] sm:$0xff] %v480
                %v482 = vld [vmem:[%s458 + $0x88] sm:$0xff]
                %483 = vst [vmem:[%s459 + $0x58] sm:$0xff] %v482
                %v484 = vld [vmem:[%s458 + $0xc0] sm:$0xff]
                %485 = vst [vmem:[%s459 + $0x60] sm:$0xff] %v484
                %v486 = vld [vmem:[%s458 + $0xc8] sm:$0xff]
                %487 = vst [vmem:[%s459 + $0x68] sm:$0xff] %v486
                %v488 = vld [vmem:[%s458 + $0xd0] sm:$0xff]
                %489 = vst [vmem:[%s459 + $0x70] sm:$0xff] %v488
                %v490 = vld [vmem:[%s458 + $0xd8] sm:$0xff]
                %491 = vst [vmem:[%s459 + $0x78] sm:$0xff] %v490
                %v492 = vld [vmem:[%s458 + $0xe0] sm:$0xff]
                %493 = vst [vmem:[%s459 + $0x80] sm:$0xff] %v492
                %v494 = vld [vmem:[%s458 + $0xe8] sm:$0xff]
                %495 = vst [vmem:[%s459 + $0x88] sm:$0xff] %v494
                %v496 = vld [vmem:[%s458 + $0x120] sm:$0xff]
                %497 = vst [vmem:[%s459 + $0x90] sm:$0xff] %v496
                %v498 = vld [vmem:[%s458 + $0x128] sm:$0xff]
                %499 = vst [vmem:[%s459 + $0x98] sm:$0xff] %v498
                %v500 = vld [vmem:[%s458 + $0x130] sm:$0xff]
                %501 = vst [vmem:[%s459 + $0xa0] sm:$0xff] %v500
                %v502 = vld [vmem:[%s458 + $0x138] sm:$0xff]
                %503 = vst [vmem:[%s459 + $0xa8] sm:$0xff] %v502
                %v504 = vld [vmem:[%s458 + $0x140] sm:$0xff]
                %505 = vst [vmem:[%s459 + $0xb0] sm:$0xff] %v504
                %v506 = vld [vmem:[%s458 + $0x148] sm:$0xff]
                %507 = vst [vmem:[%s459 + $0xb8] sm:$0xff] %v506
                %v508 = vld [vmem:[%s458 + $0x180] sm:$0xff]
                %509 = vst [vmem:[%s459 + $0xc0] sm:$0xff] %v508
                %v510 = vld [vmem:[%s458 + $0x188] sm:$0xff]
                %511 = vst [vmem:[%s459 + $0xc8] sm:$0xff] %v510
                %v512 = vld [vmem:[%s458 + $0x190] sm:$0xff]
                %513 = vst [vmem:[%s459 + $0xd0] sm:$0xff] %v512
                %v514 = vld [vmem:[%s458 + $0x198] sm:$0xff]
                %515 = vst [vmem:[%s459 + $0xd8] sm:$0xff] %v514
                %v516 = vld [vmem:[%s458 + $0x1a0] sm:$0xff]
                %517 = vst [vmem:[%s459 + $0xe0] sm:$0xff] %v516
                %v518 = vld [vmem:[%s458 + $0x1a8] sm:$0xff]
                %519 = vst [vmem:[%s459 + $0xe8] sm:$0xff] %v518
                %v520 = vld [vmem:[%s458 + $0x1e0] sm:$0xff]
                %521 = vst [vmem:[%s459 + $0xf0] sm:$0xff] %v520
                %v522 = vld [vmem:[%s458 + $0x1e8] sm:$0xff]
                %523 = vst [vmem:[%s459 + $0xf8] sm:$0xff] %v522
                %v524 = vld [vmem:[%s458 + $0x1f0] sm:$0xff]
                %525 = vst [vmem:[%s459 + $0x100] sm:$0xff] %v524
                %v526 = vld [vmem:[%s458 + $0x1f8] sm:$0xff]
                %527 = vst [vmem:[%s459 + $0x108] sm:$0xff] %v526
                %v528 = vld [vmem:[%s458 + $0x200] sm:$0xff]
                %529 = vst [vmem:[%s459 + $0x110] sm:$0xff] %v528
                %v530 = vld [vmem:[%s458 + $0x208] sm:$0xff]
                %531 = vst [vmem:[%s459 + $0x118] sm:$0xff] %v530
                %v532 = vld [vmem:[%s458 + $0x240] sm:$0xff]
                %533 = vst [vmem:[%s459 + $0x120] sm:$0xff] %v532
                %v534 = vld [vmem:[%s458 + $0x248] sm:$0xff]
                %535 = vst [vmem:[%s459 + $0x128] sm:$0xff] %v534
                %v536 = vld [vmem:[%s458 + $0x250] sm:$0xff]
                %537 = vst [vmem:[%s459 + $0x130] sm:$0xff] %v536
                %v538 = vld [vmem:[%s458 + $0x258] sm:$0xff]
                %539 = vst [vmem:[%s459 + $0x138] sm:$0xff] %v538
                %v540 = vld [vmem:[%s458 + $0x260] sm:$0xff]
                %541 = vst [vmem:[%s459 + $0x140] sm:$0xff] %v540
                %v542 = vld [vmem:[%s458 + $0x268] sm:$0xff]
                %543 = vst [vmem:[%s459 + $0x148] sm:$0xff] %v542
                %v544 = vld [vmem:[%s458 + $0x2a0] sm:$0xff]
                %545 = vst [vmem:[%s459 + $0x150] sm:$0xff] %v544
                %v546 = vld [vmem:[%s458 + $0x2a8] sm:$0xff]
                %547 = vst [vmem:[%s459 + $0x158] sm:$0xff] %v546
                %v548 = vld [vmem:[%s458 + $0x2b0] sm:$0xff]
                %549 = vst [vmem:[%s459 + $0x160] sm:$0xff] %v548
                %v550 = vld [vmem:[%s458 + $0x2b8] sm:$0xff]
                %551 = vst [vmem:[%s459 + $0x168] sm:$0xff] %v550
                %v552 = vld [vmem:[%s458 + $0x2c0] sm:$0xff]
                %553 = vst [vmem:[%s459 + $0x170] sm:$0xff] %v552
                %v554 = vld [vmem:[%s458 + $0x2c8] sm:$0xff]
                %555 = vst [vmem:[%s459 + $0x178] sm:$0xff] %v554
              $region77: #{tpu_custom_call.1} parent=71 // loop_footer
                %s457 = sadd.s32 1, %s453
              $region78: #{tpu_custom_call.1} parent=71 // loop_footer_branch
                %452 = sbr.rel target = $region74
              $region79: #{tpu_custom_call.1} parent=71 // loop_exit
                _
            $region72: #{tpu_custom_call.1} parent=67 // pred_fallthru
              _
            // Predicated region
            $region80: #{tpu_custom_call.1} parent=67 // pred_check
              _
            $region81: #{tpu_custom_call.1} parent=67 // pred_check_branch
              %557 = sbr.rel target = $region83
            $region82: #{tpu_custom_call.1} parent=67 // pred_region
              _
            $region83: #{tpu_custom_call.1} parent=67 // pred_fallthru
              _
          $region68: #{tpu_custom_call.1} parent=63 // pred_fallthru
            _
          %558 = vnop
        $region64: #{tpu_custom_call.1} parent=59 // pred_fallthru
          _
      $region60: #{tpu_custom_call.1} parent=5 // pred_fallthru
        _
      %p559 = scmp.le.s32.totalorder 1, %s26
      %p560 = scmp.lt.s32.totalorder %s26, 3
      %p561 = pnand %p559, %p560
      %p562 = pneg %p561
      // Predicated region
      $region84: #{tpu_custom_call.1} parent=5 // pred_check
        _
      $region85: #{tpu_custom_call.1} parent=5 // pred_check_branch
        %564 = sbr.rel (%p561) target = $region87
      $region86: #{tpu_custom_call.1} parent=5 // pred_region
        %s565 = ssub.s32 %s26, 1
        %s566 = sand.u32 %s39, 1
        %s567 = sand.u32 %s39, 1
        %s568 = smul.addr %s567, 384
        %s569 = scalar_lea.vmem [#allocation6], %s568
        // Predicated region
        $region88: #{tpu_custom_call.1} parent=86 // pred_check
          %p570 = pneg %p52
        $region89: #{tpu_custom_call.1} parent=86 // pred_check_branch
          %572 = sbr.rel (%p570) target = $region91
        $region90: #{tpu_custom_call.1} parent=86 // pred_region
          _
        $region91: #{tpu_custom_call.1} parent=86 // pred_fallthru
          _
        // Predicated region
        $region92: #{tpu_custom_call.1} parent=86 // pred_check
          %p573 = pneg %p115
        $region93: #{tpu_custom_call.1} parent=86 // pred_check_branch
          %575 = sbr.rel (%p573) target = $region95
        $region94: #{tpu_custom_call.1} parent=86 // pred_region
          %577 = dma.done [#allocation8], 32
        $region95: #{tpu_custom_call.1} parent=86 // pred_fallthru
          _
        // Predicated region
        $region96: #{tpu_custom_call.1} parent=86 // pred_check
          %p578 = pneg %p136
        $region97: #{tpu_custom_call.1} parent=86 // pred_check_branch
          %580 = sbr.rel (%p578) target = $region99
        $region98: #{tpu_custom_call.1} parent=86 // pred_region
          %582 = dma.done [#allocation11], 32
        $region99: #{tpu_custom_call.1} parent=86 // pred_fallthru
          _
        // Predicated region
        $region100: #{tpu_custom_call.1} parent=86 // pred_check
          %p583 = pneg %p178
        $region101: #{tpu_custom_call.1} parent=86 // pred_check_branch
          %585 = sbr.rel (%p583) target = $region103
        $region102: #{tpu_custom_call.1} parent=86 // pred_region
          %587 = dma.done [#allocation11], 2048
        $region103: #{tpu_custom_call.1} parent=86 // pred_fallthru
          _
        // Predicated region
        $region104: #{tpu_custom_call.1} parent=86 // pred_check
          %p588 = pneg %p199
        $region105: #{tpu_custom_call.1} parent=86 // pred_check_branch
          %590 = sbr.rel (%p588) target = $region107
        $region106: #{tpu_custom_call.1} parent=86 // pred_region
          %592 = dma.done [#allocation14], 32
        $region107: #{tpu_custom_call.1} parent=86 // pred_fallthru
          _
        // Predicated region
        $region108: #{tpu_custom_call.1} parent=86 // pred_check
          %p593 = pneg %p220
        $region109: #{tpu_custom_call.1} parent=86 // pred_check_branch
          %595 = sbr.rel (%p593) target = $region111
        $region110: #{tpu_custom_call.1} parent=86 // pred_region
          %597 = dma.done [#allocation14], 32
        $region111: #{tpu_custom_call.1} parent=86 // pred_fallthru
          _
        // Predicated region
        $region112: #{tpu_custom_call.1} parent=86 // pred_check
          %p598 = pneg %p241
        $region113: #{tpu_custom_call.1} parent=86 // pred_check_branch
          %600 = sbr.rel (%p598) target = $region115
        $region114: #{tpu_custom_call.1} parent=86 // pred_region
          %602 = dma.done [#allocation17], 2048
        $region115: #{tpu_custom_call.1} parent=86 // pred_fallthru
          _
        // Predicated region
        $region116: #{tpu_custom_call.1} parent=86 // pred_check
          %p603 = pneg %p262
        $region117: #{tpu_custom_call.1} parent=86 // pred_check_branch
          %605 = sbr.rel (%p603) target = $region119
        $region118: #{tpu_custom_call.1} parent=86 // pred_region
          %607 = dma.done [#allocation17], 16
        $region119: #{tpu_custom_call.1} parent=86 // pred_fallthru
          _
        // Predicated region
        $region120: #{tpu_custom_call.1} parent=86 // pred_check
          %p608 = pneg %p283
        $region121: #{tpu_custom_call.1} parent=86 // pred_check_branch
          %610 = sbr.rel (%p608) target = $region123
        $region122: #{tpu_custom_call.1} parent=86 // pred_region
          %612 = dma.done [#allocation20], 16
        $region123: #{tpu_custom_call.1} parent=86 // pred_fallthru
          _
        %s613 = sand.u32 %s39, 1
        %s614 = sand.u32 %s39, 1
        %s615 = smul.addr %s614, 384
        %s616 = scalar_lea.vmem [#allocation6], %s615
        %p617 = pneg %p52
        %p618 = pneg %p49
        %p619 = pneg %p73
        %p620 = pneg %p70
        %p621 = pneg %p94
        %p622 = pneg %p91
        %p623 = pneg %p115
        %p624 = pneg %p112
        %p625 = pneg %p136
        %p626 = pneg %p133
        %p627 = pneg %p157
        %p628 = pneg %p154
        %p629 = pneg %p178
        %p630 = pneg %p175
        %p631 = pneg %p199
        %p632 = pneg %p196
        %p633 = pneg %p220
        %p634 = pneg %p217
        %p635 = pneg %p241
        %p636 = pneg %p238
        %p637 = pneg %p262
        %p638 = pneg %p259
        %p639 = pneg %p283
        %p640 = pneg %p280
        %p641 = pneg %p309
        %p642 = pneg %p306
        %s643 = sand.u32 %s296, 1
        %s644 = scalar_lea.sflag [#allocation9], %s643
        %s645 = sand.u32 %s296, 1
        %s646 = smul.addr %s645, 16
        %s647 = scalar_lea.vmem [#allocation21], %s646
        %s648 = smul.u32 2, %s31
        %s649 = smul.u32 2, %s31
        %v651 = vld [vmem:[%s569] sm:$0xff]
        %v652 = vld [vmem:[%s569 + $0x8] sm:$0xff]
        %v653 = vld [vmem:[%s569 + $0x10] sm:$0xff]
        %v654 = vld [vmem:[%s569 + $0x18] sm:$0xff]
        %v655 = vld [vmem:[%s569 + $0x20] sm:$0xff]
        %v656 = vld [vmem:[%s569 + $0x28] sm:$0xff]
        %v657 = vld [vmem:[%s569 + $0x30] sm:$0xff]
        %v658 = vld [vmem:[%s569 + $0x38] sm:$0xff]
        %v659 = vld [vmem:[%s569 + $0x40] sm:$0xff]
        %v660 = vld [vmem:[%s569 + $0x48] sm:$0xff]
        %v661 = vld [vmem:[%s569 + $0x50] sm:$0xff]
        %v662 = vld [vmem:[%s569 + $0x58] sm:$0xff]
        %v663 = vld [vmem:[%s569 + $0x60] sm:$0xff]
        %v664 = vld [vmem:[%s569 + $0x68] sm:$0xff]
        %v665 = vld [vmem:[%s569 + $0x70] sm:$0xff]
        %v666 = vld [vmem:[%s569 + $0x78] sm:$0xff]
        %v667 = vld [vmem:[%s569 + $0x80] sm:$0xff]
        %v668 = vld [vmem:[%s569 + $0x88] sm:$0xff]
        %v669 = vld [vmem:[%s569 + $0x90] sm:$0xff]
        %v670 = vld [vmem:[%s569 + $0x98] sm:$0xff]
        %v671 = vld [vmem:[%s569 + $0xa0] sm:$0xff]
        %v672 = vld [vmem:[%s569 + $0xa8] sm:$0xff]
        %v673 = vld [vmem:[%s569 + $0xb0] sm:$0xff]
        %v674 = vld [vmem:[%s569 + $0xb8] sm:$0xff]
        %v675 = vld [vmem:[%s569 + $0xc0] sm:$0xff]
        %v676 = vld [vmem:[%s569 + $0xc8] sm:$0xff]
        %v677 = vld [vmem:[%s569 + $0xd0] sm:$0xff]
        %v678 = vld [vmem:[%s569 + $0xd8] sm:$0xff]
        %v679 = vld [vmem:[%s569 + $0xe0] sm:$0xff]
        %v680 = vld [vmem:[%s569 + $0xe8] sm:$0xff]
        %v681 = vld [vmem:[%s569 + $0xf0] sm:$0xff]
        %v682 = vld [vmem:[%s569 + $0xf8] sm:$0xff]
        %v683 = vld [vmem:[%s569 + $0x100] sm:$0xff]
        %v684 = vld [vmem:[%s569 + $0x108] sm:$0xff]
        %v685 = vld [vmem:[%s569 + $0x110] sm:$0xff]
        %v686 = vld [vmem:[%s569 + $0x118] sm:$0xff]
        %v687 = vld [vmem:[%s569 + $0x120] sm:$0xff]
        %v688 = vld [vmem:[%s569 + $0x128] sm:$0xff]
        %v689 = vld [vmem:[%s569 + $0x130] sm:$0xff]
        %v690 = vld [vmem:[%s569 + $0x138] sm:$0xff]
        %v691 = vld [vmem:[%s569 + $0x140] sm:$0xff]
        %v692 = vld [vmem:[%s569 + $0x148] sm:$0xff]
        %v693 = vld [vmem:[%s569 + $0x150] sm:$0xff]
        %v694 = vld [vmem:[%s569 + $0x158] sm:$0xff]
        %v695 = vld [vmem:[%s569 + $0x160] sm:$0xff]
        %v696 = vld [vmem:[%s569 + $0x168] sm:$0xff]
        %v697 = vld [vmem:[%s569 + $0x170] sm:$0xff]
        %v698 = vld [vmem:[%s569 + $0x178] sm:$0xff]
        %v699 = vpack.c.bf16 %v654, %v651
        %v700 = vpack.c.bf16 %v655, %v652
        %v701 = vpack.c.bf16 %v656, %v653
        %v702 = vpack.c.bf16 %v660, %v657
        %v703 = vpack.c.bf16 %v661, %v658
        %v704 = vpack.c.bf16 %v662, %v659
        %v705 = vpack.c.bf16 %v666, %v663
        %v706 = vpack.c.bf16 %v667, %v664
        %v707 = vpack.c.bf16 %v668, %v665
        %v708 = vpack.c.bf16 %v672, %v669
        %v709 = vpack.c.bf16 %v673, %v670
        %v710 = vpack.c.bf16 %v674, %v671
        %v711 = vpack.c.bf16 %v678, %v675
        %v712 = vpack.c.bf16 %v679, %v676
        %v713 = vpack.c.bf16 %v680, %v677
        %v714 = vpack.c.bf16 %v684, %v681
        %v715 = vpack.c.bf16 %v685, %v682
        %v716 = vpack.c.bf16 %v686, %v683
        %v717 = vpack.c.bf16 %v690, %v687
        %v718 = vpack.c.bf16 %v691, %v688
        %v719 = vpack.c.bf16 %v692, %v689
        %v720 = vpack.c.bf16 %v696, %v693
        %v721 = vpack.c.bf16 %v697, %v694
        %v722 = vpack.c.bf16 %v698, %v695
        %v723 = vld [vmem:[%s1] sm:$0xff]
        %v724 = vld [vmem:[%s1 + $0x8] sm:$0xff]
        %v725 = vld [vmem:[%s1 + $0x10] sm:$0xff]
        %v726 = vld [vmem:[%s1 + $0x18] sm:$0xff]
        %v727 = vld [vmem:[%s1 + $0x20] sm:$0xff]
        %v728 = vld [vmem:[%s1 + $0x28] sm:$0xff]
        %v729 = vld [vmem:[%s1 + $0x30] sm:$0xff]
        %v730 = vld [vmem:[%s1 + $0x38] sm:$0xff]
        %v731 = vld [vmem:[%s1 + $0x40] sm:$0xff]
        %v732 = vld [vmem:[%s1 + $0x48] sm:$0xff]
        %v733 = vld [vmem:[%s1 + $0x50] sm:$0xff]
        %v734 = vld [vmem:[%s1 + $0x58] sm:$0xff]
        %v735 = vld [vmem:[%s1 + $0x60] sm:$0xff]
        %v736 = vld [vmem:[%s1 + $0x68] sm:$0xff]
        %v737 = vld [vmem:[%s1 + $0x70] sm:$0xff]
        %v738 = vld [vmem:[%s1 + $0x78] sm:$0xff]
        %v739 = vld [vmem:[%s1 + $0x80] sm:$0xff]
        %v740 = vld [vmem:[%s1 + $0x88] sm:$0xff]
        %v741 = vld [vmem:[%s1 + $0x90] sm:$0xff]
        %v742 = vld [vmem:[%s1 + $0x98] sm:$0xff]
        %v743 = vld [vmem:[%s1 + $0xa0] sm:$0xff]
        %v744 = vld [vmem:[%s1 + $0xa8] sm:$0xff]
        %v745 = vld [vmem:[%s1 + $0xb0] sm:$0xff]
        %v746 = vld [vmem:[%s1 + $0xb8] sm:$0xff]
        %v747 = vld [vmem:[%s1 + $0xc0] sm:$0xff]
        %v748 = vld [vmem:[%s1 + $0xc8] sm:$0xff]
        %v749 = vld [vmem:[%s1 + $0xd0] sm:$0xff]
        %v750 = vld [vmem:[%s1 + $0xd8] sm:$0xff]
        %v751 = vld [vmem:[%s1 + $0xe0] sm:$0xff]
        %v752 = vld [vmem:[%s1 + $0xe8] sm:$0xff]
        %v753 = vld [vmem:[%s1 + $0xf0] sm:$0xff]
        %v754 = vld [vmem:[%s1 + $0xf8] sm:$0xff]
        %v755 = vld [vmem:[%s1 + $0x100] sm:$0xff]
        %v756 = vld [vmem:[%s1 + $0x108] sm:$0xff]
        %v757 = vld [vmem:[%s1 + $0x110] sm:$0xff]
        %v758 = vld [vmem:[%s1 + $0x118] sm:$0xff]
        %v759 = vld [vmem:[%s1 + $0x120] sm:$0xff]
        %v760 = vld [vmem:[%s1 + $0x128] sm:$0x33]
        %v761 = vld [vmem:[#allocation7] sm:$0x3]
        %v763 = vperm.slane %v761, 0
        %v764 = vperm.slane %v761, 1
        %v805 = vunpack.c.l.b16 %v723
        %v806 = vunpack.c.h.b16 %v723
        %v807 = vunpack.c.l.b16 %v724
        %v808 = vunpack.c.h.b16 %v724
        %v809 = vunpack.c.l.b16 %v725
        %v810 = vunpack.c.h.b16 %v725
        %v811 = vunpack.c.l.b16 %v726
        %v812 = vunpack.c.h.b16 %v726
        %v813 = vunpack.c.l.b16 %v727
        %v814 = vunpack.c.h.b16 %v727
        %v815 = vunpack.c.l.b16 %v728
        %v816 = vunpack.c.h.b16 %v728
        %v817 = vunpack.c.l.b16 %v729
        %v818 = vunpack.c.h.b16 %v729
        %v819 = vunpack.c.l.b16 %v730
        %v820 = vunpack.c.h.b16 %v730
        %v821 = vunpack.c.l.b16 %v731
        %v822 = vunpack.c.h.b16 %v731
        %v823 = vunpack.c.l.b16 %v732
        %v824 = vunpack.c.h.b16 %v732
        %v825 = vunpack.c.l.b16 %v733
        %v826 = vunpack.c.h.b16 %v733
        %v827 = vunpack.c.l.b16 %v734
        %v828 = vunpack.c.h.b16 %v734
        %v829 = vunpack.c.l.b16 %v735
        %v830 = vunpack.c.h.b16 %v735
        %v831 = vunpack.c.l.b16 %v736
        %v832 = vunpack.c.h.b16 %v736
        %v833 = vunpack.c.l.b16 %v737
        %v834 = vunpack.c.h.b16 %v737
        %v835 = vunpack.c.l.b16 %v738
        %v836 = vunpack.c.h.b16 %v738
        %v837 = vunpack.c.l.b16 %v739
        %v838 = vunpack.c.h.b16 %v739
        %v839 = vunpack.c.l.b16 %v740
        %v840 = vunpack.c.h.b16 %v740
        %v841 = vunpack.c.l.b16 %v741
        %v842 = vunpack.c.h.b16 %v741
        %v843 = vunpack.c.l.b16 %v742
        %v844 = vunpack.c.h.b16 %v742
        %v845 = vunpack.c.l.b16 %v743
        %v846 = vunpack.c.h.b16 %v743
        %v847 = vunpack.c.l.b16 %v744
        %v848 = vunpack.c.h.b16 %v744
        %v849 = vunpack.c.l.b16 %v745
        %v850 = vunpack.c.h.b16 %v745
        %v851 = vunpack.c.l.b16 %v746
        %v852 = vunpack.c.h.b16 %v746
        %v853 = vunpack.c.l.b16 %v747
        %v854 = vunpack.c.h.b16 %v747
        %v855 = vunpack.c.l.b16 %v748
        %v856 = vunpack.c.h.b16 %v748
        %v857 = vunpack.c.l.b16 %v749
        %v858 = vunpack.c.h.b16 %v749
        %v859 = vunpack.c.l.b16 %v750
        %v860 = vunpack.c.h.b16 %v750
        %v861 = vunpack.c.l.b16 %v751
        %v862 = vunpack.c.h.b16 %v751
        %v863 = vunpack.c.l.b16 %v752
        %v864 = vunpack.c.h.b16 %v752
        %v865 = vunpack.c.l.b16 %v753
        %v866 = vunpack.c.h.b16 %v753
        %v867 = vunpack.c.l.b16 %v754
        %v868 = vunpack.c.h.b16 %v754
        %v869 = vunpack.c.l.b16 %v755
        %v870 = vunpack.c.h.b16 %v755
        %v871 = vunpack.c.l.b16 %v756
        %v872 = vunpack.c.h.b16 %v756
        %v873 = vunpack.c.l.b16 %v757
        %v874 = vunpack.c.h.b16 %v757
        %v875 = vunpack.c.l.b16 %v758
        %v876 = vunpack.c.h.b16 %v758
        %v877 = vunpack.c.l.b16 %v759
        %v878 = vunpack.c.h.b16 %v759
        %v879 = vunpack.c.l.b16 %v760
        %v880 = vunpack.c.h.b16 %v760
        %v881 = vpack.c.b16 %v807, %v805
        %v882 = vpack.c.b16 %v808, %v806
        %v883 = vpack.c.b16 %v811, %v809
        %v884 = vpack.c.b16 %v812, %v810
        %v885 = vpack.c.b16 %v815, %v813
        %v886 = vpack.c.b16 %v816, %v814
        %v887 = vpack.c.b16 %v819, %v817
        %v888 = vpack.c.b16 %v820, %v818
        %v889 = vpack.c.b16 %v823, %v821
        %v890 = vpack.c.b16 %v824, %v822
        %v891 = vpack.c.b16 %v827, %v825
        %v892 = vpack.c.b16 %v828, %v826
        %v893 = vpack.c.b16 %v831, %v829
        %v894 = vpack.c.b16 %v832, %v830
        %v895 = vpack.c.b16 %v835, %v833
        %v896 = vpack.c.b16 %v836, %v834
        %v897 = vpack.c.b16 %v839, %v837
        %v898 = vpack.c.b16 %v840, %v838
        %v899 = vpack.c.b16 %v843, %v841
        %v900 = vpack.c.b16 %v844, %v842
        %v901 = vpack.c.b16 %v847, %v845
        %v902 = vpack.c.b16 %v848, %v846
        %v903 = vpack.c.b16 %v851, %v849
        %v904 = vpack.c.b16 %v852, %v850
        %v905 = vpack.c.b16 %v855, %v853
        %v906 = vpack.c.b16 %v856, %v854
        %v907 = vpack.c.b16 %v859, %v857
        %v908 = vpack.c.b16 %v860, %v858
        %v909 = vpack.c.b16 %v863, %v861
        %v910 = vpack.c.b16 %v864, %v862
        %v911 = vpack.c.b16 %v867, %v865
        %v912 = vpack.c.b16 %v868, %v866
        %v913 = vpack.c.b16 %v871, %v869
        %v914 = vpack.c.b16 %v872, %v870
        %v915 = vpack.c.b16 %v875, %v873
        %v916 = vpack.c.b16 %v876, %v874
        %v917 = vpack.c.b16 %v879, %v877
        %v918 = vpack.c.b16 %v880, %v878
        %vm955 = vcmask 359424
        %v957 = vsel %vm955, %v701, 0
        %v960 = vsel %vm955, %v704, 0
        %v963 = vsel %vm955, %v707, 0
        %v966 = vsel %vm955, %v710, 0
        %v969 = vsel %vm955, %v713, 0
        %v972 = vsel %vm955, %v716, 0
        %v975 = vsel %vm955, %v719, 0
        %v978 = vsel %vm955, %v722, 0
        %vm980 = vcmask 1045504
        %v982 = vsel %vm980, %v917, 0
        %v985 = vsel %vm980, %v918, 0
        %987 = vmatpush.bf16.msra.mxu0 %v895
        %988 = vmatpush.bf16.msra.mxu0 %v893
        %989 = vmatpush.bf16.msra.mxu0 %v891
        %990 = vmatpush.bf16.msra.mxu0 %v889
        %991 = vmatpush.bf16.msra.mxu0 %v887
        %992 = vmatpush.bf16.msra.mxu0 %v885
        %993 = vmatpush.bf16.msra.mxu0 %v883
        %994 = vmatpush.bf16.msra.mxu0 %v881
        %995 = vmatmul.bf16.gmra.mxu0 %v699
        %v996 = vpop.f32.mrf.mxu0
        %v997 = vadd.f32 %v763, %v996
        %v998 = vpop.f32.mrf.mxu0
        %v999 = vadd.f32 %v763, %v998
        %1000 = vmatmul.bf16.gmra.mxu0 %v702
        %v1001 = vpop.f32.mrf.mxu0
        %v1002 = vadd.f32 %v763, %v1001
        %v1003 = vpop.f32.mrf.mxu0
        %v1004 = vadd.f32 %v763, %v1003
        %1005 = vmatmul.bf16.gmra.mxu0 %v705
        %v1006 = vpop.f32.mrf.mxu0
        %v1007 = vadd.f32 %v763, %v1006
        %v1008 = vpop.f32.mrf.mxu0
        %v1009 = vadd.f32 %v763, %v1008
        %1010 = vmatmul.bf16.gmra.mxu0 %v708
        %v1011 = vpop.f32.mrf.mxu0
        %v1012 = vadd.f32 %v763, %v1011
        %v1013 = vpop.f32.mrf.mxu0
        %v1014 = vadd.f32 %v763, %v1013
        %1015 = vmatmul.bf16.gmra.mxu0 %v711
        %v1016 = vpop.f32.mrf.mxu0
        %v1017 = vadd.f32 %v763, %v1016
        %v1018 = vpop.f32.mrf.mxu0
        %v1019 = vadd.f32 %v763, %v1018
        %1020 = vmatmul.bf16.gmra.mxu0 %v714
        %v1021 = vpop.f32.mrf.mxu0
        %v1022 = vadd.f32 %v763, %v1021
        %v1023 = vpop.f32.mrf.mxu0
        %v1024 = vadd.f32 %v763, %v1023
        %1025 = vmatmul.bf16.gmra.mxu0 %v717
        %v1026 = vpop.f32.mrf.mxu0
        %v1027 = vadd.f32 %v763, %v1026
        %v1028 = vpop.f32.mrf.mxu0
        %v1029 = vadd.f32 %v763, %v1028
        %1030 = vmatmul.bf16.gmra.mxu0 %v720
        %v1031 = vpop.f32.mrf.mxu0
        %v1032 = vadd.f32 %v763, %v1031
        %v1033 = vpop.f32.mrf.mxu0
        %v1034 = vadd.f32 %v763, %v1033
        %1035 = vdwg.mxu0
        %1036 = vmatpush.bf16.msra.mxu0 %v911
        %1037 = vmatpush.bf16.msra.mxu0 %v909
        %1038 = vmatpush.bf16.msra.mxu0 %v907
        %1039 = vmatpush.bf16.msra.mxu0 %v905
        %1040 = vmatpush.bf16.msra.mxu0 %v903
        %1041 = vmatpush.bf16.msra.mxu0 %v901
        %1042 = vmatpush.bf16.msra.mxu0 %v899
        %1043 = vmatpush.bf16.msra.mxu0 %v897
        %1044 = vmatmul.bf16.gmra.mxu0 %v700
        %v1045 = vpop.f32.mrf.mxu0
        %v1046 = vadd.f32 %v997, %v1045
        %v1047 = vpop.f32.mrf.mxu0
        %v1048 = vadd.f32 %v999, %v1047
        %1049 = vmatmul.bf16.gmra.mxu0 %v703
        %v1050 = vpop.f32.mrf.mxu0
        %v1051 = vadd.f32 %v1002, %v1050
        %v1052 = vpop.f32.mrf.mxu0
        %v1053 = vadd.f32 %v1004, %v1052
        %1054 = vmatmul.bf16.gmra.mxu0 %v706
        %v1055 = vpop.f32.mrf.mxu0
        %v1056 = vadd.f32 %v1007, %v1055
        %v1057 = vpop.f32.mrf.mxu0
        %v1058 = vadd.f32 %v1009, %v1057
        %1059 = vmatmul.bf16.gmra.mxu0 %v709
        %v1060 = vpop.f32.mrf.mxu0
        %v1061 = vadd.f32 %v1012, %v1060
        %v1062 = vpop.f32.mrf.mxu0
        %v1063 = vadd.f32 %v1014, %v1062
        %1064 = vmatmul.bf16.gmra.mxu0 %v712
        %v1065 = vpop.f32.mrf.mxu0
        %v1066 = vadd.f32 %v1017, %v1065
        %v1067 = vpop.f32.mrf.mxu0
        %v1068 = vadd.f32 %v1019, %v1067
        %1069 = vmatmul.bf16.gmra.mxu0 %v715
        %v1070 = vpop.f32.mrf.mxu0
        %v1071 = vadd.f32 %v1022, %v1070
        %v1072 = vpop.f32.mrf.mxu0
        %v1073 = vadd.f32 %v1024, %v1072
        %1074 = vmatmul.bf16.gmra.mxu0 %v718
        %v1075 = vpop.f32.mrf.mxu0
        %v1076 = vadd.f32 %v1027, %v1075
        %v1077 = vpop.f32.mrf.mxu0
        %v1078 = vadd.f32 %v1029, %v1077
        %1079 = vmatmul.bf16.gmra.mxu0 %v721
        %v1080 = vpop.f32.mrf.mxu0
        %v1081 = vadd.f32 %v1032, %v1080
        %v1082 = vpop.f32.mrf.mxu0
        %v1083 = vadd.f32 %v1034, %v1082
        %1084 = vdwg.mxu0
        %1085 = vmatpush.bf16.msra.mxu0 0
        %1086 = vmatpush.bf16.msra.mxu0 0
        %1087 = vmatpush.bf16.msra.mxu0 0
        %1088 = vmatpush.bf16.msra.mxu0 0
        %1089 = vmatpush.bf16.msra.mxu0 0
        %1090 = vmatpush.bf16.msra.mxu0 %v982
        %1091 = vmatpush.bf16.msra.mxu0 %v915
        %1092 = vmatpush.bf16.msra.mxu0 %v913
        %1093 = vmatmul.bf16.gmra.mxu0 %v957
        %v1094 = vpop.f32.mrf.mxu0
        %v1095 = vadd.f32 %v1046, %v1094
        %v1096 = vpop.f32.mrf.mxu0
        %v1097 = vadd.f32 %v1048, %v1096
        %1098 = vmatmul.bf16.gmra.mxu0 %v960
        %v1099 = vpop.f32.mrf.mxu0
        %v1100 = vadd.f32 %v1051, %v1099
        %v1101 = vpop.f32.mrf.mxu0
        %v1102 = vadd.f32 %v1053, %v1101
        %1103 = vmatmul.bf16.gmra.mxu0 %v963
        %v1104 = vpop.f32.mrf.mxu0
        %v1105 = vadd.f32 %v1056, %v1104
        %v1106 = vpop.f32.mrf.mxu0
        %v1107 = vadd.f32 %v1058, %v1106
        %1108 = vmatmul.bf16.gmra.mxu0 %v966
        %v1109 = vpop.f32.mrf.mxu0
        %v1110 = vadd.f32 %v1061, %v1109
        %v1111 = vpop.f32.mrf.mxu0
        %v1112 = vadd.f32 %v1063, %v1111
        %1113 = vmatmul.bf16.gmra.mxu0 %v969
        %v1114 = vpop.f32.mrf.mxu0
        %v1115 = vadd.f32 %v1066, %v1114
        %v1116 = vpop.f32.mrf.mxu0
        %v1117 = vadd.f32 %v1068, %v1116
        %1118 = vmatmul.bf16.gmra.mxu0 %v972
        %v1119 = vpop.f32.mrf.mxu0
        %v1120 = vadd.f32 %v1071, %v1119
        %v1121 = vpop.f32.mrf.mxu0
        %v1122 = vadd.f32 %v1073, %v1121
        %1123 = vmatmul.bf16.gmra.mxu0 %v975
        %v1124 = vpop.f32.mrf.mxu0
        %v1125 = vadd.f32 %v1076, %v1124
        %v1126 = vpop.f32.mrf.mxu0
        %v1127 = vadd.f32 %v1078, %v1126
        %1128 = vmatmul.bf16.gmra.mxu0 %v978
        %v1129 = vpop.f32.mrf.mxu0
        %v1130 = vadd.f32 %v1081, %v1129
        %v1131 = vpop.f32.mrf.mxu0
        %v1132 = vadd.f32 %v1083, %v1131
        %1133 = vdwg.mxu0
        %1134 = vmatpush.bf16.msra.mxu0 %v896
        %1135 = vmatpush.bf16.msra.mxu0 %v894
        %1136 = vmatpush.bf16.msra.mxu0 %v892
        %1137 = vmatpush.bf16.msra.mxu0 %v890
        %1138 = vmatpush.bf16.msra.mxu0 %v888
        %1139 = vmatpush.bf16.msra.mxu0 %v886
        %1140 = vmatpush.bf16.msra.mxu0 %v884
        %1141 = vmatpush.bf16.msra.mxu0 %v882
        %1142 = vmatmul.bf16.gmra.mxu0 %v699
        %v1143 = vpop.f32.mrf.mxu0
        %v1144 = vadd.f32 %v764, %v1143
        %v1145 = vpop.f32.mrf.mxu0
        %v1146 = vadd.f32 %v764, %v1145
        %1147 = vmatmul.bf16.gmra.mxu0 %v702
        %v1148 = vpop.f32.mrf.mxu0
        %v1149 = vadd.f32 %v764, %v1148
        %v1150 = vpop.f32.mrf.mxu0
        %v1151 = vadd.f32 %v764, %v1150
        %1152 = vmatmul.bf16.gmra.mxu0 %v705
        %v1153 = vpop.f32.mrf.mxu0
        %v1154 = vadd.f32 %v764, %v1153
        %v1155 = vpop.f32.mrf.mxu0
        %v1156 = vadd.f32 %v764, %v1155
        %1157 = vmatmul.bf16.gmra.mxu0 %v708
        %v1158 = vpop.f32.mrf.mxu0
        %v1159 = vadd.f32 %v764, %v1158
        %v1160 = vpop.f32.mrf.mxu0
        %v1161 = vadd.f32 %v764, %v1160
        %1162 = vmatmul.bf16.gmra.mxu0 %v711
        %v1163 = vpop.f32.mrf.mxu0
        %v1164 = vadd.f32 %v764, %v1163
        %v1165 = vpop.f32.mrf.mxu0
        %v1166 = vadd.f32 %v764, %v1165
        %1167 = vmatmul.bf16.gmra.mxu0 %v714
        %v1168 = vpop.f32.mrf.mxu0
        %v1169 = vadd.f32 %v764, %v1168
        %v1170 = vpop.f32.mrf.mxu0
        %v1171 = vadd.f32 %v764, %v1170
        %1172 = vmatmul.bf16.gmra.mxu0 %v717
        %v1173 = vpop.f32.mrf.mxu0
        %v1174 = vadd.f32 %v764, %v1173
        %v1175 = vpop.f32.mrf.mxu0
        %v1176 = vadd.f32 %v764, %v1175
        %1177 = vmatmul.bf16.gmra.mxu0 %v720
        %v1178 = vpop.f32.mrf.mxu0
        %v1179 = vadd.f32 %v764, %v1178
        %v1180 = vpop.f32.mrf.mxu0
        %v1181 = vadd.f32 %v764, %v1180
        %1182 = vdwg.mxu0
        %1183 = vmatpush.bf16.msra.mxu0 %v912
        %1184 = vmatpush.bf16.msra.mxu0 %v910
        %1185 = vmatpush.bf16.msra.mxu0 %v908
        %1186 = vmatpush.bf16.msra.mxu0 %v906
        %1187 = vmatpush.bf16.msra.mxu0 %v904
        %1188 = vmatpush.bf16.msra.mxu0 %v902
        %1189 = vmatpush.bf16.msra.mxu0 %v900
        %1190 = vmatpush.bf16.msra.mxu0 %v898
        %1191 = vmatmul.bf16.gmra.mxu0 %v700
        %v1192 = vpop.f32.mrf.mxu0
        %v1193 = vadd.f32 %v1144, %v1192
        %v1194 = vpop.f32.mrf.mxu0
        %v1195 = vadd.f32 %v1146, %v1194
        %1196 = vmatmul.bf16.gmra.mxu0 %v703
        %v1197 = vpop.f32.mrf.mxu0
        %v1198 = vadd.f32 %v1149, %v1197
        %v1199 = vpop.f32.mrf.mxu0
        %v1200 = vadd.f32 %v1151, %v1199
        %1201 = vmatmul.bf16.gmra.mxu0 %v706
        %v1202 = vpop.f32.mrf.mxu0
        %v1203 = vadd.f32 %v1154, %v1202
        %v1204 = vpop.f32.mrf.mxu0
        %v1205 = vadd.f32 %v1156, %v1204
        %1206 = vmatmul.bf16.gmra.mxu0 %v709
        %v1207 = vpop.f32.mrf.mxu0
        %v1208 = vadd.f32 %v1159, %v1207
        %v1209 = vpop.f32.mrf.mxu0
        %v1210 = vadd.f32 %v1161, %v1209
        %1211 = vmatmul.bf16.gmra.mxu0 %v712
        %v1212 = vpop.f32.mrf.mxu0
        %v1213 = vadd.f32 %v1164, %v1212
        %v1214 = vpop.f32.mrf.mxu0
        %v1215 = vadd.f32 %v1166, %v1214
        %1216 = vmatmul.bf16.gmra.mxu0 %v715
        %v1217 = vpop.f32.mrf.mxu0
        %v1218 = vadd.f32 %v1169, %v1217
        %v1219 = vpop.f32.mrf.mxu0
        %v1220 = vadd.f32 %v1171, %v1219
        %1221 = vmatmul.bf16.gmra.mxu0 %v718
        %v1222 = vpop.f32.mrf.mxu0
        %v1223 = vadd.f32 %v1174, %v1222
        %v1224 = vpop.f32.mrf.mxu0
        %v1225 = vadd.f32 %v1176, %v1224
        %1226 = vmatmul.bf16.gmra.mxu0 %v721
        %v1227 = vpop.f32.mrf.mxu0
        %v1228 = vadd.f32 %v1179, %v1227
        %v1229 = vpop.f32.mrf.mxu0
        %v1230 = vadd.f32 %v1181, %v1229
        %1231 = vdwg.mxu0
        %1232 = vmatpush.bf16.msra.mxu0 0
        %1233 = vmatpush.bf16.msra.mxu0 0
        %1234 = vmatpush.bf16.msra.mxu0 0
        %1235 = vmatpush.bf16.msra.mxu0 0
        %1236 = vmatpush.bf16.msra.mxu0 0
        %1237 = vmatpush.bf16.msra.mxu0 %v985
        %1238 = vmatpush.bf16.msra.mxu0 %v916
        %1239 = vmatpush.bf16.msra.mxu0 %v914
        %1240 = vmatmul.bf16.gmra.mxu0 %v957
        %v1241 = vpop.f32.mrf.mxu0
        %v1242 = vadd.f32 %v1193, %v1241
        %v1243 = vpop.f32.mrf.mxu0
        %v1244 = vadd.f32 %v1195, %v1243
        %1245 = vmatmul.bf16.gmra.mxu0 %v960
        %v1246 = vpop.f32.mrf.mxu0
        %v1247 = vadd.f32 %v1198, %v1246
        %v1248 = vpop.f32.mrf.mxu0
        %v1249 = vadd.f32 %v1200, %v1248
        %1250 = vmatmul.bf16.gmra.mxu0 %v963
        %v1251 = vpop.f32.mrf.mxu0
        %v1252 = vadd.f32 %v1203, %v1251
        %v1253 = vpop.f32.mrf.mxu0
        %v1254 = vadd.f32 %v1205, %v1253
        %1255 = vmatmul.bf16.gmra.mxu0 %v966
        %v1256 = vpop.f32.mrf.mxu0
        %v1257 = vadd.f32 %v1208, %v1256
        %v1258 = vpop.f32.mrf.mxu0
        %v1259 = vadd.f32 %v1210, %v1258
        %1260 = vmatmul.bf16.gmra.mxu0 %v969
        %v1261 = vpop.f32.mrf.mxu0
        %v1262 = vadd.f32 %v1213, %v1261
        %v1263 = vpop.f32.mrf.mxu0
        %v1264 = vadd.f32 %v1215, %v1263
        %1265 = vmatmul.bf16.gmra.mxu0 %v972
        %v1266 = vpop.f32.mrf.mxu0
        %v1267 = vadd.f32 %v1218, %v1266
        %v1268 = vpop.f32.mrf.mxu0
        %v1269 = vadd.f32 %v1220, %v1268
        %1270 = vmatmul.bf16.gmra.mxu0 %v975
        %v1271 = vpop.f32.mrf.mxu0
        %v1272 = vadd.f32 %v1223, %v1271
        %v1273 = vpop.f32.mrf.mxu0
        %v1274 = vadd.f32 %v1225, %v1273
        %1275 = vmatmul.bf16.gmra.mxu0 %v978
        %v1276 = vpop.f32.mrf.mxu0
        %v1277 = vadd.f32 %v1228, %v1276
        %v1278 = vpop.f32.mrf.mxu0
        %v1279 = vadd.f32 %v1230, %v1278
        %1280 = vdwg.mxu0
        %1281 = vst [vmem:[#allocation2] sm:$0xff] %v1095
        %vm1282 = vcmask 523264
        %1283 = vst.msk [vmem:[#allocation2 + $0x8] sm:$0xff] %vm1282, %v1242
        %1284 = vst [vmem:[#allocation2 + $0x10] sm:$0xff] %v1097
        %1285 = vst.msk [vmem:[#allocation2 + $0x18] sm:$0xff] %vm1282, %v1244
        %1286 = vst [vmem:[#allocation2 + $0x20] sm:$0xff] %v1100
        %1287 = vst.msk [vmem:[#allocation2 + $0x28] sm:$0xff] %vm1282, %v1247
        %1288 = vst [vmem:[#allocation2 + $0x30] sm:$0xff] %v1102
        %1289 = vst.msk [vmem:[#allocation2 + $0x38] sm:$0xff] %vm1282, %v1249
        %1290 = vst [vmem:[#allocation2 + $0x40] sm:$0xff] %v1105
        %1291 = vst.msk [vmem:[#allocation2 + $0x48] sm:$0xff] %vm1282, %v1252
        %1292 = vst [vmem:[#allocation2 + $0x50] sm:$0xff] %v1107
        %1293 = vst.msk [vmem:[#allocation2 + $0x58] sm:$0xff] %vm1282, %v1254
        %1294 = vst [vmem:[#allocation2 + $0x60] sm:$0xff] %v1110
        %1295 = vst.msk [vmem:[#allocation2 + $0x68] sm:$0xff] %vm1282, %v1257
        %1296 = vst [vmem:[#allocation2 + $0x70] sm:$0xff] %v1112
        %1297 = vst.msk [vmem:[#allocation2 + $0x78] sm:$0xff] %vm1282, %v1259
        %1298 = vst [vmem:[#allocation2 + $0x80] sm:$0xff] %v1115
        %1299 = vst.msk [vmem:[#allocation2 + $0x88] sm:$0xff] %vm1282, %v1262
        %1300 = vst [vmem:[#allocation2 + $0x90] sm:$0xff] %v1117
        %1301 = vst.msk [vmem:[#allocation2 + $0x98] sm:$0xff] %vm1282, %v1264
        %1302 = vst [vmem:[#allocation2 + $0xa0] sm:$0xff] %v1120
        %1303 = vst.msk [vmem:[#allocation2 + $0xa8] sm:$0xff] %vm1282, %v1267
        %1304 = vst [vmem:[#allocation2 + $0xb0] sm:$0xff] %v1122
        %1305 = vst.msk [vmem:[#allocation2 + $0xb8] sm:$0xff] %vm1282, %v1269
        %1306 = vst [vmem:[#allocation2 + $0xc0] sm:$0xff] %v1125
        %1307 = vst.msk [vmem:[#allocation2 + $0xc8] sm:$0xff] %vm1282, %v1272
        %1308 = vst [vmem:[#allocation2 + $0xd0] sm:$0xff] %v1127
        %1309 = vst.msk [vmem:[#allocation2 + $0xd8] sm:$0xff] %vm1282, %v1274
        %1310 = vst [vmem:[#allocation2 + $0xe0] sm:$0xff] %v1130
        %1311 = vst.msk [vmem:[#allocation2 + $0xe8] sm:$0xff] %vm1282, %v1277
        %1312 = vst [vmem:[#allocation2 + $0xf0] sm:$0xff] %v1132
        %1313 = vst.msk [vmem:[#allocation2 + $0xf8] sm:$0xff] %vm1282, %v1279
        %v1314 = vld [vmem:[%s2] sm:$0xff]
        %v1315 = vld [vmem:[%s2 + $0x8] sm:$0xff]
        %v1316 = vld [vmem:[%s2 + $0x10] sm:$0xff]
        %v1317 = vld [vmem:[%s2 + $0x18] sm:$0xff]
        %v1318 = vld [vmem:[%s2 + $0x20] sm:$0xff]
        %v1319 = vld [vmem:[%s2 + $0x28] sm:$0xff]
        %v1320 = vld [vmem:[%s2 + $0x30] sm:$0xff]
        %v1321 = vld [vmem:[%s2 + $0x38] sm:$0xff]
        %v1322 = vld [vmem:[%s2 + $0x40] sm:$0xff]
        %v1323 = vld [vmem:[%s2 + $0x48] sm:$0xff]
        %v1324 = vld [vmem:[%s2 + $0x50] sm:$0xff]
        %v1325 = vld [vmem:[%s2 + $0x58] sm:$0xff]
        %v1326 = vld [vmem:[%s2 + $0x60] sm:$0xff]
        %v1327 = vld [vmem:[%s2 + $0x68] sm:$0xff]
        %v1328 = vld [vmem:[%s2 + $0x70] sm:$0xff]
        %v1329 = vld [vmem:[%s2 + $0x78] sm:$0xff]
        %v1330 = vld [vmem:[%s2 + $0x80] sm:$0xff]
        %v1331 = vld [vmem:[%s2 + $0x88] sm:$0xff]
        %v1332 = vld [vmem:[%s2 + $0x90] sm:$0xff]
        %v1333 = vld [vmem:[%s2 + $0x98] sm:$0xff]
        %v1334 = vld [vmem:[%s2 + $0xa0] sm:$0xff]
        %v1335 = vld [vmem:[%s2 + $0xa8] sm:$0xff]
        %v1336 = vld [vmem:[%s2 + $0xb0] sm:$0xff]
        %v1337 = vld [vmem:[%s2 + $0xb8] sm:$0xff]
        %v1338 = vld [vmem:[%s2 + $0xc0] sm:$0xff]
        %v1339 = vld [vmem:[%s2 + $0xc8] sm:$0xff]
        %v1340 = vld [vmem:[%s2 + $0xd0] sm:$0xff]
        %v1341 = vld [vmem:[%s2 + $0xd8] sm:$0xff]
        %v1342 = vld [vmem:[%s2 + $0xe0] sm:$0xff]
        %v1343 = vld [vmem:[%s2 + $0xe8] sm:$0xff]
        %v1344 = vld [vmem:[%s2 + $0xf0] sm:$0xff]
        %v1345 = vld [vmem:[%s2 + $0xf8] sm:$0xff]
        %v1346 = vld [vmem:[%s2 + $0x100] sm:$0xff]
        %v1347 = vld [vmem:[%s2 + $0x108] sm:$0xff]
        %v1348 = vld [vmem:[%s2 + $0x110] sm:$0xff]
        %v1349 = vld [vmem:[%s2 + $0x118] sm:$0xff]
        %v1350 = vld [vmem:[%s2 + $0x120] sm:$0xff]
        %v1351 = vld [vmem:[%s2 + $0x128] sm:$0x33]
        %v1352 = vld [vmem:[#allocation10] sm:$0x3]
        %v1354 = vperm.slane %v1352, 0
        %v1355 = vperm.slane %v1352, 1
        %v1396 = vunpack.c.l.b16 %v1314
        %v1397 = vunpack.c.h.b16 %v1314
        %v1398 = vunpack.c.l.b16 %v1315
        %v1399 = vunpack.c.h.b16 %v1315
        %v1400 = vunpack.c.l.b16 %v1316
        %v1401 = vunpack.c.h.b16 %v1316
        %v1402 = vunpack.c.l.b16 %v1317
        %v1403 = vunpack.c.h.b16 %v1317
        %v1404 = vunpack.c.l.b16 %v1318
        %v1405 = vunpack.c.h.b16 %v1318
        %v1406 = vunpack.c.l.b16 %v1319
        %v1407 = vunpack.c.h.b16 %v1319
        %v1408 = vunpack.c.l.b16 %v1320
        %v1409 = vunpack.c.h.b16 %v1320
        %v1410 = vunpack.c.l.b16 %v1321
        %v1411 = vunpack.c.h.b16 %v1321
        %v1412 = vunpack.c.l.b16 %v1322
        %v1413 = vunpack.c.h.b16 %v1322
        %v1414 = vunpack.c.l.b16 %v1323
        %v1415 = vunpack.c.h.b16 %v1323
        %v1416 = vunpack.c.l.b16 %v1324
        %v1417 = vunpack.c.h.b16 %v1324
        %v1418 = vunpack.c.l.b16 %v1325
        %v1419 = vunpack.c.h.b16 %v1325
        %v1420 = vunpack.c.l.b16 %v1326
        %v1421 = vunpack.c.h.b16 %v1326
        %v1422 = vunpack.c.l.b16 %v1327
        %v1423 = vunpack.c.h.b16 %v1327
        %v1424 = vunpack.c.l.b16 %v1328
        %v1425 = vunpack.c.h.b16 %v1328
        %v1426 = vunpack.c.l.b16 %v1329
        %v1427 = vunpack.c.h.b16 %v1329
        %v1428 = vunpack.c.l.b16 %v1330
        %v1429 = vunpack.c.h.b16 %v1330
        %v1430 = vunpack.c.l.b16 %v1331
        %v1431 = vunpack.c.h.b16 %v1331
        %v1432 = vunpack.c.l.b16 %v1332
        %v1433 = vunpack.c.h.b16 %v1332
        %v1434 = vunpack.c.l.b16 %v1333
        %v1435 = vunpack.c.h.b16 %v1333
        %v1436 = vunpack.c.l.b16 %v1334
        %v1437 = vunpack.c.h.b16 %v1334
        %v1438 = vunpack.c.l.b16 %v1335
        %v1439 = vunpack.c.h.b16 %v1335
        %v1440 = vunpack.c.l.b16 %v1336
        %v1441 = vunpack.c.h.b16 %v1336
        %v1442 = vunpack.c.l.b16 %v1337
        %v1443 = vunpack.c.h.b16 %v1337
        %v1444 = vunpack.c.l.b16 %v1338
        %v1445 = vunpack.c.h.b16 %v1338
        %v1446 = vunpack.c.l.b16 %v1339
        %v1447 = vunpack.c.h.b16 %v1339
        %v1448 = vunpack.c.l.b16 %v1340
        %v1449 = vunpack.c.h.b16 %v1340
        %v1450 = vunpack.c.l.b16 %v1341
        %v1451 = vunpack.c.h.b16 %v1341
        %v1452 = vunpack.c.l.b16 %v1342
        %v1453 = vunpack.c.h.b16 %v1342
        %v1454 = vunpack.c.l.b16 %v1343
        %v1455 = vunpack.c.h.b16 %v1343
        %v1456 = vunpack.c.l.b16 %v1344
        %v1457 = vunpack.c.h.b16 %v1344
        %v1458 = vunpack.c.l.b16 %v1345
        %v1459 = vunpack.c.h.b16 %v1345
        %v1460 = vunpack.c.l.b16 %v1346
        %v1461 = vunpack.c.h.b16 %v1346
        %v1462 = vunpack.c.l.b16 %v1347
        %v1463 = vunpack.c.h.b16 %v1347
        %v1464 = vunpack.c.l.b16 %v1348
        %v1465 = vunpack.c.h.b16 %v1348
        %v1466 = vunpack.c.l.b16 %v1349
        %v1467 = vunpack.c.h.b16 %v1349
        %v1468 = vunpack.c.l.b16 %v1350
        %v1469 = vunpack.c.h.b16 %v1350
        %v1470 = vunpack.c.l.b16 %v1351
        %v1471 = vunpack.c.h.b16 %v1351
        %v1472 = vpack.c.b16 %v1398, %v1396
        %v1473 = vpack.c.b16 %v1399, %v1397
        %v1474 = vpack.c.b16 %v1402, %v1400
        %v1475 = vpack.c.b16 %v1403, %v1401
        %v1476 = vpack.c.b16 %v1406, %v1404
        %v1477 = vpack.c.b16 %v1407, %v1405
        %v1478 = vpack.c.b16 %v1410, %v1408
        %v1479 = vpack.c.b16 %v1411, %v1409
        %v1480 = vpack.c.b16 %v1414, %v1412
        %v1481 = vpack.c.b16 %v1415, %v1413
        %v1482 = vpack.c.b16 %v1418, %v1416
        %v1483 = vpack.c.b16 %v1419, %v1417
        %v1484 = vpack.c.b16 %v1422, %v1420
        %v1485 = vpack.c.b16 %v1423, %v1421
        %v1486 = vpack.c.b16 %v1426, %v1424
        %v1487 = vpack.c.b16 %v1427, %v1425
        %v1488 = vpack.c.b16 %v1430, %v1428
        %v1489 = vpack.c.b16 %v1431, %v1429
        %v1490 = vpack.c.b16 %v1434, %v1432
        %v1491 = vpack.c.b16 %v1435, %v1433
        %v1492 = vpack.c.b16 %v1438, %v1436
        %v1493 = vpack.c.b16 %v1439, %v1437
        %v1494 = vpack.c.b16 %v1442, %v1440
        %v1495 = vpack.c.b16 %v1443, %v1441
        %v1496 = vpack.c.b16 %v1446, %v1444
        %v1497 = vpack.c.b16 %v1447, %v1445
        %v1498 = vpack.c.b16 %v1450, %v1448
        %v1499 = vpack.c.b16 %v1451, %v1449
        %v1500 = vpack.c.b16 %v1454, %v1452
        %v1501 = vpack.c.b16 %v1455, %v1453
        %v1502 = vpack.c.b16 %v1458, %v1456
        %v1503 = vpack.c.b16 %v1459, %v1457
        %v1504 = vpack.c.b16 %v1462, %v1460
        %v1505 = vpack.c.b16 %v1463, %v1461
        %v1506 = vpack.c.b16 %v1466, %v1464
        %v1507 = vpack.c.b16 %v1467, %v1465
        %v1508 = vpack.c.b16 %v1470, %v1468
        %v1509 = vpack.c.b16 %v1471, %v1469
        %v1547 = vsel %vm980, %v1508, 0
        %v1550 = vsel %vm980, %v1509, 0
        %1552 = vmatpush.bf16.msra.mxu0 %v1486
        %1553 = vmatpush.bf16.msra.mxu0 %v1484
        %1554 = vmatpush.bf16.msra.mxu0 %v1482
        %1555 = vmatpush.bf16.msra.mxu0 %v1480
        %1556 = vmatpush.bf16.msra.mxu0 %v1478
        %1557 = vmatpush.bf16.msra.mxu0 %v1476
        %1558 = vmatpush.bf16.msra.mxu0 %v1474
        %1559 = vmatpush.bf16.msra.mxu0 %v1472
        %1560 = vmatmul.bf16.gmra.mxu0 %v699
        %v1561 = vpop.f32.mrf.mxu0
        %v1562 = vadd.f32 %v1354, %v1561
        %v1563 = vpop.f32.mrf.mxu0
        %v1564 = vadd.f32 %v1354, %v1563
        %1565 = vmatmul.bf16.gmra.mxu0 %v702
        %v1566 = vpop.f32.mrf.mxu0
        %v1567 = vadd.f32 %v1354, %v1566
        %v1568 = vpop.f32.mrf.mxu0
        %v1569 = vadd.f32 %v1354, %v1568
        %1570 = vmatmul.bf16.gmra.mxu0 %v705
        %v1571 = vpop.f32.mrf.mxu0
        %v1572 = vadd.f32 %v1354, %v1571
        %v1573 = vpop.f32.mrf.mxu0
        %v1574 = vadd.f32 %v1354, %v1573
        %1575 = vmatmul.bf16.gmra.mxu0 %v708
        %v1576 = vpop.f32.mrf.mxu0
        %v1577 = vadd.f32 %v1354, %v1576
        %v1578 = vpop.f32.mrf.mxu0
        %v1579 = vadd.f32 %v1354, %v1578
        %1580 = vmatmul.bf16.gmra.mxu0 %v711
        %v1581 = vpop.f32.mrf.mxu0
        %v1582 = vadd.f32 %v1354, %v1581
        %v1583 = vpop.f32.mrf.mxu0
        %v1584 = vadd.f32 %v1354, %v1583
        %1585 = vmatmul.bf16.gmra.mxu0 %v714
        %v1586 = vpop.f32.mrf.mxu0
        %v1587 = vadd.f32 %v1354, %v1586
        %v1588 = vpop.f32.mrf.mxu0
        %v1589 = vadd.f32 %v1354, %v1588
        %1590 = vmatmul.bf16.gmra.mxu0 %v717
        %v1591 = vpop.f32.mrf.mxu0
        %v1592 = vadd.f32 %v1354, %v1591
        %v1593 = vpop.f32.mrf.mxu0
        %v1594 = vadd.f32 %v1354, %v1593
        %1595 = vmatmul.bf16.gmra.mxu0 %v720
        %v1596 = vpop.f32.mrf.mxu0
        %v1597 = vadd.f32 %v1354, %v1596
        %v1598 = vpop.f32.mrf.mxu0
        %v1599 = vadd.f32 %v1354, %v1598
        %1600 = vdwg.mxu0
        %1601 = vmatpush.bf16.msra.mxu0 %v1502
        %1602 = vmatpush.bf16.msra.mxu0 %v1500
        %1603 = vmatpush.bf16.msra.mxu0 %v1498
        %1604 = vmatpush.bf16.msra.mxu0 %v1496
        %1605 = vmatpush.bf16.msra.mxu0 %v1494
        %1606 = vmatpush.bf16.msra.mxu0 %v1492
        %1607 = vmatpush.bf16.msra.mxu0 %v1490
        %1608 = vmatpush.bf16.msra.mxu0 %v1488
        %1609 = vmatmul.bf16.gmra.mxu0 %v700
        %v1610 = vpop.f32.mrf.mxu0
        %v1611 = vadd.f32 %v1562, %v1610
        %v1612 = vpop.f32.mrf.mxu0
        %v1613 = vadd.f32 %v1564, %v1612
        %1614 = vmatmul.bf16.gmra.mxu0 %v703
        %v1615 = vpop.f32.mrf.mxu0
        %v1616 = vadd.f32 %v1567, %v1615
        %v1617 = vpop.f32.mrf.mxu0
        %v1618 = vadd.f32 %v1569, %v1617
        %1619 = vmatmul.bf16.gmra.mxu0 %v706
        %v1620 = vpop.f32.mrf.mxu0
        %v1621 = vadd.f32 %v1572, %v1620
        %v1622 = vpop.f32.mrf.mxu0
        %v1623 = vadd.f32 %v1574, %v1622
        %1624 = vmatmul.bf16.gmra.mxu0 %v709
        %v1625 = vpop.f32.mrf.mxu0
        %v1626 = vadd.f32 %v1577, %v1625
        %v1627 = vpop.f32.mrf.mxu0
        %v1628 = vadd.f32 %v1579, %v1627
        %1629 = vmatmul.bf16.gmra.mxu0 %v712
        %v1630 = vpop.f32.mrf.mxu0
        %v1631 = vadd.f32 %v1582, %v1630
        %v1632 = vpop.f32.mrf.mxu0
        %v1633 = vadd.f32 %v1584, %v1632
        %1634 = vmatmul.bf16.gmra.mxu0 %v715
        %v1635 = vpop.f32.mrf.mxu0
        %v1636 = vadd.f32 %v1587, %v1635
        %v1637 = vpop.f32.mrf.mxu0
        %v1638 = vadd.f32 %v1589, %v1637
        %1639 = vmatmul.bf16.gmra.mxu0 %v718
        %v1640 = vpop.f32.mrf.mxu0
        %v1641 = vadd.f32 %v1592, %v1640
        %v1642 = vpop.f32.mrf.mxu0
        %v1643 = vadd.f32 %v1594, %v1642
        %1644 = vmatmul.bf16.gmra.mxu0 %v721
        %v1645 = vpop.f32.mrf.mxu0
        %v1646 = vadd.f32 %v1597, %v1645
        %v1647 = vpop.f32.mrf.mxu0
        %v1648 = vadd.f32 %v1599, %v1647
        %1649 = vdwg.mxu0
        %1650 = vmatpush.bf16.msra.mxu0 0
        %1651 = vmatpush.bf16.msra.mxu0 0
        %1652 = vmatpush.bf16.msra.mxu0 0
        %1653 = vmatpush.bf16.msra.mxu0 0
        %1654 = vmatpush.bf16.msra.mxu0 0
        %1655 = vmatpush.bf16.msra.mxu0 %v1547
        %1656 = vmatpush.bf16.msra.mxu0 %v1506
        %1657 = vmatpush.bf16.msra.mxu0 %v1504
        %1658 = vmatmul.bf16.gmra.mxu0 %v957
        %v1659 = vpop.f32.mrf.mxu0
        %v1660 = vadd.f32 %v1611, %v1659
        %v1661 = vpop.f32.mrf.mxu0
        %v1662 = vadd.f32 %v1613, %v1661
        %1663 = vmatmul.bf16.gmra.mxu0 %v960
        %v1664 = vpop.f32.mrf.mxu0
        %v1665 = vadd.f32 %v1616, %v1664
        %v1666 = vpop.f32.mrf.mxu0
        %v1667 = vadd.f32 %v1618, %v1666
        %1668 = vmatmul.bf16.gmra.mxu0 %v963
        %v1669 = vpop.f32.mrf.mxu0
        %v1670 = vadd.f32 %v1621, %v1669
        %v1671 = vpop.f32.mrf.mxu0
        %v1672 = vadd.f32 %v1623, %v1671
        %1673 = vmatmul.bf16.gmra.mxu0 %v966
        %v1674 = vpop.f32.mrf.mxu0
        %v1675 = vadd.f32 %v1626, %v1674
        %v1676 = vpop.f32.mrf.mxu0
        %v1677 = vadd.f32 %v1628, %v1676
        %1678 = vmatmul.bf16.gmra.mxu0 %v969
        %v1679 = vpop.f32.mrf.mxu0
        %v1680 = vadd.f32 %v1631, %v1679
        %v1681 = vpop.f32.mrf.mxu0
        %v1682 = vadd.f32 %v1633, %v1681
        %1683 = vmatmul.bf16.gmra.mxu0 %v972
        %v1684 = vpop.f32.mrf.mxu0
        %v1685 = vadd.f32 %v1636, %v1684
        %v1686 = vpop.f32.mrf.mxu0
        %v1687 = vadd.f32 %v1638, %v1686
        %1688 = vmatmul.bf16.gmra.mxu0 %v975
        %v1689 = vpop.f32.mrf.mxu0
        %v1690 = vadd.f32 %v1641, %v1689
        %v1691 = vpop.f32.mrf.mxu0
        %v1692 = vadd.f32 %v1643, %v1691
        %1693 = vmatmul.bf16.gmra.mxu0 %v978
        %v1694 = vpop.f32.mrf.mxu0
        %v1695 = vadd.f32 %v1646, %v1694
        %v1696 = vpop.f32.mrf.mxu0
        %v1697 = vadd.f32 %v1648, %v1696
        %1698 = vdwg.mxu0
        %1699 = vmatpush.bf16.msra.mxu0 %v1487
        %1700 = vmatpush.bf16.msra.mxu0 %v1485
        %1701 = vmatpush.bf16.msra.mxu0 %v1483
        %1702 = vmatpush.bf16.msra.mxu0 %v1481
        %1703 = vmatpush.bf16.msra.mxu0 %v1479
        %1704 = vmatpush.bf16.msra.mxu0 %v1477
        %1705 = vmatpush.bf16.msra.mxu0 %v1475
        %1706 = vmatpush.bf16.msra.mxu0 %v1473
        %1707 = vmatmul.bf16.gmra.mxu0 %v699
        %v1708 = vpop.f32.mrf.mxu0
        %v1709 = vadd.f32 %v1355, %v1708
        %v1710 = vpop.f32.mrf.mxu0
        %v1711 = vadd.f32 %v1355, %v1710
        %1712 = vmatmul.bf16.gmra.mxu0 %v702
        %v1713 = vpop.f32.mrf.mxu0
        %v1714 = vadd.f32 %v1355, %v1713
        %v1715 = vpop.f32.mrf.mxu0
        %v1716 = vadd.f32 %v1355, %v1715
        %1717 = vmatmul.bf16.gmra.mxu0 %v705
        %v1718 = vpop.f32.mrf.mxu0
        %v1719 = vadd.f32 %v1355, %v1718
        %v1720 = vpop.f32.mrf.mxu0
        %v1721 = vadd.f32 %v1355, %v1720
        %1722 = vmatmul.bf16.gmra.mxu0 %v708
        %v1723 = vpop.f32.mrf.mxu0
        %v1724 = vadd.f32 %v1355, %v1723
        %v1725 = vpop.f32.mrf.mxu0
        %v1726 = vadd.f32 %v1355, %v1725
        %1727 = vmatmul.bf16.gmra.mxu0 %v711
        %v1728 = vpop.f32.mrf.mxu0
        %v1729 = vadd.f32 %v1355, %v1728
        %v1730 = vpop.f32.mrf.mxu0
        %v1731 = vadd.f32 %v1355, %v1730
        %1732 = vmatmul.bf16.gmra.mxu0 %v714
        %v1733 = vpop.f32.mrf.mxu0
        %v1734 = vadd.f32 %v1355, %v1733
        %v1735 = vpop.f32.mrf.mxu0
        %v1736 = vadd.f32 %v1355, %v1735
        %1737 = vmatmul.bf16.gmra.mxu0 %v717
        %v1738 = vpop.f32.mrf.mxu0
        %v1739 = vadd.f32 %v1355, %v1738
        %v1740 = vpop.f32.mrf.mxu0
        %v1741 = vadd.f32 %v1355, %v1740
        %1742 = vmatmul.bf16.gmra.mxu0 %v720
        %v1743 = vpop.f32.mrf.mxu0
        %v1744 = vadd.f32 %v1355, %v1743
        %v1745 = vpop.f32.mrf.mxu0
        %v1746 = vadd.f32 %v1355, %v1745
        %1747 = vdwg.mxu0
        %1748 = vmatpush.bf16.msra.mxu0 %v1503
        %1749 = vmatpush.bf16.msra.mxu0 %v1501
        %1750 = vmatpush.bf16.msra.mxu0 %v1499
        %1751 = vmatpush.bf16.msra.mxu0 %v1497
        %1752 = vmatpush.bf16.msra.mxu0 %v1495
        %1753 = vmatpush.bf16.msra.mxu0 %v1493
        %1754 = vmatpush.bf16.msra.mxu0 %v1491
        %1755 = vmatpush.bf16.msra.mxu0 %v1489
        %1756 = vmatmul.bf16.gmra.mxu0 %v700
        %v1757 = vpop.f32.mrf.mxu0
        %v1758 = vadd.f32 %v1709, %v1757
        %v1759 = vpop.f32.mrf.mxu0
        %v1760 = vadd.f32 %v1711, %v1759
        %1761 = vmatmul.bf16.gmra.mxu0 %v703
        %v1762 = vpop.f32.mrf.mxu0
        %v1763 = vadd.f32 %v1714, %v1762
        %v1764 = vpop.f32.mrf.mxu0
        %v1765 = vadd.f32 %v1716, %v1764
        %1766 = vmatmul.bf16.gmra.mxu0 %v706
        %v1767 = vpop.f32.mrf.mxu0
        %v1768 = vadd.f32 %v1719, %v1767
        %v1769 = vpop.f32.mrf.mxu0
        %v1770 = vadd.f32 %v1721, %v1769
        %1771 = vmatmul.bf16.gmra.mxu0 %v709
        %v1772 = vpop.f32.mrf.mxu0
        %v1773 = vadd.f32 %v1724, %v1772
        %v1774 = vpop.f32.mrf.mxu0
        %v1775 = vadd.f32 %v1726, %v1774
        %1776 = vmatmul.bf16.gmra.mxu0 %v712
        %v1777 = vpop.f32.mrf.mxu0
        %v1778 = vadd.f32 %v1729, %v1777
        %v1779 = vpop.f32.mrf.mxu0
        %v1780 = vadd.f32 %v1731, %v1779
        %1781 = vmatmul.bf16.gmra.mxu0 %v715
        %v1782 = vpop.f32.mrf.mxu0
        %v1783 = vadd.f32 %v1734, %v1782
        %v1784 = vpop.f32.mrf.mxu0
        %v1785 = vadd.f32 %v1736, %v1784
        %1786 = vmatmul.bf16.gmra.mxu0 %v718
        %v1787 = vpop.f32.mrf.mxu0
        %v1788 = vadd.f32 %v1739, %v1787
        %v1789 = vpop.f32.mrf.mxu0
        %v1790 = vadd.f32 %v1741, %v1789
        %1791 = vmatmul.bf16.gmra.mxu0 %v721
        %v1792 = vpop.f32.mrf.mxu0
        %v1793 = vadd.f32 %v1744, %v1792
        %v1794 = vpop.f32.mrf.mxu0
        %v1795 = vadd.f32 %v1746, %v1794
        %1796 = vdwg.mxu0
        %1797 = vmatpush.bf16.msra.mxu0 0
        %1798 = vmatpush.bf16.msra.mxu0 0
        %1799 = vmatpush.bf16.msra.mxu0 0
        %1800 = vmatpush.bf16.msra.mxu0 0
        %1801 = vmatpush.bf16.msra.mxu0 0
        %1802 = vmatpush.bf16.msra.mxu0 %v1550
        %1803 = vmatpush.bf16.msra.mxu0 %v1507
        %1804 = vmatpush.bf16.msra.mxu0 %v1505
        %1805 = vmatmul.bf16.gmra.mxu0 %v957
        %v1806 = vpop.f32.mrf.mxu0
        %v1807 = vadd.f32 %v1758, %v1806
        %v1808 = vpop.f32.mrf.mxu0
        %v1809 = vadd.f32 %v1760, %v1808
        %1810 = vmatmul.bf16.gmra.mxu0 %v960
        %v1811 = vpop.f32.mrf.mxu0
        %v1812 = vadd.f32 %v1763, %v1811
        %v1813 = vpop.f32.mrf.mxu0
        %v1814 = vadd.f32 %v1765, %v1813
        %1815 = vmatmul.bf16.gmra.mxu0 %v963
        %v1816 = vpop.f32.mrf.mxu0
        %v1817 = vadd.f32 %v1768, %v1816
        %v1818 = vpop.f32.mrf.mxu0
        %v1819 = vadd.f32 %v1770, %v1818
        %1820 = vmatmul.bf16.gmra.mxu0 %v966
        %v1821 = vpop.f32.mrf.mxu0
        %v1822 = vadd.f32 %v1773, %v1821
        %v1823 = vpop.f32.mrf.mxu0
        %v1824 = vadd.f32 %v1775, %v1823
        %1825 = vmatmul.bf16.gmra.mxu0 %v969
        %v1826 = vpop.f32.mrf.mxu0
        %v1827 = vadd.f32 %v1778, %v1826
        %v1828 = vpop.f32.mrf.mxu0
        %v1829 = vadd.f32 %v1780, %v1828
        %1830 = vmatmul.bf16.gmra.mxu0 %v972
        %v1831 = vpop.f32.mrf.mxu0
        %v1832 = vadd.f32 %v1783, %v1831
        %v1833 = vpop.f32.mrf.mxu0
        %v1834 = vadd.f32 %v1785, %v1833
        %1835 = vmatmul.bf16.gmra.mxu0 %v975
        %v1836 = vpop.f32.mrf.mxu0
        %v1837 = vadd.f32 %v1788, %v1836
        %v1838 = vpop.f32.mrf.mxu0
        %v1839 = vadd.f32 %v1790, %v1838
        %1840 = vmatmul.bf16.gmra.mxu0 %v978
        %v1841 = vpop.f32.mrf.mxu0
        %v1842 = vadd.f32 %v1793, %v1841
        %v1843 = vpop.f32.mrf.mxu0
        %v1844 = vadd.f32 %v1795, %v1843
        %1845 = vdwg.mxu0
        %1846 = vst [vmem:[#allocation3] sm:$0xff] %v1660
        %1847 = vst.msk [vmem:[#allocation3 + $0x8] sm:$0xff] %vm1282, %v1807
        %1848 = vst [vmem:[#allocation3 + $0x10] sm:$0xff] %v1662
        %1849 = vst.msk [vmem:[#allocation3 + $0x18] sm:$0xff] %vm1282, %v1809
        %1850 = vst [vmem:[#allocation3 + $0x20] sm:$0xff] %v1665
        %1851 = vst.msk [vmem:[#allocation3 + $0x28] sm:$0xff] %vm1282, %v1812
        %1852 = vst [vmem:[#allocation3 + $0x30] sm:$0xff] %v1667
        %1853 = vst.msk [vmem:[#allocation3 + $0x38] sm:$0xff] %vm1282, %v1814
        %1854 = vst [vmem:[#allocation3 + $0x40] sm:$0xff] %v1670
        %1855 = vst.msk [vmem:[#allocation3 + $0x48] sm:$0xff] %vm1282, %v1817
        %1856 = vst [vmem:[#allocation3 + $0x50] sm:$0xff] %v1672
        %1857 = vst.msk [vmem:[#allocation3 + $0x58] sm:$0xff] %vm1282, %v1819
        %1858 = vst [vmem:[#allocation3 + $0x60] sm:$0xff] %v1675
        %1859 = vst.msk [vmem:[#allocation3 + $0x68] sm:$0xff] %vm1282, %v1822
        %1860 = vst [vmem:[#allocation3 + $0x70] sm:$0xff] %v1677
        %1861 = vst.msk [vmem:[#allocation3 + $0x78] sm:$0xff] %vm1282, %v1824
        %1862 = vst [vmem:[#allocation3 + $0x80] sm:$0xff] %v1680
        %1863 = vst.msk [vmem:[#allocation3 + $0x88] sm:$0xff] %vm1282, %v1827
        %1864 = vst [vmem:[#allocation3 + $0x90] sm:$0xff] %v1682
        %1865 = vst.msk [vmem:[#allocation3 + $0x98] sm:$0xff] %vm1282, %v1829
        %1866 = vst [vmem:[#allocation3 + $0xa0] sm:$0xff] %v1685
        %1867 = vst.msk [vmem:[#allocation3 + $0xa8] sm:$0xff] %vm1282, %v1832
        %1868 = vst [vmem:[#allocation3 + $0xb0] sm:$0xff] %v1687
        %1869 = vst.msk [vmem:[#allocation3 + $0xb8] sm:$0xff] %vm1282, %v1834
        %1870 = vst [vmem:[#allocation3 + $0xc0] sm:$0xff] %v1690
        %1871 = vst.msk [vmem:[#allocation3 + $0xc8] sm:$0xff] %vm1282, %v1837
        %1872 = vst [vmem:[#allocation3 + $0xd0] sm:$0xff] %v1692
        %1873 = vst.msk [vmem:[#allocation3 + $0xd8] sm:$0xff] %vm1282, %v1839
        %1874 = vst [vmem:[#allocation3 + $0xe0] sm:$0xff] %v1695
        %1875 = vst.msk [vmem:[#allocation3 + $0xe8] sm:$0xff] %vm1282, %v1842
        %1876 = vst [vmem:[#allocation3 + $0xf0] sm:$0xff] %v1697
        %1877 = vst.msk [vmem:[#allocation3 + $0xf8] sm:$0xff] %vm1282, %v1844
        %v1878 = vld [vmem:[%s5] sm:$0xff]
        %v1879 = vld [vmem:[%s5 + $0x8] sm:$0xff]
        %v1880 = vld [vmem:[%s5 + $0x10] sm:$0xff]
        %v1881 = vld [vmem:[%s5 + $0x18] sm:$0xff]
        %v1882 = vld [vmem:[%s5 + $0x20] sm:$0xff]
        %v1883 = vld [vmem:[%s5 + $0x28] sm:$0xff]
        %v1884 = vld [vmem:[%s5 + $0x30] sm:$0xff]
        %v1885 = vld [vmem:[%s5 + $0x38] sm:$0xff]
        %v1886 = vld [vmem:[%s5 + $0x40] sm:$0xff]
        %v1887 = vld [vmem:[%s5 + $0x48] sm:$0xff]
        %v1888 = vld [vmem:[%s5 + $0x50] sm:$0xff]
        %v1889 = vld [vmem:[%s5 + $0x58] sm:$0xff]
        %v1890 = vld [vmem:[%s5 + $0x60] sm:$0xff]
        %v1891 = vld [vmem:[%s5 + $0x68] sm:$0xff]
        %v1892 = vld [vmem:[%s5 + $0x70] sm:$0xff]
        %v1893 = vld [vmem:[%s5 + $0x78] sm:$0xff]
        %v1894 = vld [vmem:[#allocation13] sm:$0x3]
        %v1895 = vld [vmem:[#allocation12] sm:$0xff]
        %v1896 = vld [vmem:[#allocation12 + $0x8] sm:$0xff]
        %v1897 = vld [vmem:[#allocation12 + $0x10] sm:$0xff]
        %v1898 = vld [vmem:[#allocation12 + $0x18] sm:$0xff]
        %v1899 = vld [vmem:[#allocation12 + $0x20] sm:$0xff]
        %v1900 = vld [vmem:[#allocation12 + $0x28] sm:$0xff]
        %v1901 = vld [vmem:[#allocation12 + $0x30] sm:$0xff]
        %v1902 = vld [vmem:[#allocation12 + $0x38] sm:$0xff]
        %v1903 = vld [vmem:[#allocation12 + $0x40] sm:$0xff]
        %v1904 = vld [vmem:[#allocation12 + $0x48] sm:$0xff]
        %v1905 = vld [vmem:[#allocation12 + $0x50] sm:$0xff]
        %v1906 = vld [vmem:[#allocation12 + $0x58] sm:$0xff]
        %v1907 = vld [vmem:[#allocation12 + $0x60] sm:$0xff]
        %v1908 = vld [vmem:[#allocation12 + $0x68] sm:$0xff]
        %v1909 = vld [vmem:[#allocation12 + $0x70] sm:$0xff]
        %v1910 = vld [vmem:[#allocation12 + $0x78] sm:$0xff]
        %v1911 = vld [vmem:[#allocation15] sm:$0x3]
        %v1912 = vld [vmem:[#allocation2] sm:$0xff]
        %v1913 = vld [vmem:[#allocation2 + $0x8] sm:$0xff]
        %v1914 = vld [vmem:[#allocation2 + $0x10] sm:$0xff]
        %v1915 = vld [vmem:[#allocation2 + $0x18] sm:$0xff]
        %v1917 = vperm.slane %v1894, 0
        %v1918 = vperm.slane %v1894, 1
        %v1922 = vsel %vm1282, 0.0, 0
        %1924 = vmatpush.msra.mxu0 0.0
        %1925 = vmatpush.msra.mxu0 0.0
        %1926 = vmatpush.msra.mxu0 0.0
        %1927 = vmatpush.msra.mxu0 0.0
        %1928 = vmatpush.msra.mxu0 0.0
        %1929 = vmatpush.msra.mxu0 0.0
        %1930 = vmatpush.msra.mxu0 0.0
        %1931 = vmatpush.msra.mxu0 0.0
        %1932 = vmatpush.msra.mxu0 %v1892
        %1933 = vmatpush.msra.mxu0 %v1890
        %1934 = vmatpush.msra.mxu0 %v1888
        %1935 = vmatpush.msra.mxu0 %v1886
        %1936 = vmatpush.msra.mxu0 %v1884
        %1937 = vmatpush.msra.mxu0 %v1882
        %1938 = vmatpush.msra.mxu0 %v1880
        %1939 = vmatpush.msra.mxu0 %v1878
        %1940 = vmatmul.f32.gmra.mxu0 %v1922
        %v1941 = vpop.f32.mrf.mxu0
        %v1942 = vadd.f32 %v1917, %v1941
        %1943 = vmatmul.f32.gmra.mxu0 %v1922
        %v1944 = vpop.f32.mrf.mxu0
        %v1945 = vadd.f32 %v1917, %v1944
        %1946 = vdwg.mxu0
        %1947 = vmatpush.msra.mxu0 0.0
        %1948 = vmatpush.msra.mxu0 0.0
        %1949 = vmatpush.msra.mxu0 0.0
        %1950 = vmatpush.msra.mxu0 0.0
        %1951 = vmatpush.msra.mxu0 0.0
        %1952 = vmatpush.msra.mxu0 0.0
        %1953 = vmatpush.msra.mxu0 0.0
        %1954 = vmatpush.msra.mxu0 0.0
        %1955 = vmatpush.msra.mxu0 %v1893
        %1956 = vmatpush.msra.mxu0 %v1891
        %1957 = vmatpush.msra.mxu0 %v1889
        %1958 = vmatpush.msra.mxu0 %v1887
        %1959 = vmatpush.msra.mxu0 %v1885
        %1960 = vmatpush.msra.mxu0 %v1883
        %1961 = vmatpush.msra.mxu0 %v1881
        %1962 = vmatpush.msra.mxu0 %v1879
        %1963 = vmatmul.f32.gmra.mxu0 %v1922
        %v1964 = vpop.f32.mrf.mxu0
        %v1965 = vadd.f32 %v1918, %v1964
        %1966 = vmatmul.f32.gmra.mxu0 %v1922
        %v1967 = vpop.f32.mrf.mxu0
        %v1968 = vadd.f32 %v1918, %v1967
        %1969 = vdwg.mxu0
        %v1970 = vadd.f32 %v1912, %v1942
        %v1971 = vadd.f32 %v1914, %v1945
        %v1972 = vxor.u32 %v1970, 2147483648
        %v1973 = vxor.u32 %v1971, 2147483648
        %v1974 = vmul.f32 %v1972, 1.442695
        %v1975 = vpow.pop %v1974
        %v1976 = vmul.f32 %v1973, 1.442695
        %v1977 = vpow.pop %v1976
        %v1978 = vadd.f32 %v1975, 1.0
        %v1979 = vadd.f32 %v1977, 1.0
        %v1980 = vrcp.pop %v1978
        %v1981 = vmul.f32 %v1978, %v1980
        %v1982 = vsub.f32 1.0, %v1981
        %v1983 = vmul.f32 %v1980, %v1982
        %v1984 = vadd.f32 %v1980, %v1983
        %vm1985 = vweird.f32 %v1978
        %vm1986 = vweird.f32 %v1980
        %vm1987 = vmor %vm1985, %vm1986
        %v1988 = vsel %vm1987, %v1980, %v1984
        %v1989 = vand.u32 2147483647, %v1978
        %vm1990 = vcmp.eq.f32.partialorder %v1989, 8.507059e+37
        %v1991 = vand.u32 %v1978, 2147483648
        %v1992 = vor.u32 1.1754944e-38, %v1991
        %v1993 = vsel %vm1990, %v1992, %v1988
        %v1994 = vmul.f32 1.0, %v1993
        %v1995 = vrcp.pop %v1979
        %v1996 = vmul.f32 %v1979, %v1995
        %v1997 = vsub.f32 1.0, %v1996
        %v1998 = vmul.f32 %v1995, %v1997
        %v1999 = vadd.f32 %v1995, %v1998
        %vm2000 = vweird.f32 %v1979
        %vm2001 = vweird.f32 %v1995
        %vm2002 = vmor %vm2000, %vm2001
        %v2003 = vsel %vm2002, %v1995, %v1999
        %v2004 = vand.u32 2147483647, %v1979
        %vm2005 = vcmp.eq.f32.partialorder %v2004, 8.507059e+37
        %v2006 = vand.u32 %v1979, 2147483648
        %v2007 = vor.u32 1.1754944e-38, %v2006
        %v2008 = vsel %vm2005, %v2007, %v2003
        %v2009 = vmul.f32 1.0, %v2008
        %v2010 = vmul.f32 %v1994, %v1965
        %v2011 = vmul.f32 %v2009, %v1968
        %v2012 = vadd.f32 %v1913, %v2010
        %v2013 = vadd.f32 %v1915, %v2011
        %v2014 = vtanh.pop %v2012
        %v2015 = vtanh.pop %v2013
        %v2016 = vsub.f32 1.0, %v1994
        %v2017 = vsub.f32 1.0, %v2009
        %2020 = vrot.lane.b32.xlu0 %v2014, 64
        %v2021 = vpop.permute.xlu0 %2020
        %2022 = vrot.lane.b32.xlu0 %v2015, 64
        %v2023 = vpop.permute.xlu0 %2022
        %v2026 = vmul.f32 %v2016, %v2021
        %v2027 = vmul.f32 %v2017, %v2023
        %v2028 = vmul.f32 %v1994, 0.0
        %v2029 = vmul.f32 %v2009, 0.0
        %v2030 = vadd.f32 %v2026, %v2028
        %v2031 = vadd.f32 %v2027, %v2029
        %2034 = vrot.lane.b32.xlu0 %v2030, 64
        %v2035 = vpop.permute.xlu0 %2034
        %2036 = vrot.lane.b32.xlu0 %v2031, 64
        %v2037 = vpop.permute.xlu0 %2036
        %2040 = vst.msk [vmem:[#allocation4] sm:$0xff] %vm1282, %v2035
        %2041 = vst.msk [vmem:[#allocation4 + $0x8] sm:$0xff] %vm1282, %v2037
        %s2042 = scalar_lea.vmem [#allocation2], 32
        %v2043 = vld [vmem:[%s2042] sm:$0xff]
        %v2044 = vld [vmem:[%s2042 + $0x8] sm:$0xff]
        %v2045 = vld [vmem:[%s2042 + $0x10] sm:$0xff]
        %v2046 = vld [vmem:[%s2042 + $0x18] sm:$0xff]
        %v2047 = vsel %vm1282, %v2035, 0
        %v2049 = vsel %vm1282, %v2037, 0
        %2051 = vmatpush.msra.mxu0 0.0
        %2052 = vmatpush.msra.mxu0 0.0
        %2053 = vmatpush.msra.mxu0 0.0
        %2054 = vmatpush.msra.mxu0 0.0
        %2055 = vmatpush.msra.mxu0 0.0
        %2056 = vmatpush.msra.mxu0 0.0
        %2057 = vmatpush.msra.mxu0 0.0
        %2058 = vmatpush.msra.mxu0 0.0
        %2059 = vmatpush.msra.mxu0 %v1892
        %2060 = vmatpush.msra.mxu0 %v1890
        %2061 = vmatpush.msra.mxu0 %v1888
        %2062 = vmatpush.msra.mxu0 %v1886
        %2063 = vmatpush.msra.mxu0 %v1884
        %2064 = vmatpush.msra.mxu0 %v1882
        %2065 = vmatpush.msra.mxu0 %v1880
        %2066 = vmatpush.msra.mxu0 %v1878
        %2067 = vmatmul.f32.gmra.mxu0 %v2047
        %v2068 = vpop.f32.mrf.mxu0
        %v2069 = vadd.f32 %v1917, %v2068
        %2070 = vmatmul.f32.gmra.mxu0 %v2049
        %v2071 = vpop.f32.mrf.mxu0
        %v2072 = vadd.f32 %v1917, %v2071
        %2073 = vdwg.mxu0
        %2074 = vmatpush.msra.mxu0 0.0
        %2075 = vmatpush.msra.mxu0 0.0
        %2076 = vmatpush.msra.mxu0 0.0
        %2077 = vmatpush.msra.mxu0 0.0
        %2078 = vmatpush.msra.mxu0 0.0
        %2079 = vmatpush.msra.mxu0 0.0
        %2080 = vmatpush.msra.mxu0 0.0
        %2081 = vmatpush.msra.mxu0 0.0
        %2082 = vmatpush.msra.mxu0 %v1893
        %2083 = vmatpush.msra.mxu0 %v1891
        %2084 = vmatpush.msra.mxu0 %v1889
        %2085 = vmatpush.msra.mxu0 %v1887
        %2086 = vmatpush.msra.mxu0 %v1885
        %2087 = vmatpush.msra.mxu0 %v1883
        %2088 = vmatpush.msra.mxu0 %v1881
        %2089 = vmatpush.msra.mxu0 %v1879
        %2090 = vmatmul.f32.gmra.mxu0 %v2047
        %v2091 = vpop.f32.mrf.mxu0
        %v2092 = vadd.f32 %v1918, %v2091
        %2093 = vmatmul.f32.gmra.mxu0 %v2049
        %v2094 = vpop.f32.mrf.mxu0
        %v2095 = vadd.f32 %v1918, %v2094
        %2096 = vdwg.mxu0
        %v2097 = vadd.f32 %v2043, %v2069
        %v2098 = vadd.f32 %v2045, %v2072
        %v2099 = vxor.u32 %v2097, 2147483648
        %v2100 = vxor.u32 %v2098, 2147483648
        %v2101 = vmul.f32 %v2099, 1.442695
        %v2102 = vpow.pop %v2101
        %v2103 = vmul.f32 %v2100, 1.442695
        %v2104 = vpow.pop %v2103
        %v2105 = vadd.f32 %v2102, 1.0
        %v2106 = vadd.f32 %v2104, 1.0
        %v2107 = vrcp.pop %v2105
        %v2108 = vmul.f32 %v2105, %v2107
        %v2109 = vsub.f32 1.0, %v2108
        %v2110 = vmul.f32 %v2107, %v2109
        %v2111 = vadd.f32 %v2107, %v2110
        %vm2112 = vweird.f32 %v2105
        %vm2113 = vweird.f32 %v2107
        %vm2114 = vmor %vm2112, %vm2113
        %v2115 = vsel %vm2114, %v2107, %v2111
        %v2116 = vand.u32 2147483647, %v2105
        %vm2117 = vcmp.eq.f32.partialorder %v2116, 8.507059e+37
        %v2118 = vand.u32 %v2105, 2147483648
        %v2119 = vor.u32 1.1754944e-38, %v2118
        %v2120 = vsel %vm2117, %v2119, %v2115
        %v2121 = vmul.f32 1.0, %v2120
        %v2122 = vrcp.pop %v2106
        %v2123 = vmul.f32 %v2106, %v2122
        %v2124 = vsub.f32 1.0, %v2123
        %v2125 = vmul.f32 %v2122, %v2124
        %v2126 = vadd.f32 %v2122, %v2125
        %vm2127 = vweird.f32 %v2106
        %vm2128 = vweird.f32 %v2122
        %vm2129 = vmor %vm2127, %vm2128
        %v2130 = vsel %vm2129, %v2122, %v2126
        %v2131 = vand.u32 2147483647, %v2106
        %vm2132 = vcmp.eq.f32.partialorder %v2131, 8.507059e+37
        %v2133 = vand.u32 %v2106, 2147483648
        %v2134 = vor.u32 1.1754944e-38, %v2133
        %v2135 = vsel %vm2132, %v2134, %v2130
        %v2136 = vmul.f32 1.0, %v2135
        %v2137 = vmul.f32 %v2121, %v2092
        %v2138 = vmul.f32 %v2136, %v2095
        %v2139 = vadd.f32 %v2044, %v2137
        %v2140 = vadd.f32 %v2046, %v2138
        %v2141 = vtanh.pop %v2139
        %v2142 = vtanh.pop %v2140
        %v2143 = vsub.f32 1.0, %v2121
        %v2144 = vsub.f32 1.0, %v2136
        %2147 = vrot.lane.b32.xlu0 %v2141, 64
        %v2148 = vpop.permute.xlu0 %2147
        %2149 = vrot.lane.b32.xlu0 %v2142, 64
        %v2150 = vpop.permute.xlu0 %2149
        %v2153 = vmul.f32 %v2143, %v2148
        %v2154 = vmul.f32 %v2144, %v2150
        %v2155 = vmul.f32 %v2121, %v2030
        %v2156 = vmul.f32 %v2136, %v2031
        %v2157 = vadd.f32 %v2153, %v2155
        %v2158 = vadd.f32 %v2154, %v2156
        %2161 = vrot.lane.b32.xlu0 %v2157, 64
        %v2162 = vpop.permute.xlu0 %2161
        %2163 = vrot.lane.b32.xlu0 %v2158, 64
        %v2164 = vpop.permute.xlu0 %2163
        %s2167 = scalar_lea.vmem [#allocation4], 16
        %2168 = vst.msk [vmem:[%s2167] sm:$0xff] %vm1282, %v2162
        %2169 = vst.msk [vmem:[%s2167 + $0x8] sm:$0xff] %vm1282, %v2164
        %s2170 = scalar_lea.vmem [#allocation2], 64
        %v2171 = vld [vmem:[%s2170] sm:$0xff]
        %v2172 = vld [vmem:[%s2170 + $0x8] sm:$0xff]
        %v2173 = vld [vmem:[%s2170 + $0x10] sm:$0xff]
        %v2174 = vld [vmem:[%s2170 + $0x18] sm:$0xff]
        %v2175 = vsel %vm1282, %v2162, 0
        %v2177 = vsel %vm1282, %v2164, 0
        %2179 = vmatpush.msra.mxu0 0.0
        %2180 = vmatpush.msra.mxu0 0.0
        %2181 = vmatpush.msra.mxu0 0.0
        %2182 = vmatpush.msra.mxu0 0.0
        %2183 = vmatpush.msra.mxu0 0.0
        %2184 = vmatpush.msra.mxu0 0.0
        %2185 = vmatpush.msra.mxu0 0.0
        %2186 = vmatpush.msra.mxu0 0.0
        %2187 = vmatpush.msra.mxu0 %v1892
        %2188 = vmatpush.msra.mxu0 %v1890
        %2189 = vmatpush.msra.mxu0 %v1888
        %2190 = vmatpush.msra.mxu0 %v1886
        %2191 = vmatpush.msra.mxu0 %v1884
        %2192 = vmatpush.msra.mxu0 %v1882
        %2193 = vmatpush.msra.mxu0 %v1880
        %2194 = vmatpush.msra.mxu0 %v1878
        %2195 = vmatmul.f32.gmra.mxu0 %v2175
        %v2196 = vpop.f32.mrf.mxu0
        %v2197 = vadd.f32 %v1917, %v2196
        %2198 = vmatmul.f32.gmra.mxu0 %v2177
        %v2199 = vpop.f32.mrf.mxu0
        %v2200 = vadd.f32 %v1917, %v2199
        %2201 = vdwg.mxu0
        %2202 = vmatpush.msra.mxu0 0.0
        %2203 = vmatpush.msra.mxu0 0.0
        %2204 = vmatpush.msra.mxu0 0.0
        %2205 = vmatpush.msra.mxu0 0.0
        %2206 = vmatpush.msra.mxu0 0.0
        %2207 = vmatpush.msra.mxu0 0.0
        %2208 = vmatpush.msra.mxu0 0.0
        %2209 = vmatpush.msra.mxu0 0.0
        %2210 = vmatpush.msra.mxu0 %v1893
        %2211 = vmatpush.msra.mxu0 %v1891
        %2212 = vmatpush.msra.mxu0 %v1889
        %2213 = vmatpush.msra.mxu0 %v1887
        %2214 = vmatpush.msra.mxu0 %v1885
        %2215 = vmatpush.msra.mxu0 %v1883
        %2216 = vmatpush.msra.mxu0 %v1881
        %2217 = vmatpush.msra.mxu0 %v1879
        %2218 = vmatmul.f32.gmra.mxu0 %v2175
        %v2219 = vpop.f32.mrf.mxu0
        %v2220 = vadd.f32 %v1918, %v2219
        %2221 = vmatmul.f32.gmra.mxu0 %v2177
        %v2222 = vpop.f32.mrf.mxu0
        %v2223 = vadd.f32 %v1918, %v2222
        %2224 = vdwg.mxu0
        %v2225 = vadd.f32 %v2171, %v2197
        %v2226 = vadd.f32 %v2173, %v2200
        %v2227 = vxor.u32 %v2225, 2147483648
        %v2228 = vxor.u32 %v2226, 2147483648
        %v2229 = vmul.f32 %v2227, 1.442695
        %v2230 = vpow.pop %v2229
        %v2231 = vmul.f32 %v2228, 1.442695
        %v2232 = vpow.pop %v2231
        %v2233 = vadd.f32 %v2230, 1.0
        %v2234 = vadd.f32 %v2232, 1.0
        %v2235 = vrcp.pop %v2233
        %v2236 = vmul.f32 %v2233, %v2235
        %v2237 = vsub.f32 1.0, %v2236
        %v2238 = vmul.f32 %v2235, %v2237
        %v2239 = vadd.f32 %v2235, %v2238
        %vm2240 = vweird.f32 %v2233
        %vm2241 = vweird.f32 %v2235
        %vm2242 = vmor %vm2240, %vm2241
        %v2243 = vsel %vm2242, %v2235, %v2239
        %v2244 = vand.u32 2147483647, %v2233
        %vm2245 = vcmp.eq.f32.partialorder %v2244, 8.507059e+37
        %v2246 = vand.u32 %v2233, 2147483648
        %v2247 = vor.u32 1.1754944e-38, %v2246
        %v2248 = vsel %vm2245, %v2247, %v2243
        %v2249 = vmul.f32 1.0, %v2248
        %v2250 = vrcp.pop %v2234
        %v2251 = vmul.f32 %v2234, %v2250
        %v2252 = vsub.f32 1.0, %v2251
        %v2253 = vmul.f32 %v2250, %v2252
        %v2254 = vadd.f32 %v2250, %v2253
        %vm2255 = vweird.f32 %v2234
        %vm2256 = vweird.f32 %v2250
        %vm2257 = vmor %vm2255, %vm2256
        %v2258 = vsel %vm2257, %v2250, %v2254
        %v2259 = vand.u32 2147483647, %v2234
        %vm2260 = vcmp.eq.f32.partialorder %v2259, 8.507059e+37
        %v2261 = vand.u32 %v2234, 2147483648
        %v2262 = vor.u32 1.1754944e-38, %v2261
        %v2263 = vsel %vm2260, %v2262, %v2258
        %v2264 = vmul.f32 1.0, %v2263
        %v2265 = vmul.f32 %v2249, %v2220
        %v2266 = vmul.f32 %v2264, %v2223
        %v2267 = vadd.f32 %v2172, %v2265
        %v2268 = vadd.f32 %v2174, %v2266
        %v2269 = vtanh.pop %v2267
        %v2270 = vtanh.pop %v2268
        %v2271 = vsub.f32 1.0, %v2249
        %v2272 = vsub.f32 1.0, %v2264
        %2275 = vrot.lane.b32.xlu0 %v2269, 64
        %v2276 = vpop.permute.xlu0 %2275
        %2277 = vrot.lane.b32.xlu0 %v2270, 64
        %v2278 = vpop.permute.xlu0 %2277
        %v2281 = vmul.f32 %v2271, %v2276
        %v2282 = vmul.f32 %v2272, %v2278
        %v2283 = vmul.f32 %v2249, %v2157
        %v2284 = vmul.f32 %v2264, %v2158
        %v2285 = vadd.f32 %v2281, %v2283
        %v2286 = vadd.f32 %v2282, %v2284
        %2289 = vrot.lane.b32.xlu0 %v2285, 64
        %v2290 = vpop.permute.xlu0 %2289
        %2291 = vrot.lane.b32.xlu0 %v2286, 64
        %v2292 = vpop.permute.xlu0 %2291
        %s2295 = scalar_lea.vmem [#allocation4], 32
        %2296 = vst.msk [vmem:[%s2295] sm:$0xff] %vm1282, %v2290
        %2297 = vst.msk [vmem:[%s2295 + $0x8] sm:$0xff] %vm1282, %v2292
        %s2298 = scalar_lea.vmem [#allocation2], 96
        %v2299 = vld [vmem:[%s2298] sm:$0xff]
        %v2300 = vld [vmem:[%s2298 + $0x8] sm:$0xff]
        %v2301 = vld [vmem:[%s2298 + $0x10] sm:$0xff]
        %v2302 = vld [vmem:[%s2298 + $0x18] sm:$0xff]
        %v2303 = vsel %vm1282, %v2290, 0
        %v2305 = vsel %vm1282, %v2292, 0
        %2307 = vmatpush.msra.mxu0 0.0
        %2308 = vmatpush.msra.mxu0 0.0
        %2309 = vmatpush.msra.mxu0 0.0
        %2310 = vmatpush.msra.mxu0 0.0
        %2311 = vmatpush.msra.mxu0 0.0
        %2312 = vmatpush.msra.mxu0 0.0
        %2313 = vmatpush.msra.mxu0 0.0
        %2314 = vmatpush.msra.mxu0 0.0
        %2315 = vmatpush.msra.mxu0 %v1892
        %2316 = vmatpush.msra.mxu0 %v1890
        %2317 = vmatpush.msra.mxu0 %v1888
        %2318 = vmatpush.msra.mxu0 %v1886
        %2319 = vmatpush.msra.mxu0 %v1884
        %2320 = vmatpush.msra.mxu0 %v1882
        %2321 = vmatpush.msra.mxu0 %v1880
        %2322 = vmatpush.msra.mxu0 %v1878
        %2323 = vmatmul.f32.gmra.mxu0 %v2303
        %v2324 = vpop.f32.mrf.mxu0
        %v2325 = vadd.f32 %v1917, %v2324
        %2326 = vmatmul.f32.gmra.mxu0 %v2305
        %v2327 = vpop.f32.mrf.mxu0
        %v2328 = vadd.f32 %v1917, %v2327
        %2329 = vdwg.mxu0
        %2330 = vmatpush.msra.mxu0 0.0
        %2331 = vmatpush.msra.mxu0 0.0
        %2332 = vmatpush.msra.mxu0 0.0
        %2333 = vmatpush.msra.mxu0 0.0
        %2334 = vmatpush.msra.mxu0 0.0
        %2335 = vmatpush.msra.mxu0 0.0
        %2336 = vmatpush.msra.mxu0 0.0
        %2337 = vmatpush.msra.mxu0 0.0
        %2338 = vmatpush.msra.mxu0 %v1893
        %2339 = vmatpush.msra.mxu0 %v1891
        %2340 = vmatpush.msra.mxu0 %v1889
        %2341 = vmatpush.msra.mxu0 %v1887
        %2342 = vmatpush.msra.mxu0 %v1885
        %2343 = vmatpush.msra.mxu0 %v1883
        %2344 = vmatpush.msra.mxu0 %v1881
        %2345 = vmatpush.msra.mxu0 %v1879
        %2346 = vmatmul.f32.gmra.mxu0 %v2303
        %v2347 = vpop.f32.mrf.mxu0
        %v2348 = vadd.f32 %v1918, %v2347
        %2349 = vmatmul.f32.gmra.mxu0 %v2305
        %v2350 = vpop.f32.mrf.mxu0
        %v2351 = vadd.f32 %v1918, %v2350
        %2352 = vdwg.mxu0
        %v2353 = vadd.f32 %v2299, %v2325
        %v2354 = vadd.f32 %v2301, %v2328
        %v2355 = vxor.u32 %v2353, 2147483648
        %v2356 = vxor.u32 %v2354, 2147483648
        %v2357 = vmul.f32 %v2355, 1.442695
        %v2358 = vpow.pop %v2357
        %v2359 = vmul.f32 %v2356, 1.442695
        %v2360 = vpow.pop %v2359
        %v2361 = vadd.f32 %v2358, 1.0
        %v2362 = vadd.f32 %v2360, 1.0
        %v2363 = vrcp.pop %v2361
        %v2364 = vmul.f32 %v2361, %v2363
        %v2365 = vsub.f32 1.0, %v2364
        %v2366 = vmul.f32 %v2363, %v2365
        %v2367 = vadd.f32 %v2363, %v2366
        %vm2368 = vweird.f32 %v2361
        %vm2369 = vweird.f32 %v2363
        %vm2370 = vmor %vm2368, %vm2369
        %v2371 = vsel %vm2370, %v2363, %v2367
        %v2372 = vand.u32 2147483647, %v2361
        %vm2373 = vcmp.eq.f32.partialorder %v2372, 8.507059e+37
        %v2374 = vand.u32 %v2361, 2147483648
        %v2375 = vor.u32 1.1754944e-38, %v2374
        %v2376 = vsel %vm2373, %v2375, %v2371
        %v2377 = vmul.f32 1.0, %v2376
        %v2378 = vrcp.pop %v2362
        %v2379 = vmul.f32 %v2362, %v2378
        %v2380 = vsub.f32 1.0, %v2379
        %v2381 = vmul.f32 %v2378, %v2380
        %v2382 = vadd.f32 %v2378, %v2381
        %vm2383 = vweird.f32 %v2362
        %vm2384 = vweird.f32 %v2378
        %vm2385 = vmor %vm2383, %vm2384
        %v2386 = vsel %vm2385, %v2378, %v2382
        %v2387 = vand.u32 2147483647, %v2362
        %vm2388 = vcmp.eq.f32.partialorder %v2387, 8.507059e+37
        %v2389 = vand.u32 %v2362, 2147483648
        %v2390 = vor.u32 1.1754944e-38, %v2389
        %v2391 = vsel %vm2388, %v2390, %v2386
        %v2392 = vmul.f32 1.0, %v2391
        %v2393 = vmul.f32 %v2377, %v2348
        %v2394 = vmul.f32 %v2392, %v2351
        %v2395 = vadd.f32 %v2300, %v2393
        %v2396 = vadd.f32 %v2302, %v2394
        %v2397 = vtanh.pop %v2395
        %v2398 = vtanh.pop %v2396
        %v2399 = vsub.f32 1.0, %v2377
        %v2400 = vsub.f32 1.0, %v2392
        %2403 = vrot.lane.b32.xlu0 %v2397, 64
        %v2404 = vpop.permute.xlu0 %2403
        %2405 = vrot.lane.b32.xlu0 %v2398, 64
        %v2406 = vpop.permute.xlu0 %2405
        %v2409 = vmul.f32 %v2399, %v2404
        %v2410 = vmul.f32 %v2400, %v2406
        %v2411 = vmul.f32 %v2377, %v2285
        %v2412 = vmul.f32 %v2392, %v2286
        %v2413 = vadd.f32 %v2409, %v2411
        %v2414 = vadd.f32 %v2410, %v2412
        %2417 = vrot.lane.b32.xlu0 %v2413, 64
        %v2418 = vpop.permute.xlu0 %2417
        %2419 = vrot.lane.b32.xlu0 %v2414, 64
        %v2420 = vpop.permute.xlu0 %2419
        %s2423 = scalar_lea.vmem [#allocation4], 48
        %2424 = vst.msk [vmem:[%s2423] sm:$0xff] %vm1282, %v2418
        %2425 = vst.msk [vmem:[%s2423 + $0x8] sm:$0xff] %vm1282, %v2420
        %s2426 = scalar_lea.vmem [#allocation2], 128
        %v2427 = vld [vmem:[%s2426] sm:$0xff]
        %v2428 = vld [vmem:[%s2426 + $0x8] sm:$0xff]
        %v2429 = vld [vmem:[%s2426 + $0x10] sm:$0xff]
        %v2430 = vld [vmem:[%s2426 + $0x18] sm:$0xff]
        %v2431 = vsel %vm1282, %v2418, 0
        %v2433 = vsel %vm1282, %v2420, 0
        %2435 = vmatpush.msra.mxu0 0.0
        %2436 = vmatpush.msra.mxu0 0.0
        %2437 = vmatpush.msra.mxu0 0.0
        %2438 = vmatpush.msra.mxu0 0.0
        %2439 = vmatpush.msra.mxu0 0.0
        %2440 = vmatpush.msra.mxu0 0.0
        %2441 = vmatpush.msra.mxu0 0.0
        %2442 = vmatpush.msra.mxu0 0.0
        %2443 = vmatpush.msra.mxu0 %v1892
        %2444 = vmatpush.msra.mxu0 %v1890
        %2445 = vmatpush.msra.mxu0 %v1888
        %2446 = vmatpush.msra.mxu0 %v1886
        %2447 = vmatpush.msra.mxu0 %v1884
        %2448 = vmatpush.msra.mxu0 %v1882
        %2449 = vmatpush.msra.mxu0 %v1880
        %2450 = vmatpush.msra.mxu0 %v1878
        %2451 = vmatmul.f32.gmra.mxu0 %v2431
        %v2452 = vpop.f32.mrf.mxu0
        %v2453 = vadd.f32 %v1917, %v2452
        %2454 = vmatmul.f32.gmra.mxu0 %v2433
        %v2455 = vpop.f32.mrf.mxu0
        %v2456 = vadd.f32 %v1917, %v2455
        %2457 = vdwg.mxu0
        %2458 = vmatpush.msra.mxu0 0.0
        %2459 = vmatpush.msra.mxu0 0.0
        %2460 = vmatpush.msra.mxu0 0.0
        %2461 = vmatpush.msra.mxu0 0.0
        %2462 = vmatpush.msra.mxu0 0.0
        %2463 = vmatpush.msra.mxu0 0.0
        %2464 = vmatpush.msra.mxu0 0.0
        %2465 = vmatpush.msra.mxu0 0.0
        %2466 = vmatpush.msra.mxu0 %v1893
        %2467 = vmatpush.msra.mxu0 %v1891
        %2468 = vmatpush.msra.mxu0 %v1889
        %2469 = vmatpush.msra.mxu0 %v1887
        %2470 = vmatpush.msra.mxu0 %v1885
        %2471 = vmatpush.msra.mxu0 %v1883
        %2472 = vmatpush.msra.mxu0 %v1881
        %2473 = vmatpush.msra.mxu0 %v1879
        %2474 = vmatmul.f32.gmra.mxu0 %v2431
        %v2475 = vpop.f32.mrf.mxu0
        %v2476 = vadd.f32 %v1918, %v2475
        %2477 = vmatmul.f32.gmra.mxu0 %v2433
        %v2478 = vpop.f32.mrf.mxu0
        %v2479 = vadd.f32 %v1918, %v2478
        %2480 = vdwg.mxu0
        %v2481 = vadd.f32 %v2427, %v2453
        %v2482 = vadd.f32 %v2429, %v2456
        %v2483 = vxor.u32 %v2481, 2147483648
        %v2484 = vxor.u32 %v2482, 2147483648
        %v2485 = vmul.f32 %v2483, 1.442695
        %v2486 = vpow.pop %v2485
        %v2487 = vmul.f32 %v2484, 1.442695
        %v2488 = vpow.pop %v2487
        %v2489 = vadd.f32 %v2486, 1.0
        %v2490 = vadd.f32 %v2488, 1.0
        %v2491 = vrcp.pop %v2489
        %v2492 = vmul.f32 %v2489, %v2491
        %v2493 = vsub.f32 1.0, %v2492
        %v2494 = vmul.f32 %v2491, %v2493
        %v2495 = vadd.f32 %v2491, %v2494
        %vm2496 = vweird.f32 %v2489
        %vm2497 = vweird.f32 %v2491
        %vm2498 = vmor %vm2496, %vm2497
        %v2499 = vsel %vm2498, %v2491, %v2495
        %v2500 = vand.u32 2147483647, %v2489
        %vm2501 = vcmp.eq.f32.partialorder %v2500, 8.507059e+37
        %v2502 = vand.u32 %v2489, 2147483648
        %v2503 = vor.u32 1.1754944e-38, %v2502
        %v2504 = vsel %vm2501, %v2503, %v2499
        %v2505 = vmul.f32 1.0, %v2504
        %v2506 = vrcp.pop %v2490
        %v2507 = vmul.f32 %v2490, %v2506
        %v2508 = vsub.f32 1.0, %v2507
        %v2509 = vmul.f32 %v2506, %v2508
        %v2510 = vadd.f32 %v2506, %v2509
        %vm2511 = vweird.f32 %v2490
        %vm2512 = vweird.f32 %v2506
        %vm2513 = vmor %vm2511, %vm2512
        %v2514 = vsel %vm2513, %v2506, %v2510
        %v2515 = vand.u32 2147483647, %v2490
        %vm2516 = vcmp.eq.f32.partialorder %v2515, 8.507059e+37
        %v2517 = vand.u32 %v2490, 2147483648
        %v2518 = vor.u32 1.1754944e-38, %v2517
        %v2519 = vsel %vm2516, %v2518, %v2514
        %v2520 = vmul.f32 1.0, %v2519
        %v2521 = vmul.f32 %v2505, %v2476
        %v2522 = vmul.f32 %v2520, %v2479
        %v2523 = vadd.f32 %v2428, %v2521
        %v2524 = vadd.f32 %v2430, %v2522
        %v2525 = vtanh.pop %v2523
        %v2526 = vtanh.pop %v2524
        %v2527 = vsub.f32 1.0, %v2505
        %v2528 = vsub.f32 1.0, %v2520
        %2531 = vrot.lane.b32.xlu0 %v2525, 64
        %v2532 = vpop.permute.xlu0 %2531
        %2533 = vrot.lane.b32.xlu0 %v2526, 64
        %v2534 = vpop.permute.xlu0 %2533
        %v2537 = vmul.f32 %v2527, %v2532
        %v2538 = vmul.f32 %v2528, %v2534
        %v2539 = vmul.f32 %v2505, %v2413
        %v2540 = vmul.f32 %v2520, %v2414
        %v2541 = vadd.f32 %v2537, %v2539
        %v2542 = vadd.f32 %v2538, %v2540
        %2545 = vrot.lane.b32.xlu0 %v2541, 64
        %v2546 = vpop.permute.xlu0 %2545
        %2547 = vrot.lane.b32.xlu0 %v2542, 64
        %v2548 = vpop.permute.xlu0 %2547
        %s2551 = scalar_lea.vmem [#allocation4], 64
        %2552 = vst.msk [vmem:[%s2551] sm:$0xff] %vm1282, %v2546
        %2553 = vst.msk [vmem:[%s2551 + $0x8] sm:$0xff] %vm1282, %v2548
        %s2554 = scalar_lea.vmem [#allocation2], 160
        %v2555 = vld [vmem:[%s2554] sm:$0xff]
        %v2556 = vld [vmem:[%s2554 + $0x8] sm:$0xff]
        %v2557 = vld [vmem:[%s2554 + $0x10] sm:$0xff]
        %v2558 = vld [vmem:[%s2554 + $0x18] sm:$0xff]
        %v2559 = vsel %vm1282, %v2546, 0
        %v2561 = vsel %vm1282, %v2548, 0
        %2563 = vmatpush.msra.mxu0 0.0
        %2564 = vmatpush.msra.mxu0 0.0
        %2565 = vmatpush.msra.mxu0 0.0
        %2566 = vmatpush.msra.mxu0 0.0
        %2567 = vmatpush.msra.mxu0 0.0
        %2568 = vmatpush.msra.mxu0 0.0
        %2569 = vmatpush.msra.mxu0 0.0
        %2570 = vmatpush.msra.mxu0 0.0
        %2571 = vmatpush.msra.mxu0 %v1892
        %2572 = vmatpush.msra.mxu0 %v1890
        %2573 = vmatpush.msra.mxu0 %v1888
        %2574 = vmatpush.msra.mxu0 %v1886
        %2575 = vmatpush.msra.mxu0 %v1884
        %2576 = vmatpush.msra.mxu0 %v1882
        %2577 = vmatpush.msra.mxu0 %v1880
        %2578 = vmatpush.msra.mxu0 %v1878
        %2579 = vmatmul.f32.gmra.mxu0 %v2559
        %v2580 = vpop.f32.mrf.mxu0
        %v2581 = vadd.f32 %v1917, %v2580
        %2582 = vmatmul.f32.gmra.mxu0 %v2561
        %v2583 = vpop.f32.mrf.mxu0
        %v2584 = vadd.f32 %v1917, %v2583
        %2585 = vdwg.mxu0
        %2586 = vmatpush.msra.mxu0 0.0
        %2587 = vmatpush.msra.mxu0 0.0
        %2588 = vmatpush.msra.mxu0 0.0
        %2589 = vmatpush.msra.mxu0 0.0
        %2590 = vmatpush.msra.mxu0 0.0
        %2591 = vmatpush.msra.mxu0 0.0
        %2592 = vmatpush.msra.mxu0 0.0
        %2593 = vmatpush.msra.mxu0 0.0
        %2594 = vmatpush.msra.mxu0 %v1893
        %2595 = vmatpush.msra.mxu0 %v1891
        %2596 = vmatpush.msra.mxu0 %v1889
        %2597 = vmatpush.msra.mxu0 %v1887
        %2598 = vmatpush.msra.mxu0 %v1885
        %2599 = vmatpush.msra.mxu0 %v1883
        %2600 = vmatpush.msra.mxu0 %v1881
        %2601 = vmatpush.msra.mxu0 %v1879
        %2602 = vmatmul.f32.gmra.mxu0 %v2559
        %v2603 = vpop.f32.mrf.mxu0
        %v2604 = vadd.f32 %v1918, %v2603
        %2605 = vmatmul.f32.gmra.mxu0 %v2561
        %v2606 = vpop.f32.mrf.mxu0
        %v2607 = vadd.f32 %v1918, %v2606
        %2608 = vdwg.mxu0
        %v2609 = vadd.f32 %v2555, %v2581
        %v2610 = vadd.f32 %v2557, %v2584
        %v2611 = vxor.u32 %v2609, 2147483648
        %v2612 = vxor.u32 %v2610, 2147483648
        %v2613 = vmul.f32 %v2611, 1.442695
        %v2614 = vpow.pop %v2613
        %v2615 = vmul.f32 %v2612, 1.442695
        %v2616 = vpow.pop %v2615
        %v2617 = vadd.f32 %v2614, 1.0
        %v2618 = vadd.f32 %v2616, 1.0
        %v2619 = vrcp.pop %v2617
        %v2620 = vmul.f32 %v2617, %v2619
        %v2621 = vsub.f32 1.0, %v2620
        %v2622 = vmul.f32 %v2619, %v2621
        %v2623 = vadd.f32 %v2619, %v2622
        %vm2624 = vweird.f32 %v2617
        %vm2625 = vweird.f32 %v2619
        %vm2626 = vmor %vm2624, %vm2625
        %v2627 = vsel %vm2626, %v2619, %v2623
        %v2628 = vand.u32 2147483647, %v2617
        %vm2629 = vcmp.eq.f32.partialorder %v2628, 8.507059e+37
        %v2630 = vand.u32 %v2617, 2147483648
        %v2631 = vor.u32 1.1754944e-38, %v2630
        %v2632 = vsel %vm2629, %v2631, %v2627
        %v2633 = vmul.f32 1.0, %v2632
        %v2634 = vrcp.pop %v2618
        %v2635 = vmul.f32 %v2618, %v2634
        %v2636 = vsub.f32 1.0, %v2635
        %v2637 = vmul.f32 %v2634, %v2636
        %v2638 = vadd.f32 %v2634, %v2637
        %vm2639 = vweird.f32 %v2618
        %vm2640 = vweird.f32 %v2634
        %vm2641 = vmor %vm2639, %vm2640
        %v2642 = vsel %vm2641, %v2634, %v2638
        %v2643 = vand.u32 2147483647, %v2618
        %vm2644 = vcmp.eq.f32.partialorder %v2643, 8.507059e+37
        %v2645 = vand.u32 %v2618, 2147483648
        %v2646 = vor.u32 1.1754944e-38, %v2645
        %v2647 = vsel %vm2644, %v2646, %v2642
        %v2648 = vmul.f32 1.0, %v2647
        %v2649 = vmul.f32 %v2633, %v2604
        %v2650 = vmul.f32 %v2648, %v2607
        %v2651 = vadd.f32 %v2556, %v2649
        %v2652 = vadd.f32 %v2558, %v2650
        %v2653 = vtanh.pop %v2651
        %v2654 = vtanh.pop %v2652
        %v2655 = vsub.f32 1.0, %v2633
        %v2656 = vsub.f32 1.0, %v2648
        %2659 = vrot.lane.b32.xlu0 %v2653, 64
        %v2660 = vpop.permute.xlu0 %2659
        %2661 = vrot.lane.b32.xlu0 %v2654, 64
        %v2662 = vpop.permute.xlu0 %2661
        %v2665 = vmul.f32 %v2655, %v2660
        %v2666 = vmul.f32 %v2656, %v2662
        %v2667 = vmul.f32 %v2633, %v2541
        %v2668 = vmul.f32 %v2648, %v2542
        %v2669 = vadd.f32 %v2665, %v2667
        %v2670 = vadd.f32 %v2666, %v2668
        %2673 = vrot.lane.b32.xlu0 %v2669, 64
        %v2674 = vpop.permute.xlu0 %2673
        %2675 = vrot.lane.b32.xlu0 %v2670, 64
        %v2676 = vpop.permute.xlu0 %2675
        %s2679 = scalar_lea.vmem [#allocation4], 80
        %2680 = vst.msk [vmem:[%s2679] sm:$0xff] %vm1282, %v2674
        %2681 = vst.msk [vmem:[%s2679 + $0x8] sm:$0xff] %vm1282, %v2676
        %s2682 = scalar_lea.vmem [#allocation2], 192
        %v2683 = vld [vmem:[%s2682] sm:$0xff]
        %v2684 = vld [vmem:[%s2682 + $0x8] sm:$0xff]
        %v2685 = vld [vmem:[%s2682 + $0x10] sm:$0xff]
        %v2686 = vld [vmem:[%s2682 + $0x18] sm:$0xff]
        %v2687 = vsel %vm1282, %v2674, 0
        %v2689 = vsel %vm1282, %v2676, 0
        %2691 = vmatpush.msra.mxu0 0.0
        %2692 = vmatpush.msra.mxu0 0.0
        %2693 = vmatpush.msra.mxu0 0.0
        %2694 = vmatpush.msra.mxu0 0.0
        %2695 = vmatpush.msra.mxu0 0.0
        %2696 = vmatpush.msra.mxu0 0.0
        %2697 = vmatpush.msra.mxu0 0.0
        %2698 = vmatpush.msra.mxu0 0.0
        %2699 = vmatpush.msra.mxu0 %v1892
        %2700 = vmatpush.msra.mxu0 %v1890
        %2701 = vmatpush.msra.mxu0 %v1888
        %2702 = vmatpush.msra.mxu0 %v1886
        %2703 = vmatpush.msra.mxu0 %v1884
        %2704 = vmatpush.msra.mxu0 %v1882
        %2705 = vmatpush.msra.mxu0 %v1880
        %2706 = vmatpush.msra.mxu0 %v1878
        %2707 = vmatmul.f32.gmra.mxu0 %v2687
        %v2708 = vpop.f32.mrf.mxu0
        %v2709 = vadd.f32 %v1917, %v2708
        %2710 = vmatmul.f32.gmra.mxu0 %v2689
        %v2711 = vpop.f32.mrf.mxu0
        %v2712 = vadd.f32 %v1917, %v2711
        %2713 = vdwg.mxu0
        %2714 = vmatpush.msra.mxu0 0.0
        %2715 = vmatpush.msra.mxu0 0.0
        %2716 = vmatpush.msra.mxu0 0.0
        %2717 = vmatpush.msra.mxu0 0.0
        %2718 = vmatpush.msra.mxu0 0.0
        %2719 = vmatpush.msra.mxu0 0.0
        %2720 = vmatpush.msra.mxu0 0.0
        %2721 = vmatpush.msra.mxu0 0.0
        %2722 = vmatpush.msra.mxu0 %v1893
        %2723 = vmatpush.msra.mxu0 %v1891
        %2724 = vmatpush.msra.mxu0 %v1889
        %2725 = vmatpush.msra.mxu0 %v1887
        %2726 = vmatpush.msra.mxu0 %v1885
        %2727 = vmatpush.msra.mxu0 %v1883
        %2728 = vmatpush.msra.mxu0 %v1881
        %2729 = vmatpush.msra.mxu0 %v1879
        %2730 = vmatmul.f32.gmra.mxu0 %v2687
        %v2731 = vpop.f32.mrf.mxu0
        %v2732 = vadd.f32 %v1918, %v2731
        %2733 = vmatmul.f32.gmra.mxu0 %v2689
        %v2734 = vpop.f32.mrf.mxu0
        %v2735 = vadd.f32 %v1918, %v2734
        %2736 = vdwg.mxu0
        %v2737 = vadd.f32 %v2683, %v2709
        %v2738 = vadd.f32 %v2685, %v2712
        %v2739 = vxor.u32 %v2737, 2147483648
        %v2740 = vxor.u32 %v2738, 2147483648
        %v2741 = vmul.f32 %v2739, 1.442695
        %v2742 = vpow.pop %v2741
        %v2743 = vmul.f32 %v2740, 1.442695
        %v2744 = vpow.pop %v2743
        %v2745 = vadd.f32 %v2742, 1.0
        %v2746 = vadd.f32 %v2744, 1.0
        %v2747 = vrcp.pop %v2745
        %v2748 = vmul.f32 %v2745, %v2747
        %v2749 = vsub.f32 1.0, %v2748
        %v2750 = vmul.f32 %v2747, %v2749
        %v2751 = vadd.f32 %v2747, %v2750
        %vm2752 = vweird.f32 %v2745
        %vm2753 = vweird.f32 %v2747
        %vm2754 = vmor %vm2752, %vm2753
        %v2755 = vsel %vm2754, %v2747, %v2751
        %v2756 = vand.u32 2147483647, %v2745
        %vm2757 = vcmp.eq.f32.partialorder %v2756, 8.507059e+37
        %v2758 = vand.u32 %v2745, 2147483648
        %v2759 = vor.u32 1.1754944e-38, %v2758
        %v2760 = vsel %vm2757, %v2759, %v2755
        %v2761 = vmul.f32 1.0, %v2760
        %v2762 = vrcp.pop %v2746
        %v2763 = vmul.f32 %v2746, %v2762
        %v2764 = vsub.f32 1.0, %v2763
        %v2765 = vmul.f32 %v2762, %v2764
        %v2766 = vadd.f32 %v2762, %v2765
        %vm2767 = vweird.f32 %v2746
        %vm2768 = vweird.f32 %v2762
        %vm2769 = vmor %vm2767, %vm2768
        %v2770 = vsel %vm2769, %v2762, %v2766
        %v2771 = vand.u32 2147483647, %v2746
        %vm2772 = vcmp.eq.f32.partialorder %v2771, 8.507059e+37
        %v2773 = vand.u32 %v2746, 2147483648
        %v2774 = vor.u32 1.1754944e-38, %v2773
        %v2775 = vsel %vm2772, %v2774, %v2770
        %v2776 = vmul.f32 1.0, %v2775
        %v2777 = vmul.f32 %v2761, %v2732
        %v2778 = vmul.f32 %v2776, %v2735
        %v2779 = vadd.f32 %v2684, %v2777
        %v2780 = vadd.f32 %v2686, %v2778
        %v2781 = vtanh.pop %v2779
        %v2782 = vtanh.pop %v2780
        %v2783 = vsub.f32 1.0, %v2761
        %v2784 = vsub.f32 1.0, %v2776
        %2787 = vrot.lane.b32.xlu0 %v2781, 64
        %v2788 = vpop.permute.xlu0 %2787
        %2789 = vrot.lane.b32.xlu0 %v2782, 64
        %v2790 = vpop.permute.xlu0 %2789
        %v2793 = vmul.f32 %v2783, %v2788
        %v2794 = vmul.f32 %v2784, %v2790
        %v2795 = vmul.f32 %v2761, %v2669
        %v2796 = vmul.f32 %v2776, %v2670
        %v2797 = vadd.f32 %v2793, %v2795
        %v2798 = vadd.f32 %v2794, %v2796
        %2801 = vrot.lane.b32.xlu0 %v2797, 64
        %v2802 = vpop.permute.xlu0 %2801
        %2803 = vrot.lane.b32.xlu0 %v2798, 64
        %v2804 = vpop.permute.xlu0 %2803
        %s2807 = scalar_lea.vmem [#allocation4], 96
        %2808 = vst.msk [vmem:[%s2807] sm:$0xff] %vm1282, %v2802
        %2809 = vst.msk [vmem:[%s2807 + $0x8] sm:$0xff] %vm1282, %v2804
        %s2810 = scalar_lea.vmem [#allocation2], 224
        %v2811 = vld [vmem:[%s2810] sm:$0xff]
        %v2812 = vld [vmem:[%s2810 + $0x8] sm:$0xff]
        %v2813 = vld [vmem:[%s2810 + $0x10] sm:$0xff]
        %v2814 = vld [vmem:[%s2810 + $0x18] sm:$0xff]
        %v2815 = vsel %vm1282, %v2802, 0
        %v2817 = vsel %vm1282, %v2804, 0
        %2819 = vmatpush.msra.mxu0 0.0
        %2820 = vmatpush.msra.mxu0 0.0
        %2821 = vmatpush.msra.mxu0 0.0
        %2822 = vmatpush.msra.mxu0 0.0
        %2823 = vmatpush.msra.mxu0 0.0
        %2824 = vmatpush.msra.mxu0 0.0
        %2825 = vmatpush.msra.mxu0 0.0
        %2826 = vmatpush.msra.mxu0 0.0
        %2827 = vmatpush.msra.mxu0 %v1892
        %2828 = vmatpush.msra.mxu0 %v1890
        %2829 = vmatpush.msra.mxu0 %v1888
        %2830 = vmatpush.msra.mxu0 %v1886
        %2831 = vmatpush.msra.mxu0 %v1884
        %2832 = vmatpush.msra.mxu0 %v1882
        %2833 = vmatpush.msra.mxu0 %v1880
        %2834 = vmatpush.msra.mxu0 %v1878
        %2835 = vmatmul.f32.gmra.mxu0 %v2815
        %v2836 = vpop.f32.mrf.mxu0
        %v2837 = vadd.f32 %v1917, %v2836
        %2838 = vmatmul.f32.gmra.mxu0 %v2817
        %v2839 = vpop.f32.mrf.mxu0
        %v2840 = vadd.f32 %v1917, %v2839
        %2841 = vdwg.mxu0
        %2842 = vmatpush.msra.mxu0 0.0
        %2843 = vmatpush.msra.mxu0 0.0
        %2844 = vmatpush.msra.mxu0 0.0
        %2845 = vmatpush.msra.mxu0 0.0
        %2846 = vmatpush.msra.mxu0 0.0
        %2847 = vmatpush.msra.mxu0 0.0
        %2848 = vmatpush.msra.mxu0 0.0
        %2849 = vmatpush.msra.mxu0 0.0
        %2850 = vmatpush.msra.mxu0 %v1893
        %2851 = vmatpush.msra.mxu0 %v1891
        %2852 = vmatpush.msra.mxu0 %v1889
        %2853 = vmatpush.msra.mxu0 %v1887
        %2854 = vmatpush.msra.mxu0 %v1885
        %2855 = vmatpush.msra.mxu0 %v1883
        %2856 = vmatpush.msra.mxu0 %v1881
        %2857 = vmatpush.msra.mxu0 %v1879
        %2858 = vmatmul.f32.gmra.mxu0 %v2815
        %v2859 = vpop.f32.mrf.mxu0
        %v2860 = vadd.f32 %v1918, %v2859
        %2861 = vmatmul.f32.gmra.mxu0 %v2817
        %v2862 = vpop.f32.mrf.mxu0
        %v2863 = vadd.f32 %v1918, %v2862
        %2864 = vdwg.mxu0
        %v2865 = vadd.f32 %v2811, %v2837
        %v2866 = vadd.f32 %v2813, %v2840
        %v2867 = vxor.u32 %v2865, 2147483648
        %v2868 = vxor.u32 %v2866, 2147483648
        %v2869 = vmul.f32 %v2867, 1.442695
        %v2870 = vpow.pop %v2869
        %v2871 = vmul.f32 %v2868, 1.442695
        %v2872 = vpow.pop %v2871
        %v2873 = vadd.f32 %v2870, 1.0
        %v2874 = vadd.f32 %v2872, 1.0
        %v2875 = vrcp.pop %v2873
        %v2876 = vmul.f32 %v2873, %v2875
        %v2877 = vsub.f32 1.0, %v2876
        %v2878 = vmul.f32 %v2875, %v2877
        %v2879 = vadd.f32 %v2875, %v2878
        %vm2880 = vweird.f32 %v2873
        %vm2881 = vweird.f32 %v2875
        %vm2882 = vmor %vm2880, %vm2881
        %v2883 = vsel %vm2882, %v2875, %v2879
        %v2884 = vand.u32 2147483647, %v2873
        %vm2885 = vcmp.eq.f32.partialorder %v2884, 8.507059e+37
        %v2886 = vand.u32 %v2873, 2147483648
        %v2887 = vor.u32 1.1754944e-38, %v2886
        %v2888 = vsel %vm2885, %v2887, %v2883
        %v2889 = vmul.f32 1.0, %v2888
        %v2890 = vrcp.pop %v2874
        %v2891 = vmul.f32 %v2874, %v2890
        %v2892 = vsub.f32 1.0, %v2891
        %v2893 = vmul.f32 %v2890, %v2892
        %v2894 = vadd.f32 %v2890, %v2893
        %vm2895 = vweird.f32 %v2874
        %vm2896 = vweird.f32 %v2890
        %vm2897 = vmor %vm2895, %vm2896
        %v2898 = vsel %vm2897, %v2890, %v2894
        %v2899 = vand.u32 2147483647, %v2874
        %vm2900 = vcmp.eq.f32.partialorder %v2899, 8.507059e+37
        %v2901 = vand.u32 %v2874, 2147483648
        %v2902 = vor.u32 1.1754944e-38, %v2901
        %v2903 = vsel %vm2900, %v2902, %v2898
        %v2904 = vmul.f32 1.0, %v2903
        %v2905 = vmul.f32 %v2889, %v2860
        %v2906 = vmul.f32 %v2904, %v2863
        %v2907 = vadd.f32 %v2812, %v2905
        %v2908 = vadd.f32 %v2814, %v2906
        %v2909 = vtanh.pop %v2907
        %v2910 = vtanh.pop %v2908
        %v2911 = vsub.f32 1.0, %v2889
        %v2912 = vsub.f32 1.0, %v2904
        %2915 = vrot.lane.b32.xlu0 %v2909, 64
        %v2916 = vpop.permute.xlu0 %2915
        %2917 = vrot.lane.b32.xlu0 %v2910, 64
        %v2918 = vpop.permute.xlu0 %2917
        %v2921 = vmul.f32 %v2911, %v2916
        %v2922 = vmul.f32 %v2912, %v2918
        %v2923 = vmul.f32 %v2889, %v2797
        %v2924 = vmul.f32 %v2904, %v2798
        %v2925 = vadd.f32 %v2921, %v2923
        %v2926 = vadd.f32 %v2922, %v2924
        %2929 = vrot.lane.b32.xlu0 %v2925, 64
        %v2930 = vpop.permute.xlu0 %2929
        %2931 = vrot.lane.b32.xlu0 %v2926, 64
        %v2932 = vpop.permute.xlu0 %2931
        %s2935 = scalar_lea.vmem [#allocation4], 112
        %2936 = vst.msk [vmem:[%s2935] sm:$0xff] %vm1282, %v2930
        %2937 = vst.msk [vmem:[%s2935 + $0x8] sm:$0xff] %vm1282, %v2932
        %s2938 = scalar_lea.vmem [#allocation3], 224
        %v2939 = vld [vmem:[%s2938] sm:$0xff]
        %v2940 = vld [vmem:[%s2938 + $0x8] sm:$0xff]
        %v2941 = vld [vmem:[%s2938 + $0x10] sm:$0xff]
        %v2942 = vld [vmem:[%s2938 + $0x18] sm:$0xff]
        %v2944 = vperm.slane %v1911, 0
        %v2945 = vperm.slane %v1911, 1
        %2948 = vmatpush.msra.mxu0 0.0
        %2949 = vmatpush.msra.mxu0 0.0
        %2950 = vmatpush.msra.mxu0 0.0
        %2951 = vmatpush.msra.mxu0 0.0
        %2952 = vmatpush.msra.mxu0 0.0
        %2953 = vmatpush.msra.mxu0 0.0
        %2954 = vmatpush.msra.mxu0 0.0
        %2955 = vmatpush.msra.mxu0 0.0
        %2956 = vmatpush.msra.mxu0 %v1909
        %2957 = vmatpush.msra.mxu0 %v1907
        %2958 = vmatpush.msra.mxu0 %v1905
        %2959 = vmatpush.msra.mxu0 %v1903
        %2960 = vmatpush.msra.mxu0 %v1901
        %2961 = vmatpush.msra.mxu0 %v1899
        %2962 = vmatpush.msra.mxu0 %v1897
        %2963 = vmatpush.msra.mxu0 %v1895
        %2964 = vmatmul.f32.gmra.mxu0 %v1922
        %v2965 = vpop.f32.mrf.mxu0
        %v2966 = vadd.f32 %v2944, %v2965
        %2967 = vmatmul.f32.gmra.mxu0 %v1922
        %v2968 = vpop.f32.mrf.mxu0
        %v2969 = vadd.f32 %v2944, %v2968
        %2970 = vdwg.mxu0
        %2971 = vmatpush.msra.mxu0 0.0
        %2972 = vmatpush.msra.mxu0 0.0
        %2973 = vmatpush.msra.mxu0 0.0
        %2974 = vmatpush.msra.mxu0 0.0
        %2975 = vmatpush.msra.mxu0 0.0
        %2976 = vmatpush.msra.mxu0 0.0
        %2977 = vmatpush.msra.mxu0 0.0
        %2978 = vmatpush.msra.mxu0 0.0
        %2979 = vmatpush.msra.mxu0 %v1910
        %2980 = vmatpush.msra.mxu0 %v1908
        %2981 = vmatpush.msra.mxu0 %v1906
        %2982 = vmatpush.msra.mxu0 %v1904
        %2983 = vmatpush.msra.mxu0 %v1902
        %2984 = vmatpush.msra.mxu0 %v1900
        %2985 = vmatpush.msra.mxu0 %v1898
        %2986 = vmatpush.msra.mxu0 %v1896
        %2987 = vmatmul.f32.gmra.mxu0 %v1922
        %v2988 = vpop.f32.mrf.mxu0
        %v2989 = vadd.f32 %v2945, %v2988
        %2990 = vmatmul.f32.gmra.mxu0 %v1922
        %v2991 = vpop.f32.mrf.mxu0
        %v2992 = vadd.f32 %v2945, %v2991
        %2993 = vdwg.mxu0
        %v2994 = vadd.f32 %v2939, %v2966
        %v2995 = vadd.f32 %v2941, %v2969
        %v2996 = vxor.u32 %v2994, 2147483648
        %v2997 = vxor.u32 %v2995, 2147483648
        %v2998 = vmul.f32 %v2996, 1.442695
        %v2999 = vpow.pop %v2998
        %v3000 = vmul.f32 %v2997, 1.442695
        %v3001 = vpow.pop %v3000
        %v3002 = vadd.f32 %v2999, 1.0
        %v3003 = vadd.f32 %v3001, 1.0
        %v3004 = vrcp.pop %v3002
        %v3005 = vmul.f32 %v3002, %v3004
        %v3006 = vsub.f32 1.0, %v3005
        %v3007 = vmul.f32 %v3004, %v3006
        %v3008 = vadd.f32 %v3004, %v3007
        %vm3009 = vweird.f32 %v3002
        %vm3010 = vweird.f32 %v3004
        %vm3011 = vmor %vm3009, %vm3010
        %v3012 = vsel %vm3011, %v3004, %v3008
        %v3013 = vand.u32 2147483647, %v3002
        %vm3014 = vcmp.eq.f32.partialorder %v3013, 8.507059e+37
        %v3015 = vand.u32 %v3002, 2147483648
        %v3016 = vor.u32 1.1754944e-38, %v3015
        %v3017 = vsel %vm3014, %v3016, %v3012
        %v3018 = vmul.f32 1.0, %v3017
        %v3019 = vrcp.pop %v3003
        %v3020 = vmul.f32 %v3003, %v3019
        %v3021 = vsub.f32 1.0, %v3020
        %v3022 = vmul.f32 %v3019, %v3021
        %v3023 = vadd.f32 %v3019, %v3022
        %vm3024 = vweird.f32 %v3003
        %vm3025 = vweird.f32 %v3019
        %vm3026 = vmor %vm3024, %vm3025
        %v3027 = vsel %vm3026, %v3019, %v3023
        %v3028 = vand.u32 2147483647, %v3003
        %vm3029 = vcmp.eq.f32.partialorder %v3028, 8.507059e+37
        %v3030 = vand.u32 %v3003, 2147483648
        %v3031 = vor.u32 1.1754944e-38, %v3030
        %v3032 = vsel %vm3029, %v3031, %v3027
        %v3033 = vmul.f32 1.0, %v3032
        %v3034 = vmul.f32 %v3018, %v2989
        %v3035 = vmul.f32 %v3033, %v2992
        %v3036 = vadd.f32 %v2940, %v3034
        %v3037 = vadd.f32 %v2942, %v3035
        %v3038 = vtanh.pop %v3036
        %v3039 = vtanh.pop %v3037
        %v3040 = vsub.f32 1.0, %v3018
        %v3041 = vsub.f32 1.0, %v3033
        %3044 = vrot.lane.b32.xlu0 %v3038, 64
        %v3045 = vpop.permute.xlu0 %3044
        %3046 = vrot.lane.b32.xlu0 %v3039, 64
        %v3047 = vpop.permute.xlu0 %3046
        %v3050 = vmul.f32 %v3040, %v3045
        %v3051 = vmul.f32 %v3041, %v3047
        %v3052 = vmul.f32 %v3018, 0.0
        %v3053 = vmul.f32 %v3033, 0.0
        %v3054 = vadd.f32 %v3050, %v3052
        %v3055 = vadd.f32 %v3051, %v3053
        %3058 = vrot.lane.b32.xlu0 %v3054, 64
        %v3059 = vpop.permute.xlu0 %3058
        %3060 = vrot.lane.b32.xlu0 %v3055, 64
        %v3061 = vpop.permute.xlu0 %3060
        %s3064 = scalar_lea.vmem [#allocation5], 112
        %3065 = vst.msk [vmem:[%s3064] sm:$0xff] %vm1282, %v3059
        %3066 = vst.msk [vmem:[%s3064 + $0x8] sm:$0xff] %vm1282, %v3061
        %s3067 = scalar_lea.vmem [#allocation3], 192
        %v3068 = vld [vmem:[%s3067] sm:$0xff]
        %v3069 = vld [vmem:[%s3067 + $0x8] sm:$0xff]
        %v3070 = vld [vmem:[%s3067 + $0x10] sm:$0xff]
        %v3071 = vld [vmem:[%s3067 + $0x18] sm:$0xff]
        %v3072 = vsel %vm1282, %v3059, 0
        %v3074 = vsel %vm1282, %v3061, 0
        %3076 = vmatpush.msra.mxu0 0.0
        %3077 = vmatpush.msra.mxu0 0.0
        %3078 = vmatpush.msra.mxu0 0.0
        %3079 = vmatpush.msra.mxu0 0.0
        %3080 = vmatpush.msra.mxu0 0.0
        %3081 = vmatpush.msra.mxu0 0.0
        %3082 = vmatpush.msra.mxu0 0.0
        %3083 = vmatpush.msra.mxu0 0.0
        %3084 = vmatpush.msra.mxu0 %v1909
        %3085 = vmatpush.msra.mxu0 %v1907
        %3086 = vmatpush.msra.mxu0 %v1905
        %3087 = vmatpush.msra.mxu0 %v1903
        %3088 = vmatpush.msra.mxu0 %v1901
        %3089 = vmatpush.msra.mxu0 %v1899
        %3090 = vmatpush.msra.mxu0 %v1897
        %3091 = vmatpush.msra.mxu0 %v1895
        %3092 = vmatmul.f32.gmra.mxu0 %v3072
        %v3093 = vpop.f32.mrf.mxu0
        %v3094 = vadd.f32 %v2944, %v3093
        %3095 = vmatmul.f32.gmra.mxu0 %v3074
        %v3096 = vpop.f32.mrf.mxu0
        %v3097 = vadd.f32 %v2944, %v3096
        %3098 = vdwg.mxu0
        %3099 = vmatpush.msra.mxu0 0.0
        %3100 = vmatpush.msra.mxu0 0.0
        %3101 = vmatpush.msra.mxu0 0.0
        %3102 = vmatpush.msra.mxu0 0.0
        %3103 = vmatpush.msra.mxu0 0.0
        %3104 = vmatpush.msra.mxu0 0.0
        %3105 = vmatpush.msra.mxu0 0.0
        %3106 = vmatpush.msra.mxu0 0.0
        %3107 = vmatpush.msra.mxu0 %v1910
        %3108 = vmatpush.msra.mxu0 %v1908
        %3109 = vmatpush.msra.mxu0 %v1906
        %3110 = vmatpush.msra.mxu0 %v1904
        %3111 = vmatpush.msra.mxu0 %v1902
        %3112 = vmatpush.msra.mxu0 %v1900
        %3113 = vmatpush.msra.mxu0 %v1898
        %3114 = vmatpush.msra.mxu0 %v1896
        %3115 = vmatmul.f32.gmra.mxu0 %v3072
        %v3116 = vpop.f32.mrf.mxu0
        %v3117 = vadd.f32 %v2945, %v3116
        %3118 = vmatmul.f32.gmra.mxu0 %v3074
        %v3119 = vpop.f32.mrf.mxu0
        %v3120 = vadd.f32 %v2945, %v3119
        %3121 = vdwg.mxu0
        %v3122 = vadd.f32 %v3068, %v3094
        %v3123 = vadd.f32 %v3070, %v3097
        %v3124 = vxor.u32 %v3122, 2147483648
        %v3125 = vxor.u32 %v3123, 2147483648
        %v3126 = vmul.f32 %v3124, 1.442695
        %v3127 = vpow.pop %v3126
        %v3128 = vmul.f32 %v3125, 1.442695
        %v3129 = vpow.pop %v3128
        %v3130 = vadd.f32 %v3127, 1.0
        %v3131 = vadd.f32 %v3129, 1.0
        %v3132 = vrcp.pop %v3130
        %v3133 = vmul.f32 %v3130, %v3132
        %v3134 = vsub.f32 1.0, %v3133
        %v3135 = vmul.f32 %v3132, %v3134
        %v3136 = vadd.f32 %v3132, %v3135
        %vm3137 = vweird.f32 %v3130
        %vm3138 = vweird.f32 %v3132
        %vm3139 = vmor %vm3137, %vm3138
        %v3140 = vsel %vm3139, %v3132, %v3136
        %v3141 = vand.u32 2147483647, %v3130
        %vm3142 = vcmp.eq.f32.partialorder %v3141, 8.507059e+37
        %v3143 = vand.u32 %v3130, 2147483648
        %v3144 = vor.u32 1.1754944e-38, %v3143
        %v3145 = vsel %vm3142, %v3144, %v3140
        %v3146 = vmul.f32 1.0, %v3145
        %v3147 = vrcp.pop %v3131
        %v3148 = vmul.f32 %v3131, %v3147
        %v3149 = vsub.f32 1.0, %v3148
        %v3150 = vmul.f32 %v3147, %v3149
        %v3151 = vadd.f32 %v3147, %v3150
        %vm3152 = vweird.f32 %v3131
        %vm3153 = vweird.f32 %v3147
        %vm3154 = vmor %vm3152, %vm3153
        %v3155 = vsel %vm3154, %v3147, %v3151
        %v3156 = vand.u32 2147483647, %v3131
        %vm3157 = vcmp.eq.f32.partialorder %v3156, 8.507059e+37
        %v3158 = vand.u32 %v3131, 2147483648
        %v3159 = vor.u32 1.1754944e-38, %v3158
        %v3160 = vsel %vm3157, %v3159, %v3155
        %v3161 = vmul.f32 1.0, %v3160
        %v3162 = vmul.f32 %v3146, %v3117
        %v3163 = vmul.f32 %v3161, %v3120
        %v3164 = vadd.f32 %v3069, %v3162
        %v3165 = vadd.f32 %v3071, %v3163
        %v3166 = vtanh.pop %v3164
        %v3167 = vtanh.pop %v3165
        %v3168 = vsub.f32 1.0, %v3146
        %v3169 = vsub.f32 1.0, %v3161
        %3172 = vrot.lane.b32.xlu0 %v3166, 64
        %v3173 = vpop.permute.xlu0 %3172
        %3174 = vrot.lane.b32.xlu0 %v3167, 64
        %v3175 = vpop.permute.xlu0 %3174
        %v3178 = vmul.f32 %v3168, %v3173
        %v3179 = vmul.f32 %v3169, %v3175
        %v3180 = vmul.f32 %v3146, %v3054
        %v3181 = vmul.f32 %v3161, %v3055
        %v3182 = vadd.f32 %v3178, %v3180
        %v3183 = vadd.f32 %v3179, %v3181
        %3186 = vrot.lane.b32.xlu0 %v3182, 64
        %v3187 = vpop.permute.xlu0 %3186
        %3188 = vrot.lane.b32.xlu0 %v3183, 64
        %v3189 = vpop.permute.xlu0 %3188
        %s3192 = scalar_lea.vmem [#allocation5], 96
        %3193 = vst.msk [vmem:[%s3192] sm:$0xff] %vm1282, %v3187
        %3194 = vst.msk [vmem:[%s3192 + $0x8] sm:$0xff] %vm1282, %v3189
        %s3195 = scalar_lea.vmem [#allocation3], 160
        %v3196 = vld [vmem:[%s3195] sm:$0xff]
        %v3197 = vld [vmem:[%s3195 + $0x8] sm:$0xff]
        %v3198 = vld [vmem:[%s3195 + $0x10] sm:$0xff]
        %v3199 = vld [vmem:[%s3195 + $0x18] sm:$0xff]
        %v3200 = vsel %vm1282, %v3187, 0
        %v3202 = vsel %vm1282, %v3189, 0
        %3204 = vmatpush.msra.mxu0 0.0
        %3205 = vmatpush.msra.mxu0 0.0
        %3206 = vmatpush.msra.mxu0 0.0
        %3207 = vmatpush.msra.mxu0 0.0
        %3208 = vmatpush.msra.mxu0 0.0
        %3209 = vmatpush.msra.mxu0 0.0
        %3210 = vmatpush.msra.mxu0 0.0
        %3211 = vmatpush.msra.mxu0 0.0
        %3212 = vmatpush.msra.mxu0 %v1909
        %3213 = vmatpush.msra.mxu0 %v1907
        %3214 = vmatpush.msra.mxu0 %v1905
        %3215 = vmatpush.msra.mxu0 %v1903
        %3216 = vmatpush.msra.mxu0 %v1901
        %3217 = vmatpush.msra.mxu0 %v1899
        %3218 = vmatpush.msra.mxu0 %v1897
        %3219 = vmatpush.msra.mxu0 %v1895
        %3220 = vmatmul.f32.gmra.mxu0 %v3200
        %v3221 = vpop.f32.mrf.mxu0
        %v3222 = vadd.f32 %v2944, %v3221
        %3223 = vmatmul.f32.gmra.mxu0 %v3202
        %v3224 = vpop.f32.mrf.mxu0
        %v3225 = vadd.f32 %v2944, %v3224
        %3226 = vdwg.mxu0
        %3227 = vmatpush.msra.mxu0 0.0
        %3228 = vmatpush.msra.mxu0 0.0
        %3229 = vmatpush.msra.mxu0 0.0
        %3230 = vmatpush.msra.mxu0 0.0
        %3231 = vmatpush.msra.mxu0 0.0
        %3232 = vmatpush.msra.mxu0 0.0
        %3233 = vmatpush.msra.mxu0 0.0
        %3234 = vmatpush.msra.mxu0 0.0
        %3235 = vmatpush.msra.mxu0 %v1910
        %3236 = vmatpush.msra.mxu0 %v1908
        %3237 = vmatpush.msra.mxu0 %v1906
        %3238 = vmatpush.msra.mxu0 %v1904
        %3239 = vmatpush.msra.mxu0 %v1902
        %3240 = vmatpush.msra.mxu0 %v1900
        %3241 = vmatpush.msra.mxu0 %v1898
        %3242 = vmatpush.msra.mxu0 %v1896
        %3243 = vmatmul.f32.gmra.mxu0 %v3200
        %v3244 = vpop.f32.mrf.mxu0
        %v3245 = vadd.f32 %v2945, %v3244
        %3246 = vmatmul.f32.gmra.mxu0 %v3202
        %v3247 = vpop.f32.mrf.mxu0
        %v3248 = vadd.f32 %v2945, %v3247
        %3249 = vdwg.mxu0
        %v3250 = vadd.f32 %v3196, %v3222
        %v3251 = vadd.f32 %v3198, %v3225
        %v3252 = vxor.u32 %v3250, 2147483648
        %v3253 = vxor.u32 %v3251, 2147483648
        %v3254 = vmul.f32 %v3252, 1.442695
        %v3255 = vpow.pop %v3254
        %v3256 = vmul.f32 %v3253, 1.442695
        %v3257 = vpow.pop %v3256
        %v3258 = vadd.f32 %v3255, 1.0
        %v3259 = vadd.f32 %v3257, 1.0
        %v3260 = vrcp.pop %v3258
        %v3261 = vmul.f32 %v3258, %v3260
        %v3262 = vsub.f32 1.0, %v3261
        %v3263 = vmul.f32 %v3260, %v3262
        %v3264 = vadd.f32 %v3260, %v3263
        %vm3265 = vweird.f32 %v3258
        %vm3266 = vweird.f32 %v3260
        %vm3267 = vmor %vm3265, %vm3266
        %v3268 = vsel %vm3267, %v3260, %v3264
        %v3269 = vand.u32 2147483647, %v3258
        %vm3270 = vcmp.eq.f32.partialorder %v3269, 8.507059e+37
        %v3271 = vand.u32 %v3258, 2147483648
        %v3272 = vor.u32 1.1754944e-38, %v3271
        %v3273 = vsel %vm3270, %v3272, %v3268
        %v3274 = vmul.f32 1.0, %v3273
        %v3275 = vrcp.pop %v3259
        %v3276 = vmul.f32 %v3259, %v3275
        %v3277 = vsub.f32 1.0, %v3276
        %v3278 = vmul.f32 %v3275, %v3277
        %v3279 = vadd.f32 %v3275, %v3278
        %vm3280 = vweird.f32 %v3259
        %vm3281 = vweird.f32 %v3275
        %vm3282 = vmor %vm3280, %vm3281
        %v3283 = vsel %vm3282, %v3275, %v3279
        %v3284 = vand.u32 2147483647, %v3259
        %vm3285 = vcmp.eq.f32.partialorder %v3284, 8.507059e+37
        %v3286 = vand.u32 %v3259, 2147483648
        %v3287 = vor.u32 1.1754944e-38, %v3286
        %v3288 = vsel %vm3285, %v3287, %v3283
        %v3289 = vmul.f32 1.0, %v3288
        %v3290 = vmul.f32 %v3274, %v3245
        %v3291 = vmul.f32 %v3289, %v3248
        %v3292 = vadd.f32 %v3197, %v3290
        %v3293 = vadd.f32 %v3199, %v3291
        %v3294 = vtanh.pop %v3292
        %v3295 = vtanh.pop %v3293
        %v3296 = vsub.f32 1.0, %v3274
        %v3297 = vsub.f32 1.0, %v3289
        %3300 = vrot.lane.b32.xlu0 %v3294, 64
        %v3301 = vpop.permute.xlu0 %3300
        %3302 = vrot.lane.b32.xlu0 %v3295, 64
        %v3303 = vpop.permute.xlu0 %3302
        %v3306 = vmul.f32 %v3296, %v3301
        %v3307 = vmul.f32 %v3297, %v3303
        %v3308 = vmul.f32 %v3274, %v3182
        %v3309 = vmul.f32 %v3289, %v3183
        %v3310 = vadd.f32 %v3306, %v3308
        %v3311 = vadd.f32 %v3307, %v3309
        %3314 = vrot.lane.b32.xlu0 %v3310, 64
        %v3315 = vpop.permute.xlu0 %3314
        %3316 = vrot.lane.b32.xlu0 %v3311, 64
        %v3317 = vpop.permute.xlu0 %3316
        %s3320 = scalar_lea.vmem [#allocation5], 80
        %3321 = vst.msk [vmem:[%s3320] sm:$0xff] %vm1282, %v3315
        %3322 = vst.msk [vmem:[%s3320 + $0x8] sm:$0xff] %vm1282, %v3317
        %s3323 = scalar_lea.vmem [#allocation3], 128
        %v3324 = vld [vmem:[%s3323] sm:$0xff]
        %v3325 = vld [vmem:[%s3323 + $0x8] sm:$0xff]
        %v3326 = vld [vmem:[%s3323 + $0x10] sm:$0xff]
        %v3327 = vld [vmem:[%s3323 + $0x18] sm:$0xff]
        %v3328 = vsel %vm1282, %v3315, 0
        %v3330 = vsel %vm1282, %v3317, 0
        %3332 = vmatpush.msra.mxu0 0.0
        %3333 = vmatpush.msra.mxu0 0.0
        %3334 = vmatpush.msra.mxu0 0.0
        %3335 = vmatpush.msra.mxu0 0.0
        %3336 = vmatpush.msra.mxu0 0.0
        %3337 = vmatpush.msra.mxu0 0.0
        %3338 = vmatpush.msra.mxu0 0.0
        %3339 = vmatpush.msra.mxu0 0.0
        %3340 = vmatpush.msra.mxu0 %v1909
        %3341 = vmatpush.msra.mxu0 %v1907
        %3342 = vmatpush.msra.mxu0 %v1905
        %3343 = vmatpush.msra.mxu0 %v1903
        %3344 = vmatpush.msra.mxu0 %v1901
        %3345 = vmatpush.msra.mxu0 %v1899
        %3346 = vmatpush.msra.mxu0 %v1897
        %3347 = vmatpush.msra.mxu0 %v1895
        %3348 = vmatmul.f32.gmra.mxu0 %v3328
        %v3349 = vpop.f32.mrf.mxu0
        %v3350 = vadd.f32 %v2944, %v3349
        %3351 = vmatmul.f32.gmra.mxu0 %v3330
        %v3352 = vpop.f32.mrf.mxu0
        %v3353 = vadd.f32 %v2944, %v3352
        %3354 = vdwg.mxu0
        %3355 = vmatpush.msra.mxu0 0.0
        %3356 = vmatpush.msra.mxu0 0.0
        %3357 = vmatpush.msra.mxu0 0.0
        %3358 = vmatpush.msra.mxu0 0.0
        %3359 = vmatpush.msra.mxu0 0.0
        %3360 = vmatpush.msra.mxu0 0.0
        %3361 = vmatpush.msra.mxu0 0.0
        %3362 = vmatpush.msra.mxu0 0.0
        %3363 = vmatpush.msra.mxu0 %v1910
        %3364 = vmatpush.msra.mxu0 %v1908
        %3365 = vmatpush.msra.mxu0 %v1906
        %3366 = vmatpush.msra.mxu0 %v1904
        %3367 = vmatpush.msra.mxu0 %v1902
        %3368 = vmatpush.msra.mxu0 %v1900
        %3369 = vmatpush.msra.mxu0 %v1898
        %3370 = vmatpush.msra.mxu0 %v1896
        %3371 = vmatmul.f32.gmra.mxu0 %v3328
        %v3372 = vpop.f32.mrf.mxu0
        %v3373 = vadd.f32 %v2945, %v3372
        %3374 = vmatmul.f32.gmra.mxu0 %v3330
        %v3375 = vpop.f32.mrf.mxu0
        %v3376 = vadd.f32 %v2945, %v3375
        %3377 = vdwg.mxu0
        %v3378 = vadd.f32 %v3324, %v3350
        %v3379 = vadd.f32 %v3326, %v3353
        %v3380 = vxor.u32 %v3378, 2147483648
        %v3381 = vxor.u32 %v3379, 2147483648
        %v3382 = vmul.f32 %v3380, 1.442695
        %v3383 = vpow.pop %v3382
        %v3384 = vmul.f32 %v3381, 1.442695
        %v3385 = vpow.pop %v3384
        %v3386 = vadd.f32 %v3383, 1.0
        %v3387 = vadd.f32 %v3385, 1.0
        %v3388 = vrcp.pop %v3386
        %v3389 = vmul.f32 %v3386, %v3388
        %v3390 = vsub.f32 1.0, %v3389
        %v3391 = vmul.f32 %v3388, %v3390
        %v3392 = vadd.f32 %v3388, %v3391
        %vm3393 = vweird.f32 %v3386
        %vm3394 = vweird.f32 %v3388
        %vm3395 = vmor %vm3393, %vm3394
        %v3396 = vsel %vm3395, %v3388, %v3392
        %v3397 = vand.u32 2147483647, %v3386
        %vm3398 = vcmp.eq.f32.partialorder %v3397, 8.507059e+37
        %v3399 = vand.u32 %v3386, 2147483648
        %v3400 = vor.u32 1.1754944e-38, %v3399
        %v3401 = vsel %vm3398, %v3400, %v3396
        %v3402 = vmul.f32 1.0, %v3401
        %v3403 = vrcp.pop %v3387
        %v3404 = vmul.f32 %v3387, %v3403
        %v3405 = vsub.f32 1.0, %v3404
        %v3406 = vmul.f32 %v3403, %v3405
        %v3407 = vadd.f32 %v3403, %v3406
        %vm3408 = vweird.f32 %v3387
        %vm3409 = vweird.f32 %v3403
        %vm3410 = vmor %vm3408, %vm3409
        %v3411 = vsel %vm3410, %v3403, %v3407
        %v3412 = vand.u32 2147483647, %v3387
        %vm3413 = vcmp.eq.f32.partialorder %v3412, 8.507059e+37
        %v3414 = vand.u32 %v3387, 2147483648
        %v3415 = vor.u32 1.1754944e-38, %v3414
        %v3416 = vsel %vm3413, %v3415, %v3411
        %v3417 = vmul.f32 1.0, %v3416
        %v3418 = vmul.f32 %v3402, %v3373
        %v3419 = vmul.f32 %v3417, %v3376
        %v3420 = vadd.f32 %v3325, %v3418
        %v3421 = vadd.f32 %v3327, %v3419
        %v3422 = vtanh.pop %v3420
        %v3423 = vtanh.pop %v3421
        %v3424 = vsub.f32 1.0, %v3402
        %v3425 = vsub.f32 1.0, %v3417
        %3428 = vrot.lane.b32.xlu0 %v3422, 64
        %v3429 = vpop.permute.xlu0 %3428
        %3430 = vrot.lane.b32.xlu0 %v3423, 64
        %v3431 = vpop.permute.xlu0 %3430
        %v3434 = vmul.f32 %v3424, %v3429
        %v3435 = vmul.f32 %v3425, %v3431
        %v3436 = vmul.f32 %v3402, %v3310
        %v3437 = vmul.f32 %v3417, %v3311
        %v3438 = vadd.f32 %v3434, %v3436
        %v3439 = vadd.f32 %v3435, %v3437
        %3442 = vrot.lane.b32.xlu0 %v3438, 64
        %v3443 = vpop.permute.xlu0 %3442
        %3444 = vrot.lane.b32.xlu0 %v3439, 64
        %v3445 = vpop.permute.xlu0 %3444
        %s3448 = scalar_lea.vmem [#allocation5], 64
        %3449 = vst.msk [vmem:[%s3448] sm:$0xff] %vm1282, %v3443
        %3450 = vst.msk [vmem:[%s3448 + $0x8] sm:$0xff] %vm1282, %v3445
        %s3451 = scalar_lea.vmem [#allocation3], 96
        %v3452 = vld [vmem:[%s3451] sm:$0xff]
        %v3453 = vld [vmem:[%s3451 + $0x8] sm:$0xff]
        %v3454 = vld [vmem:[%s3451 + $0x10] sm:$0xff]
        %v3455 = vld [vmem:[%s3451 + $0x18] sm:$0xff]
        %v3456 = vsel %vm1282, %v3443, 0
        %v3458 = vsel %vm1282, %v3445, 0
        %3460 = vmatpush.msra.mxu0 0.0
        %3461 = vmatpush.msra.mxu0 0.0
        %3462 = vmatpush.msra.mxu0 0.0
        %3463 = vmatpush.msra.mxu0 0.0
        %3464 = vmatpush.msra.mxu0 0.0
        %3465 = vmatpush.msra.mxu0 0.0
        %3466 = vmatpush.msra.mxu0 0.0
        %3467 = vmatpush.msra.mxu0 0.0
        %3468 = vmatpush.msra.mxu0 %v1909
        %3469 = vmatpush.msra.mxu0 %v1907
        %3470 = vmatpush.msra.mxu0 %v1905
        %3471 = vmatpush.msra.mxu0 %v1903
        %3472 = vmatpush.msra.mxu0 %v1901
        %3473 = vmatpush.msra.mxu0 %v1899
        %3474 = vmatpush.msra.mxu0 %v1897
        %3475 = vmatpush.msra.mxu0 %v1895
        %3476 = vmatmul.f32.gmra.mxu0 %v3456
        %v3477 = vpop.f32.mrf.mxu0
        %v3478 = vadd.f32 %v2944, %v3477
        %3479 = vmatmul.f32.gmra.mxu0 %v3458
        %v3480 = vpop.f32.mrf.mxu0
        %v3481 = vadd.f32 %v2944, %v3480
        %3482 = vdwg.mxu0
        %3483 = vmatpush.msra.mxu0 0.0
        %3484 = vmatpush.msra.mxu0 0.0
        %3485 = vmatpush.msra.mxu0 0.0
        %3486 = vmatpush.msra.mxu0 0.0
        %3487 = vmatpush.msra.mxu0 0.0
        %3488 = vmatpush.msra.mxu0 0.0
        %3489 = vmatpush.msra.mxu0 0.0
        %3490 = vmatpush.msra.mxu0 0.0
        %3491 = vmatpush.msra.mxu0 %v1910
        %3492 = vmatpush.msra.mxu0 %v1908
        %3493 = vmatpush.msra.mxu0 %v1906
        %3494 = vmatpush.msra.mxu0 %v1904
        %3495 = vmatpush.msra.mxu0 %v1902
        %3496 = vmatpush.msra.mxu0 %v1900
        %3497 = vmatpush.msra.mxu0 %v1898
        %3498 = vmatpush.msra.mxu0 %v1896
        %3499 = vmatmul.f32.gmra.mxu0 %v3456
        %v3500 = vpop.f32.mrf.mxu0
        %v3501 = vadd.f32 %v2945, %v3500
        %3502 = vmatmul.f32.gmra.mxu0 %v3458
        %v3503 = vpop.f32.mrf.mxu0
        %v3504 = vadd.f32 %v2945, %v3503
        %3505 = vdwg.mxu0
        %v3506 = vadd.f32 %v3452, %v3478
        %v3507 = vadd.f32 %v3454, %v3481
        %v3508 = vxor.u32 %v3506, 2147483648
        %v3509 = vxor.u32 %v3507, 2147483648
        %v3510 = vmul.f32 %v3508, 1.442695
        %v3511 = vpow.pop %v3510
        %v3512 = vmul.f32 %v3509, 1.442695
        %v3513 = vpow.pop %v3512
        %v3514 = vadd.f32 %v3511, 1.0
        %v3515 = vadd.f32 %v3513, 1.0
        %v3516 = vrcp.pop %v3514
        %v3517 = vmul.f32 %v3514, %v3516
        %v3518 = vsub.f32 1.0, %v3517
        %v3519 = vmul.f32 %v3516, %v3518
        %v3520 = vadd.f32 %v3516, %v3519
        %vm3521 = vweird.f32 %v3514
        %vm3522 = vweird.f32 %v3516
        %vm3523 = vmor %vm3521, %vm3522
        %v3524 = vsel %vm3523, %v3516, %v3520
        %v3525 = vand.u32 2147483647, %v3514
        %vm3526 = vcmp.eq.f32.partialorder %v3525, 8.507059e+37
        %v3527 = vand.u32 %v3514, 2147483648
        %v3528 = vor.u32 1.1754944e-38, %v3527
        %v3529 = vsel %vm3526, %v3528, %v3524
        %v3530 = vmul.f32 1.0, %v3529
        %v3531 = vrcp.pop %v3515
        %v3532 = vmul.f32 %v3515, %v3531
        %v3533 = vsub.f32 1.0, %v3532
        %v3534 = vmul.f32 %v3531, %v3533
        %v3535 = vadd.f32 %v3531, %v3534
        %vm3536 = vweird.f32 %v3515
        %vm3537 = vweird.f32 %v3531
        %vm3538 = vmor %vm3536, %vm3537
        %v3539 = vsel %vm3538, %v3531, %v3535
        %v3540 = vand.u32 2147483647, %v3515
        %vm3541 = vcmp.eq.f32.partialorder %v3540, 8.507059e+37
        %v3542 = vand.u32 %v3515, 2147483648
        %v3543 = vor.u32 1.1754944e-38, %v3542
        %v3544 = vsel %vm3541, %v3543, %v3539
        %v3545 = vmul.f32 1.0, %v3544
        %v3546 = vmul.f32 %v3530, %v3501
        %v3547 = vmul.f32 %v3545, %v3504
        %v3548 = vadd.f32 %v3453, %v3546
        %v3549 = vadd.f32 %v3455, %v3547
        %v3550 = vtanh.pop %v3548
        %v3551 = vtanh.pop %v3549
        %v3552 = vsub.f32 1.0, %v3530
        %v3553 = vsub.f32 1.0, %v3545
        %3556 = vrot.lane.b32.xlu0 %v3550, 64
        %v3557 = vpop.permute.xlu0 %3556
        %3558 = vrot.lane.b32.xlu0 %v3551, 64
        %v3559 = vpop.permute.xlu0 %3558
        %v3562 = vmul.f32 %v3552, %v3557
        %v3563 = vmul.f32 %v3553, %v3559
        %v3564 = vmul.f32 %v3530, %v3438
        %v3565 = vmul.f32 %v3545, %v3439
        %v3566 = vadd.f32 %v3562, %v3564
        %v3567 = vadd.f32 %v3563, %v3565
        %3570 = vrot.lane.b32.xlu0 %v3566, 64
        %v3571 = vpop.permute.xlu0 %3570
        %3572 = vrot.lane.b32.xlu0 %v3567, 64
        %v3573 = vpop.permute.xlu0 %3572
        %s3576 = scalar_lea.vmem [#allocation5], 48
        %3577 = vst.msk [vmem:[%s3576] sm:$0xff] %vm1282, %v3571
        %3578 = vst.msk [vmem:[%s3576 + $0x8] sm:$0xff] %vm1282, %v3573
        %s3579 = scalar_lea.vmem [#allocation3], 64
        %v3580 = vld [vmem:[%s3579] sm:$0xff]
        %v3581 = vld [vmem:[%s3579 + $0x8] sm:$0xff]
        %v3582 = vld [vmem:[%s3579 + $0x10] sm:$0xff]
        %v3583 = vld [vmem:[%s3579 + $0x18] sm:$0xff]
        %v3584 = vsel %vm1282, %v3571, 0
        %v3586 = vsel %vm1282, %v3573, 0
        %3588 = vmatpush.msra.mxu0 0.0
        %3589 = vmatpush.msra.mxu0 0.0
        %3590 = vmatpush.msra.mxu0 0.0
        %3591 = vmatpush.msra.mxu0 0.0
        %3592 = vmatpush.msra.mxu0 0.0
        %3593 = vmatpush.msra.mxu0 0.0
        %3594 = vmatpush.msra.mxu0 0.0
        %3595 = vmatpush.msra.mxu0 0.0
        %3596 = vmatpush.msra.mxu0 %v1909
        %3597 = vmatpush.msra.mxu0 %v1907
        %3598 = vmatpush.msra.mxu0 %v1905
        %3599 = vmatpush.msra.mxu0 %v1903
        %3600 = vmatpush.msra.mxu0 %v1901
        %3601 = vmatpush.msra.mxu0 %v1899
        %3602 = vmatpush.msra.mxu0 %v1897
        %3603 = vmatpush.msra.mxu0 %v1895
        %3604 = vmatmul.f32.gmra.mxu0 %v3584
        %v3605 = vpop.f32.mrf.mxu0
        %v3606 = vadd.f32 %v2944, %v3605
        %3607 = vmatmul.f32.gmra.mxu0 %v3586
        %v3608 = vpop.f32.mrf.mxu0
        %v3609 = vadd.f32 %v2944, %v3608
        %3610 = vdwg.mxu0
        %3611 = vmatpush.msra.mxu0 0.0
        %3612 = vmatpush.msra.mxu0 0.0
        %3613 = vmatpush.msra.mxu0 0.0
        %3614 = vmatpush.msra.mxu0 0.0
        %3615 = vmatpush.msra.mxu0 0.0
        %3616 = vmatpush.msra.mxu0 0.0
        %3617 = vmatpush.msra.mxu0 0.0
        %3618 = vmatpush.msra.mxu0 0.0
        %3619 = vmatpush.msra.mxu0 %v1910
        %3620 = vmatpush.msra.mxu0 %v1908
        %3621 = vmatpush.msra.mxu0 %v1906
        %3622 = vmatpush.msra.mxu0 %v1904
        %3623 = vmatpush.msra.mxu0 %v1902
        %3624 = vmatpush.msra.mxu0 %v1900
        %3625 = vmatpush.msra.mxu0 %v1898
        %3626 = vmatpush.msra.mxu0 %v1896
        %3627 = vmatmul.f32.gmra.mxu0 %v3584
        %v3628 = vpop.f32.mrf.mxu0
        %v3629 = vadd.f32 %v2945, %v3628
        %3630 = vmatmul.f32.gmra.mxu0 %v3586
        %v3631 = vpop.f32.mrf.mxu0
        %v3632 = vadd.f32 %v2945, %v3631
        %3633 = vdwg.mxu0
        %v3634 = vadd.f32 %v3580, %v3606
        %v3635 = vadd.f32 %v3582, %v3609
        %v3636 = vxor.u32 %v3634, 2147483648
        %v3637 = vxor.u32 %v3635, 2147483648
        %v3638 = vmul.f32 %v3636, 1.442695
        %v3639 = vpow.pop %v3638
        %v3640 = vmul.f32 %v3637, 1.442695
        %v3641 = vpow.pop %v3640
        %v3642 = vadd.f32 %v3639, 1.0
        %v3643 = vadd.f32 %v3641, 1.0
        %v3644 = vrcp.pop %v3642
        %v3645 = vmul.f32 %v3642, %v3644
        %v3646 = vsub.f32 1.0, %v3645
        %v3647 = vmul.f32 %v3644, %v3646
        %v3648 = vadd.f32 %v3644, %v3647
        %vm3649 = vweird.f32 %v3642
        %vm3650 = vweird.f32 %v3644
        %vm3651 = vmor %vm3649, %vm3650
        %v3652 = vsel %vm3651, %v3644, %v3648
        %v3653 = vand.u32 2147483647, %v3642
        %vm3654 = vcmp.eq.f32.partialorder %v3653, 8.507059e+37
        %v3655 = vand.u32 %v3642, 2147483648
        %v3656 = vor.u32 1.1754944e-38, %v3655
        %v3657 = vsel %vm3654, %v3656, %v3652
        %v3658 = vmul.f32 1.0, %v3657
        %v3659 = vrcp.pop %v3643
        %v3660 = vmul.f32 %v3643, %v3659
        %v3661 = vsub.f32 1.0, %v3660
        %v3662 = vmul.f32 %v3659, %v3661
        %v3663 = vadd.f32 %v3659, %v3662
        %vm3664 = vweird.f32 %v3643
        %vm3665 = vweird.f32 %v3659
        %vm3666 = vmor %vm3664, %vm3665
        %v3667 = vsel %vm3666, %v3659, %v3663
        %v3668 = vand.u32 2147483647, %v3643
        %vm3669 = vcmp.eq.f32.partialorder %v3668, 8.507059e+37
        %v3670 = vand.u32 %v3643, 2147483648
        %v3671 = vor.u32 1.1754944e-38, %v3670
        %v3672 = vsel %vm3669, %v3671, %v3667
        %v3673 = vmul.f32 1.0, %v3672
        %v3674 = vmul.f32 %v3658, %v3629
        %v3675 = vmul.f32 %v3673, %v3632
        %v3676 = vadd.f32 %v3581, %v3674
        %v3677 = vadd.f32 %v3583, %v3675
        %v3678 = vtanh.pop %v3676
        %v3679 = vtanh.pop %v3677
        %v3680 = vsub.f32 1.0, %v3658
        %v3681 = vsub.f32 1.0, %v3673
        %3684 = vrot.lane.b32.xlu0 %v3678, 64
        %v3685 = vpop.permute.xlu0 %3684
        %3686 = vrot.lane.b32.xlu0 %v3679, 64
        %v3687 = vpop.permute.xlu0 %3686
        %v3690 = vmul.f32 %v3680, %v3685
        %v3691 = vmul.f32 %v3681, %v3687
        %v3692 = vmul.f32 %v3658, %v3566
        %v3693 = vmul.f32 %v3673, %v3567
        %v3694 = vadd.f32 %v3690, %v3692
        %v3695 = vadd.f32 %v3691, %v3693
        %3698 = vrot.lane.b32.xlu0 %v3694, 64
        %v3699 = vpop.permute.xlu0 %3698
        %3700 = vrot.lane.b32.xlu0 %v3695, 64
        %v3701 = vpop.permute.xlu0 %3700
        %s3704 = scalar_lea.vmem [#allocation5], 32
        %3705 = vst.msk [vmem:[%s3704] sm:$0xff] %vm1282, %v3699
        %3706 = vst.msk [vmem:[%s3704 + $0x8] sm:$0xff] %vm1282, %v3701
        %s3707 = scalar_lea.vmem [#allocation3], 32
        %v3708 = vld [vmem:[%s3707] sm:$0xff]
        %v3709 = vld [vmem:[%s3707 + $0x8] sm:$0xff]
        %v3710 = vld [vmem:[%s3707 + $0x10] sm:$0xff]
        %v3711 = vld [vmem:[%s3707 + $0x18] sm:$0xff]
        %v3712 = vsel %vm1282, %v3699, 0
        %v3714 = vsel %vm1282, %v3701, 0
        %3716 = vmatpush.msra.mxu0 0.0
        %3717 = vmatpush.msra.mxu0 0.0
        %3718 = vmatpush.msra.mxu0 0.0
        %3719 = vmatpush.msra.mxu0 0.0
        %3720 = vmatpush.msra.mxu0 0.0
        %3721 = vmatpush.msra.mxu0 0.0
        %3722 = vmatpush.msra.mxu0 0.0
        %3723 = vmatpush.msra.mxu0 0.0
        %3724 = vmatpush.msra.mxu0 %v1909
        %3725 = vmatpush.msra.mxu0 %v1907
        %3726 = vmatpush.msra.mxu0 %v1905
        %3727 = vmatpush.msra.mxu0 %v1903
        %3728 = vmatpush.msra.mxu0 %v1901
        %3729 = vmatpush.msra.mxu0 %v1899
        %3730 = vmatpush.msra.mxu0 %v1897
        %3731 = vmatpush.msra.mxu0 %v1895
        %3732 = vmatmul.f32.gmra.mxu0 %v3712
        %v3733 = vpop.f32.mrf.mxu0
        %v3734 = vadd.f32 %v2944, %v3733
        %3735 = vmatmul.f32.gmra.mxu0 %v3714
        %v3736 = vpop.f32.mrf.mxu0
        %v3737 = vadd.f32 %v2944, %v3736
        %3738 = vdwg.mxu0
        %3739 = vmatpush.msra.mxu0 0.0
        %3740 = vmatpush.msra.mxu0 0.0
        %3741 = vmatpush.msra.mxu0 0.0
        %3742 = vmatpush.msra.mxu0 0.0
        %3743 = vmatpush.msra.mxu0 0.0
        %3744 = vmatpush.msra.mxu0 0.0
        %3745 = vmatpush.msra.mxu0 0.0
        %3746 = vmatpush.msra.mxu0 0.0
        %3747 = vmatpush.msra.mxu0 %v1910
        %3748 = vmatpush.msra.mxu0 %v1908
        %3749 = vmatpush.msra.mxu0 %v1906
        %3750 = vmatpush.msra.mxu0 %v1904
        %3751 = vmatpush.msra.mxu0 %v1902
        %3752 = vmatpush.msra.mxu0 %v1900
        %3753 = vmatpush.msra.mxu0 %v1898
        %3754 = vmatpush.msra.mxu0 %v1896
        %3755 = vmatmul.f32.gmra.mxu0 %v3712
        %v3756 = vpop.f32.mrf.mxu0
        %v3757 = vadd.f32 %v2945, %v3756
        %3758 = vmatmul.f32.gmra.mxu0 %v3714
        %v3759 = vpop.f32.mrf.mxu0
        %v3760 = vadd.f32 %v2945, %v3759
        %3761 = vdwg.mxu0
        %v3762 = vadd.f32 %v3708, %v3734
        %v3763 = vadd.f32 %v3710, %v3737
        %v3764 = vxor.u32 %v3762, 2147483648
        %v3765 = vxor.u32 %v3763, 2147483648
        %v3766 = vmul.f32 %v3764, 1.442695
        %v3767 = vpow.pop %v3766
        %v3768 = vmul.f32 %v3765, 1.442695
        %v3769 = vpow.pop %v3768
        %v3770 = vadd.f32 %v3767, 1.0
        %v3771 = vadd.f32 %v3769, 1.0
        %v3772 = vrcp.pop %v3770
        %v3773 = vmul.f32 %v3770, %v3772
        %v3774 = vsub.f32 1.0, %v3773
        %v3775 = vmul.f32 %v3772, %v3774
        %v3776 = vadd.f32 %v3772, %v3775
        %vm3777 = vweird.f32 %v3770
        %vm3778 = vweird.f32 %v3772
        %vm3779 = vmor %vm3777, %vm3778
        %v3780 = vsel %vm3779, %v3772, %v3776
        %v3781 = vand.u32 2147483647, %v3770
        %vm3782 = vcmp.eq.f32.partialorder %v3781, 8.507059e+37
        %v3783 = vand.u32 %v3770, 2147483648
        %v3784 = vor.u32 1.1754944e-38, %v3783
        %v3785 = vsel %vm3782, %v3784, %v3780
        %v3786 = vmul.f32 1.0, %v3785
        %v3787 = vrcp.pop %v3771
        %v3788 = vmul.f32 %v3771, %v3787
        %v3789 = vsub.f32 1.0, %v3788
        %v3790 = vmul.f32 %v3787, %v3789
        %v3791 = vadd.f32 %v3787, %v3790
        %vm3792 = vweird.f32 %v3771
        %vm3793 = vweird.f32 %v3787
        %vm3794 = vmor %vm3792, %vm3793
        %v3795 = vsel %vm3794, %v3787, %v3791
        %v3796 = vand.u32 2147483647, %v3771
        %vm3797 = vcmp.eq.f32.partialorder %v3796, 8.507059e+37
        %v3798 = vand.u32 %v3771, 2147483648
        %v3799 = vor.u32 1.1754944e-38, %v3798
        %v3800 = vsel %vm3797, %v3799, %v3795
        %v3801 = vmul.f32 1.0, %v3800
        %v3802 = vmul.f32 %v3786, %v3757
        %v3803 = vmul.f32 %v3801, %v3760
        %v3804 = vadd.f32 %v3709, %v3802
        %v3805 = vadd.f32 %v3711, %v3803
        %v3806 = vtanh.pop %v3804
        %v3807 = vtanh.pop %v3805
        %v3808 = vsub.f32 1.0, %v3786
        %v3809 = vsub.f32 1.0, %v3801
        %3812 = vrot.lane.b32.xlu0 %v3806, 64
        %v3813 = vpop.permute.xlu0 %3812
        %3814 = vrot.lane.b32.xlu0 %v3807, 64
        %v3815 = vpop.permute.xlu0 %3814
        %v3818 = vmul.f32 %v3808, %v3813
        %v3819 = vmul.f32 %v3809, %v3815
        %v3820 = vmul.f32 %v3786, %v3694
        %v3821 = vmul.f32 %v3801, %v3695
        %v3822 = vadd.f32 %v3818, %v3820
        %v3823 = vadd.f32 %v3819, %v3821
        %3826 = vrot.lane.b32.xlu0 %v3822, 64
        %v3827 = vpop.permute.xlu0 %3826
        %3828 = vrot.lane.b32.xlu0 %v3823, 64
        %v3829 = vpop.permute.xlu0 %3828
        %s3832 = scalar_lea.vmem [#allocation5], 16
        %3833 = vst.msk [vmem:[%s3832] sm:$0xff] %vm1282, %v3827
        %3834 = vst.msk [vmem:[%s3832 + $0x8] sm:$0xff] %vm1282, %v3829
        %v3835 = vld [vmem:[#allocation3] sm:$0xff]
        %v3836 = vld [vmem:[#allocation3 + $0x8] sm:$0xff]
        %v3837 = vld [vmem:[#allocation3 + $0x10] sm:$0xff]
        %v3838 = vld [vmem:[#allocation3 + $0x18] sm:$0xff]
        %v3839 = vsel %vm1282, %v3827, 0
        %v3841 = vsel %vm1282, %v3829, 0
        %3843 = vmatpush.msra.mxu0 0.0
        %3844 = vmatpush.msra.mxu0 0.0
        %3845 = vmatpush.msra.mxu0 0.0
        %3846 = vmatpush.msra.mxu0 0.0
        %3847 = vmatpush.msra.mxu0 0.0
        %3848 = vmatpush.msra.mxu0 0.0
        %3849 = vmatpush.msra.mxu0 0.0
        %3850 = vmatpush.msra.mxu0 0.0
        %3851 = vmatpush.msra.mxu0 %v1909
        %3852 = vmatpush.msra.mxu0 %v1907
        %3853 = vmatpush.msra.mxu0 %v1905
        %3854 = vmatpush.msra.mxu0 %v1903
        %3855 = vmatpush.msra.mxu0 %v1901
        %3856 = vmatpush.msra.mxu0 %v1899
        %3857 = vmatpush.msra.mxu0 %v1897
        %3858 = vmatpush.msra.mxu0 %v1895
        %3859 = vmatmul.f32.gmra.mxu0 %v3839
        %v3860 = vpop.f32.mrf.mxu0
        %v3861 = vadd.f32 %v2944, %v3860
        %3862 = vmatmul.f32.gmra.mxu0 %v3841
        %v3863 = vpop.f32.mrf.mxu0
        %v3864 = vadd.f32 %v2944, %v3863
        %3865 = vdwg.mxu0
        %3866 = vmatpush.msra.mxu0 0.0
        %3867 = vmatpush.msra.mxu0 0.0
        %3868 = vmatpush.msra.mxu0 0.0
        %3869 = vmatpush.msra.mxu0 0.0
        %3870 = vmatpush.msra.mxu0 0.0
        %3871 = vmatpush.msra.mxu0 0.0
        %3872 = vmatpush.msra.mxu0 0.0
        %3873 = vmatpush.msra.mxu0 0.0
        %3874 = vmatpush.msra.mxu0 %v1910
        %3875 = vmatpush.msra.mxu0 %v1908
        %3876 = vmatpush.msra.mxu0 %v1906
        %3877 = vmatpush.msra.mxu0 %v1904
        %3878 = vmatpush.msra.mxu0 %v1902
        %3879 = vmatpush.msra.mxu0 %v1900
        %3880 = vmatpush.msra.mxu0 %v1898
        %3881 = vmatpush.msra.mxu0 %v1896
        %3882 = vmatmul.f32.gmra.mxu0 %v3839
        %v3883 = vpop.f32.mrf.mxu0
        %v3884 = vadd.f32 %v2945, %v3883
        %3885 = vmatmul.f32.gmra.mxu0 %v3841
        %v3886 = vpop.f32.mrf.mxu0
        %v3887 = vadd.f32 %v2945, %v3886
        %3888 = vdwg.mxu0
        %v3889 = vadd.f32 %v3835, %v3861
        %v3890 = vadd.f32 %v3837, %v3864
        %v3891 = vxor.u32 %v3889, 2147483648
        %v3892 = vxor.u32 %v3890, 2147483648
        %v3893 = vmul.f32 %v3891, 1.442695
        %v3894 = vpow.pop %v3893
        %v3895 = vmul.f32 %v3892, 1.442695
        %v3896 = vpow.pop %v3895
        %v3897 = vadd.f32 %v3894, 1.0
        %v3898 = vadd.f32 %v3896, 1.0
        %v3899 = vrcp.pop %v3897
        %v3900 = vmul.f32 %v3897, %v3899
        %v3901 = vsub.f32 1.0, %v3900
        %v3902 = vmul.f32 %v3899, %v3901
        %v3903 = vadd.f32 %v3899, %v3902
        %vm3904 = vweird.f32 %v3897
        %vm3905 = vweird.f32 %v3899
        %vm3906 = vmor %vm3904, %vm3905
        %v3907 = vsel %vm3906, %v3899, %v3903
        %v3908 = vand.u32 2147483647, %v3897
        %vm3909 = vcmp.eq.f32.partialorder %v3908, 8.507059e+37
        %v3910 = vand.u32 %v3897, 2147483648
        %v3911 = vor.u32 1.1754944e-38, %v3910
        %v3912 = vsel %vm3909, %v3911, %v3907
        %v3913 = vmul.f32 1.0, %v3912
        %v3914 = vrcp.pop %v3898
        %v3915 = vmul.f32 %v3898, %v3914
        %v3916 = vsub.f32 1.0, %v3915
        %v3917 = vmul.f32 %v3914, %v3916
        %v3918 = vadd.f32 %v3914, %v3917
        %vm3919 = vweird.f32 %v3898
        %vm3920 = vweird.f32 %v3914
        %vm3921 = vmor %vm3919, %vm3920
        %v3922 = vsel %vm3921, %v3914, %v3918
        %v3923 = vand.u32 2147483647, %v3898
        %vm3924 = vcmp.eq.f32.partialorder %v3923, 8.507059e+37
        %v3925 = vand.u32 %v3898, 2147483648
        %v3926 = vor.u32 1.1754944e-38, %v3925
        %v3927 = vsel %vm3924, %v3926, %v3922
        %v3928 = vmul.f32 1.0, %v3927
        %v3929 = vmul.f32 %v3913, %v3884
        %v3930 = vmul.f32 %v3928, %v3887
        %v3931 = vadd.f32 %v3836, %v3929
        %v3932 = vadd.f32 %v3838, %v3930
        %v3933 = vtanh.pop %v3931
        %v3934 = vtanh.pop %v3932
        %v3935 = vsub.f32 1.0, %v3913
        %v3936 = vsub.f32 1.0, %v3928
        %3939 = vrot.lane.b32.xlu0 %v3933, 64
        %v3940 = vpop.permute.xlu0 %3939
        %3941 = vrot.lane.b32.xlu0 %v3934, 64
        %v3942 = vpop.permute.xlu0 %3941
        %v3945 = vmul.f32 %v3935, %v3940
        %v3946 = vmul.f32 %v3936, %v3942
        %v3947 = vmul.f32 %v3913, %v3822
        %v3948 = vmul.f32 %v3928, %v3823
        %v3949 = vadd.f32 %v3945, %v3947
        %v3950 = vadd.f32 %v3946, %v3948
        %3953 = vrot.lane.b32.xlu0 %v3949, 64
        %v3954 = vpop.permute.xlu0 %3953
        %3955 = vrot.lane.b32.xlu0 %v3950, 64
        %v3956 = vpop.permute.xlu0 %3955
        %3959 = vst.msk [vmem:[#allocation5] sm:$0xff] %vm1282, %v3954
        %3960 = vst.msk [vmem:[#allocation5 + $0x8] sm:$0xff] %vm1282, %v3956
        %v3961 = vld [vmem:[#allocation4] sm:$0xff]
        %v3962 = vld [vmem:[#allocation4 + $0x8] sm:$0xff]
        %v3963 = vld [vmem:[#allocation4 + $0x10] sm:$0xff]
        %v3964 = vld [vmem:[#allocation4 + $0x18] sm:$0xff]
        %v3965 = vld [vmem:[#allocation4 + $0x20] sm:$0xff]
        %v3966 = vld [vmem:[#allocation4 + $0x28] sm:$0xff]
        %v3967 = vld [vmem:[#allocation4 + $0x30] sm:$0xff]
        %v3968 = vld [vmem:[#allocation4 + $0x38] sm:$0xff]
        %v3969 = vld [vmem:[#allocation4 + $0x40] sm:$0xff]
        %v3970 = vld [vmem:[#allocation4 + $0x48] sm:$0xff]
        %v3971 = vld [vmem:[#allocation4 + $0x50] sm:$0xff]
        %v3972 = vld [vmem:[#allocation4 + $0x58] sm:$0xff]
        %v3973 = vld [vmem:[#allocation4 + $0x60] sm:$0xff]
        %v3974 = vld [vmem:[#allocation4 + $0x68] sm:$0xff]
        %v3975 = vld [vmem:[#allocation4 + $0x70] sm:$0xff]
        %v3976 = vld [vmem:[#allocation4 + $0x78] sm:$0xff]
        %v3977 = vld [vmem:[#allocation5] sm:$0xff]
        %v3978 = vld [vmem:[#allocation5 + $0x8] sm:$0xff]
        %v3979 = vld [vmem:[#allocation5 + $0x10] sm:$0xff]
        %v3980 = vld [vmem:[#allocation5 + $0x18] sm:$0xff]
        %v3981 = vld [vmem:[#allocation5 + $0x20] sm:$0xff]
        %v3982 = vld [vmem:[#allocation5 + $0x28] sm:$0xff]
        %v3983 = vld [vmem:[#allocation5 + $0x30] sm:$0xff]
        %v3984 = vld [vmem:[#allocation5 + $0x38] sm:$0xff]
        %v3985 = vld [vmem:[#allocation5 + $0x40] sm:$0xff]
        %v3986 = vld [vmem:[#allocation5 + $0x48] sm:$0xff]
        %v3987 = vld [vmem:[#allocation5 + $0x50] sm:$0xff]
        %v3988 = vld [vmem:[#allocation5 + $0x58] sm:$0xff]
        %v3989 = vld [vmem:[#allocation5 + $0x60] sm:$0xff]
        %v3990 = vld [vmem:[#allocation5 + $0x68] sm:$0xff]
        %v3991 = vld [vmem:[#allocation5 + $0x70] sm:$0xff]
        %v3992 = vld [vmem:[#allocation5 + $0x78] sm:$0xff]
        %4009 = vrot.lane.b32.xlu0 %v3977, 64
        %v4010 = vpop.permute.xlu0 %4009
        %4011 = vrot.lane.b32.xlu0 %v3978, 64
        %v4012 = vpop.permute.xlu0 %4011
        %4013 = vrot.lane.b32.xlu0 %v3979, 64
        %v4014 = vpop.permute.xlu0 %4013
        %4015 = vrot.lane.b32.xlu0 %v3980, 64
        %v4016 = vpop.permute.xlu0 %4015
        %4017 = vrot.lane.b32.xlu0 %v3981, 64
        %v4018 = vpop.permute.xlu0 %4017
        %4019 = vrot.lane.b32.xlu0 %v3982, 64
        %v4020 = vpop.permute.xlu0 %4019
        %4021 = vrot.lane.b32.xlu0 %v3983, 64
        %v4022 = vpop.permute.xlu0 %4021
        %4023 = vrot.lane.b32.xlu0 %v3984, 64
        %v4024 = vpop.permute.xlu0 %4023
        %4025 = vrot.lane.b32.xlu0 %v3985, 64
        %v4026 = vpop.permute.xlu0 %4025
        %4027 = vrot.lane.b32.xlu0 %v3986, 64
        %v4028 = vpop.permute.xlu0 %4027
        %4029 = vrot.lane.b32.xlu0 %v3987, 64
        %v4030 = vpop.permute.xlu0 %4029
        %4031 = vrot.lane.b32.xlu0 %v3988, 64
        %v4032 = vpop.permute.xlu0 %4031
        %4033 = vrot.lane.b32.xlu0 %v3989, 64
        %v4034 = vpop.permute.xlu0 %4033
        %4035 = vrot.lane.b32.xlu0 %v3990, 64
        %v4036 = vpop.permute.xlu0 %4035
        %4037 = vrot.lane.b32.xlu0 %v3991, 64
        %v4038 = vpop.permute.xlu0 %4037
        %4039 = vrot.lane.b32.xlu0 %v3992, 64
        %v4040 = vpop.permute.xlu0 %4039
        %v4057 = vsel %vm1282, %v3961, %v4010
        %v4058 = vsel %vm1282, %v3962, %v4012
        %v4059 = vsel %vm1282, %v3963, %v4014
        %v4060 = vsel %vm1282, %v3964, %v4016
        %v4061 = vsel %vm1282, %v3965, %v4018
        %v4062 = vsel %vm1282, %v3966, %v4020
        %v4063 = vsel %vm1282, %v3967, %v4022
        %v4064 = vsel %vm1282, %v3968, %v4024
        %v4065 = vsel %vm1282, %v3969, %v4026
        %v4066 = vsel %vm1282, %v3970, %v4028
        %v4067 = vsel %vm1282, %v3971, %v4030
        %v4068 = vsel %vm1282, %v3972, %v4032
        %v4069 = vsel %vm1282, %v3973, %v4034
        %v4070 = vsel %vm1282, %v3974, %v4036
        %v4071 = vsel %vm1282, %v3975, %v4038
        %v4072 = vsel %vm1282, %v3976, %v4040
        %v4073 = vld [vmem:[#allocation16] sm:$0xff]
        %v4074 = vld [vmem:[#allocation16 + $0x8] sm:$0xff]
        %v4075 = vld [vmem:[#allocation16 + $0x10] sm:$0xff]
        %v4076 = vld [vmem:[#allocation16 + $0x18] sm:$0xff]
        %v4077 = vld [vmem:[#allocation16 + $0x20] sm:$0xff]
        %v4078 = vld [vmem:[#allocation16 + $0x28] sm:$0xff]
        %v4079 = vld [vmem:[#allocation16 + $0x30] sm:$0xff]
        %v4080 = vld [vmem:[#allocation16 + $0x38] sm:$0xff]
        %v4081 = vld [vmem:[#allocation16 + $0x40] sm:$0xff]
        %v4082 = vld [vmem:[#allocation16 + $0x48] sm:$0xff]
        %v4083 = vld [vmem:[#allocation16 + $0x50] sm:$0xff]
        %v4084 = vld [vmem:[#allocation16 + $0x58] sm:$0xff]
        %v4085 = vld [vmem:[#allocation16 + $0x60] sm:$0xff]
        %v4086 = vld [vmem:[#allocation16 + $0x68] sm:$0xff]
        %v4087 = vld [vmem:[#allocation16 + $0x70] sm:$0xff]
        %v4088 = vld [vmem:[#allocation16 + $0x78] sm:$0xff]
        %v4089 = vld [vmem:[#allocation18] sm:$0x1]
        %v4091 = vperm.slane %v4089, 0
        %4093 = vmatpush.msra.mxu0 %v4088
        %4094 = vmatpush.msra.mxu0 %v4087
        %4095 = vmatpush.msra.mxu0 %v4086
        %4096 = vmatpush.msra.mxu0 %v4085
        %4097 = vmatpush.msra.mxu0 %v4084
        %4098 = vmatpush.msra.mxu0 %v4083
        %4099 = vmatpush.msra.mxu0 %v4082
        %4100 = vmatpush.msra.mxu0 %v4081
        %4101 = vmatpush.msra.mxu0 %v4080
        %4102 = vmatpush.msra.mxu0 %v4079
        %4103 = vmatpush.msra.mxu0 %v4078
        %4104 = vmatpush.msra.mxu0 %v4077
        %4105 = vmatpush.msra.mxu0 %v4076
        %4106 = vmatpush.msra.mxu0 %v4075
        %4107 = vmatpush.msra.mxu0 %v4074
        %4108 = vmatpush.msra.mxu0 %v4073
        %4109 = vmatmul.f32.gmra.mxu0 %v4057
        %v4110 = vpop.f32.mrf.mxu0
        %v4111 = vadd.f32 %v4091, %v4110
        %4112 = vmatmul.f32.gmra.mxu0 %v4058
        %v4113 = vpop.f32.mrf.mxu0
        %v4114 = vadd.f32 %v4091, %v4113
        %4115 = vmatmul.f32.gmra.mxu0 %v4059
        %v4116 = vpop.f32.mrf.mxu0
        %v4117 = vadd.f32 %v4091, %v4116
        %4118 = vmatmul.f32.gmra.mxu0 %v4060
        %v4119 = vpop.f32.mrf.mxu0
        %v4120 = vadd.f32 %v4091, %v4119
        %4121 = vmatmul.f32.gmra.mxu0 %v4061
        %v4122 = vpop.f32.mrf.mxu0
        %v4123 = vadd.f32 %v4091, %v4122
        %4124 = vmatmul.f32.gmra.mxu0 %v4062
        %v4125 = vpop.f32.mrf.mxu0
        %v4126 = vadd.f32 %v4091, %v4125
        %4127 = vmatmul.f32.gmra.mxu0 %v4063
        %v4128 = vpop.f32.mrf.mxu0
        %v4129 = vadd.f32 %v4091, %v4128
        %4130 = vmatmul.f32.gmra.mxu0 %v4064
        %v4131 = vpop.f32.mrf.mxu0
        %v4132 = vadd.f32 %v4091, %v4131
        %4133 = vmatmul.f32.gmra.mxu0 %v4065
        %v4134 = vpop.f32.mrf.mxu0
        %v4135 = vadd.f32 %v4091, %v4134
        %4136 = vmatmul.f32.gmra.mxu0 %v4066
        %v4137 = vpop.f32.mrf.mxu0
        %v4138 = vadd.f32 %v4091, %v4137
        %4139 = vmatmul.f32.gmra.mxu0 %v4067
        %v4140 = vpop.f32.mrf.mxu0
        %v4141 = vadd.f32 %v4091, %v4140
        %4142 = vmatmul.f32.gmra.mxu0 %v4068
        %v4143 = vpop.f32.mrf.mxu0
        %v4144 = vadd.f32 %v4091, %v4143
        %4145 = vmatmul.f32.gmra.mxu0 %v4069
        %v4146 = vpop.f32.mrf.mxu0
        %v4147 = vadd.f32 %v4091, %v4146
        %4148 = vmatmul.f32.gmra.mxu0 %v4070
        %v4149 = vpop.f32.mrf.mxu0
        %v4150 = vadd.f32 %v4091, %v4149
        %4151 = vmatmul.f32.gmra.mxu0 %v4071
        %v4152 = vpop.f32.mrf.mxu0
        %v4153 = vadd.f32 %v4091, %v4152
        %4154 = vmatmul.f32.gmra.mxu0 %v4072
        %v4155 = vpop.f32.mrf.mxu0
        %v4156 = vadd.f32 %v4091, %v4155
        %4157 = vdwg.mxu0
        %v4158 = vtanh.pop %v4111
        %v4159 = vtanh.pop %v4114
        %v4160 = vtanh.pop %v4117
        %v4161 = vtanh.pop %v4120
        %v4162 = vtanh.pop %v4123
        %v4163 = vtanh.pop %v4126
        %v4164 = vtanh.pop %v4129
        %v4165 = vtanh.pop %v4132
        %v4166 = vtanh.pop %v4135
        %v4167 = vtanh.pop %v4138
        %v4168 = vtanh.pop %v4141
        %v4169 = vtanh.pop %v4144
        %v4170 = vtanh.pop %v4147
        %v4171 = vtanh.pop %v4150
        %v4172 = vtanh.pop %v4153
        %v4173 = vtanh.pop %v4156
        %v4174 = vld [vmem:[#allocation19] sm:$0x1]
        %v4176 = vperm.slane %v4174, 0
        %v4178 = vmul.f32 %v4158, %v4176
        %v4179 = vmul.f32 %v4159, %v4176
        %v4180 = vmul.f32 %v4160, %v4176
        %v4181 = vmul.f32 %v4161, %v4176
        %v4182 = vmul.f32 %v4162, %v4176
        %v4183 = vmul.f32 %v4163, %v4176
        %v4184 = vmul.f32 %v4164, %v4176
        %v4185 = vmul.f32 %v4165, %v4176
        %v4186 = vmul.f32 %v4166, %v4176
        %v4187 = vmul.f32 %v4167, %v4176
        %v4188 = vmul.f32 %v4168, %v4176
        %v4189 = vmul.f32 %v4169, %v4176
        %v4190 = vmul.f32 %v4170, %v4176
        %v4191 = vmul.f32 %v4171, %v4176
        %v4192 = vmul.f32 %v4172, %v4176
        %v4193 = vmul.f32 %v4173, %v4176
        %4194 = vadd.xlane.f32.xlu0 %v4178
        %v4195 = vpop.xlane.xlu0 %4194
        %4196 = vadd.xlane.f32.xlu0 %v4179
        %v4197 = vpop.xlane.xlu0 %4196
        %4198 = vadd.xlane.f32.xlu0 %v4180
        %v4199 = vpop.xlane.xlu0 %4198
        %4200 = vadd.xlane.f32.xlu0 %v4181
        %v4201 = vpop.xlane.xlu0 %4200
        %4202 = vadd.xlane.f32.xlu0 %v4182
        %v4203 = vpop.xlane.xlu0 %4202
        %4204 = vadd.xlane.f32.xlu0 %v4183
        %v4205 = vpop.xlane.xlu0 %4204
        %4206 = vadd.xlane.f32.xlu0 %v4184
        %v4207 = vpop.xlane.xlu0 %4206
        %4208 = vadd.xlane.f32.xlu0 %v4185
        %v4209 = vpop.xlane.xlu0 %4208
        %4210 = vadd.xlane.f32.xlu0 %v4186
        %v4211 = vpop.xlane.xlu0 %4210
        %4212 = vadd.xlane.f32.xlu0 %v4187
        %v4213 = vpop.xlane.xlu0 %4212
        %4214 = vadd.xlane.f32.xlu0 %v4188
        %v4215 = vpop.xlane.xlu0 %4214
        %4216 = vadd.xlane.f32.xlu0 %v4189
        %v4217 = vpop.xlane.xlu0 %4216
        %4218 = vadd.xlane.f32.xlu0 %v4190
        %v4219 = vpop.xlane.xlu0 %4218
        %4220 = vadd.xlane.f32.xlu0 %v4191
        %v4221 = vpop.xlane.xlu0 %4220
        %4222 = vadd.xlane.f32.xlu0 %v4192
        %v4223 = vpop.xlane.xlu0 %4222
        %4224 = vadd.xlane.f32.xlu0 %v4193
        %v4225 = vpop.xlane.xlu0 %4224
        %v4226 = vmax.f32 %v4195, %v4203
        %v4227 = vmax.f32 %v4199, %v4207
        %v4228 = vmax.f32 %v4226, %v4211
        %v4229 = vmax.f32 %v4227, %v4215
        %v4230 = vmax.f32 %v4228, %v4219
        %v4231 = vmax.f32 %v4229, %v4223
        %v4232 = vmax.f32 %v4230, %v4231
        %v4233 = vmax.f32 %v4197, %v4205
        %v4234 = vmax.f32 %v4201, %v4209
        %v4235 = vmax.f32 %v4233, %v4213
        %v4236 = vmax.f32 %v4234, %v4217
        %v4237 = vmax.f32 %v4235, %v4221
        %v4238 = vmax.f32 %v4236, %v4225
        %v4239 = vmax.f32 %v4237, %v4238
        %v4240 = vsub.f32 %v4195, %v4232
        %v4241 = vsub.f32 %v4197, %v4239
        %v4242 = vsub.f32 %v4199, %v4232
        %v4243 = vsub.f32 %v4201, %v4239
        %v4244 = vsub.f32 %v4203, %v4232
        %v4245 = vsub.f32 %v4205, %v4239
        %v4246 = vsub.f32 %v4207, %v4232
        %v4247 = vsub.f32 %v4209, %v4239
        %v4248 = vsub.f32 %v4211, %v4232
        %v4249 = vsub.f32 %v4213, %v4239
        %v4250 = vsub.f32 %v4215, %v4232
        %v4251 = vsub.f32 %v4217, %v4239
        %v4252 = vsub.f32 %v4219, %v4232
        %v4253 = vsub.f32 %v4221, %v4239
        %v4254 = vsub.f32 %v4223, %v4232
        %v4255 = vsub.f32 %v4225, %v4239
        %v4256 = vmul.f32 %v4240, 1.442695
        %v4257 = vpow.pop %v4256
        %v4258 = vmul.f32 %v4241, 1.442695
        %v4259 = vpow.pop %v4258
        %v4260 = vmul.f32 %v4242, 1.442695
        %v4261 = vpow.pop %v4260
        %v4262 = vmul.f32 %v4243, 1.442695
        %v4263 = vpow.pop %v4262
        %v4264 = vmul.f32 %v4244, 1.442695
        %v4265 = vpow.pop %v4264
        %v4266 = vmul.f32 %v4245, 1.442695
        %v4267 = vpow.pop %v4266
        %v4268 = vmul.f32 %v4246, 1.442695
        %v4269 = vpow.pop %v4268
        %v4270 = vmul.f32 %v4247, 1.442695
        %v4271 = vpow.pop %v4270
        %v4272 = vmul.f32 %v4248, 1.442695
        %v4273 = vpow.pop %v4272
        %v4274 = vmul.f32 %v4249, 1.442695
        %v4275 = vpow.pop %v4274
        %v4276 = vmul.f32 %v4250, 1.442695
        %v4277 = vpow.pop %v4276
        %v4278 = vmul.f32 %v4251, 1.442695
        %v4279 = vpow.pop %v4278
        %v4280 = vmul.f32 %v4252, 1.442695
        %v4281 = vpow.pop %v4280
        %v4282 = vmul.f32 %v4253, 1.442695
        %v4283 = vpow.pop %v4282
        %v4284 = vmul.f32 %v4254, 1.442695
        %v4285 = vpow.pop %v4284
        %v4286 = vmul.f32 %v4255, 1.442695
        %v4287 = vpow.pop %v4286
        %v4288 = vadd.f32 %v4257, %v4261
        %v4289 = vadd.f32 %v4288, %v4265
        %v4290 = vadd.f32 %v4289, %v4269
        %v4291 = vadd.f32 %v4290, %v4273
        %v4292 = vadd.f32 %v4291, %v4277
        %v4293 = vadd.f32 %v4292, %v4281
        %v4294 = vadd.f32 %v4293, %v4285
        %v4295 = vadd.f32 %v4259, %v4263
        %v4296 = vadd.f32 %v4295, %v4267
        %v4297 = vadd.f32 %v4296, %v4271
        %v4298 = vadd.f32 %v4297, %v4275
        %v4299 = vadd.f32 %v4298, %v4279
        %v4300 = vadd.f32 %v4299, %v4283
        %v4301 = vadd.f32 %v4300, %v4287
        %v4302 = vrcp.pop %v4294
        %v4303 = vmul.f32 %v4294, %v4302
        %v4304 = vsub.f32 1.0, %v4303
        %v4305 = vmul.f32 %v4302, %v4304
        %v4306 = vadd.f32 %v4302, %v4305
        %vm4307 = vweird.f32 %v4294
        %vm4308 = vweird.f32 %v4302
        %vm4309 = vmor %vm4307, %vm4308
        %v4310 = vsel %vm4309, %v4302, %v4306
        %v4311 = vand.u32 2147483647, %v4294
        %vm4312 = vcmp.eq.f32.partialorder %v4311, 8.507059e+37
        %v4313 = vand.u32 %v4294, 2147483648
        %v4314 = vor.u32 1.1754944e-38, %v4313
        %v4315 = vsel %vm4312, %v4314, %v4310
        %v4316 = vmul.f32 %v4257, %v4315
        %v4317 = vrcp.pop %v4301
        %v4318 = vmul.f32 %v4301, %v4317
        %v4319 = vsub.f32 1.0, %v4318
        %v4320 = vmul.f32 %v4317, %v4319
        %v4321 = vadd.f32 %v4317, %v4320
        %vm4322 = vweird.f32 %v4301
        %vm4323 = vweird.f32 %v4317
        %vm4324 = vmor %vm4322, %vm4323
        %v4325 = vsel %vm4324, %v4317, %v4321
        %v4326 = vand.u32 2147483647, %v4301
        %vm4327 = vcmp.eq.f32.partialorder %v4326, 8.507059e+37
        %v4328 = vand.u32 %v4301, 2147483648
        %v4329 = vor.u32 1.1754944e-38, %v4328
        %v4330 = vsel %vm4327, %v4329, %v4325
        %v4331 = vmul.f32 %v4259, %v4330
        %v4332 = vmul.f32 %v4261, %v4315
        %v4333 = vmul.f32 %v4263, %v4330
        %v4334 = vmul.f32 %v4265, %v4315
        %v4335 = vmul.f32 %v4267, %v4330
        %v4336 = vmul.f32 %v4269, %v4315
        %v4337 = vmul.f32 %v4271, %v4330
        %v4338 = vmul.f32 %v4273, %v4315
        %v4339 = vmul.f32 %v4275, %v4330
        %v4340 = vmul.f32 %v4277, %v4315
        %v4341 = vmul.f32 %v4279, %v4330
        %v4342 = vmul.f32 %v4281, %v4315
        %v4343 = vmul.f32 %v4283, %v4330
        %v4344 = vmul.f32 %v4285, %v4315
        %v4345 = vmul.f32 %v4287, %v4330
        %v4346 = vmul.f32 %v4057, %v4316
        %v4347 = vmul.f32 %v4058, %v4331
        %v4348 = vmul.f32 %v4059, %v4332
        %v4349 = vmul.f32 %v4060, %v4333
        %v4350 = vmul.f32 %v4061, %v4334
        %v4351 = vmul.f32 %v4062, %v4335
        %v4352 = vmul.f32 %v4063, %v4336
        %v4353 = vmul.f32 %v4064, %v4337
        %v4354 = vmul.f32 %v4065, %v4338
        %v4355 = vmul.f32 %v4066, %v4339
        %v4356 = vmul.f32 %v4067, %v4340
        %v4357 = vmul.f32 %v4068, %v4341
        %v4358 = vmul.f32 %v4069, %v4342
        %v4359 = vmul.f32 %v4070, %v4343
        %v4360 = vmul.f32 %v4071, %v4344
        %v4361 = vmul.f32 %v4072, %v4345
        %v4362 = vadd.f32 %v4346, %v4348
        %v4363 = vadd.f32 %v4362, %v4350
        %v4364 = vadd.f32 %v4363, %v4352
        %v4365 = vadd.f32 %v4364, %v4354
        %v4366 = vadd.f32 %v4365, %v4356
        %v4367 = vadd.f32 %v4366, %v4358
        %v4368 = vadd.f32 %v4367, %v4360
        %v4369 = vadd.f32 %v4347, %v4349
        %v4370 = vadd.f32 %v4369, %v4351
        %v4371 = vadd.f32 %v4370, %v4353
        %v4372 = vadd.f32 %v4371, %v4355
        %v4373 = vadd.f32 %v4372, %v4357
        %v4374 = vadd.f32 %v4373, %v4359
        %v4375 = vadd.f32 %v4374, %v4361
        %4376 = vst [vmem:[%s647] sm:$0xff] %v4368
        %4377 = vst [vmem:[%s647 + $0x8] sm:$0xff] %v4375
        %s4378 = sand.u32 %s296, 1
        %s4379 = scalar_lea.sflag [#allocation9], %s4378
        %s4380 = sand.u32 %s296, 1
        %s4381 = smul.addr %s4380, 16
        %s4382 = scalar_lea.vmem [#allocation21], %s4381
        // Predicated region
        $region124: #{tpu_custom_call.1} parent=86 // pred_check
          %p4383 = pneg %p306
        $region125: #{tpu_custom_call.1} parent=86 // pred_check_branch
          %4385 = sbr.rel (%p4383) target = $region127
        $region126: #{tpu_custom_call.1} parent=86 // pred_region
          %s4386 = smul.u32 2, %s31
          %4388 = vsyncadd %s4379, 0
          %s4389 = smul.addr %s4386, 8
          %s4390 = scalar_lea.hbm %s12, %s4389
          %s4391 = sshll.u32 %s4382, 4
          %s4392 = int_to_ptr.vmem [resolvable:$true] %s4391
          %s4393 = sshll.u32 %s4390, 4
          %s4394 = int_to_ptr.hbm [resolvable:$true] %s4393
          %4399 = dma.vmem_to_hbm [thread:$0]  %s4392, 256, %s4394, %s4379, 128, 128, 8
        $region127: #{tpu_custom_call.1} parent=86 // pred_fallthru
          _
      $region87: #{tpu_custom_call.1} parent=5 // pred_fallthru
        _
      %p4400 = scmp.le.s32.totalorder 2, %s26
      // Predicated region
      $region128: #{tpu_custom_call.1} parent=5 // pred_check
        %p4401 = pneg %p4400
      $region129: #{tpu_custom_call.1} parent=5 // pred_check_branch
        %4403 = sbr.rel (%p4401) target = $region131
      $region130: #{tpu_custom_call.1} parent=5 // pred_region
        %s4404 = ssub.s32 %s26, 2
        // Predicated region
        $region132: #{tpu_custom_call.1} parent=130 // pred_check
          %p4405 = pneg %p312
        $region133: #{tpu_custom_call.1} parent=130 // pred_check_branch
          %4407 = sbr.rel (%p4405) target = $region135
        $region134: #{tpu_custom_call.1} parent=130 // pred_region
          %s4408 = sand.u32 %s297, 1
          %s4409 = scalar_lea.sflag [#allocation9], %s4408
          %s4410 = sand.u32 %s297, 1
          %s4411 = smul.addr %s4410, 16
          %s4412 = scalar_lea.vmem [#allocation21], %s4411
          %4414 = dma.done %s4409, 256
        $region135: #{tpu_custom_call.1} parent=130 // pred_fallthru
          _
      $region131: #{tpu_custom_call.1} parent=5 // pred_fallthru
        _
    $region6: #{tpu_custom_call.1} parent=1 // loop_footer
      %s30 = sadd.s32 1, %s26
    $region7: #{tpu_custom_call.1} parent=1 // loop_footer_branch
      %25 = sbr.rel target = $region3
    $region8: #{tpu_custom_call.1} parent=1 // loop_exit
      _
    %4415 = vsyncpa [#allocation8], 1
    %s4416 = scalar_lea.sflag [#allocation8], 1
    %4417 = vsyncpa %s4416, 1
    %4418 = vsyncpa [#allocation11], 1
    %4419 = vsyncpa [#allocation14], 1
    %4420 = vsyncpa [#allocation17], 1
    %4421 = vsyncpa [#allocation20], 1
    %4422 = vsyncpa [#allocation9], 1
    %s4423 = scalar_lea.sflag [#allocation9], 1
    %4424 = vsyncpa %s4423, 1

</llo_original>
